<compile_context>
chip_gen: v5e
topology: v5e:2x2
jax: 0.10.0
libtpu: 0.0.40
codegen_flags: <defaults>
</compile_context>

<pallas_src>
import functools

import jax
import jax.numpy as jnp
from jax import lax
from jax.experimental import pallas as pl
from jax.experimental.pallas import tpu as pltpu

LANE = 128


def _round_up(n, m):
    return ((n + m - 1) // m) * m


def _pad_gate_cols(w_t, h, hp):
    """(K, 3h) -> (K, 3hp): pad each gate block's columns to hp lanes."""
    parts = [w_t[:, g * h:(g + 1) * h] for g in range(3)]
    parts = [jnp.pad(p, ((0, 0), (0, hp - h))) for p in parts]
    return jnp.concatenate(parts, axis=1)


def _pad_gate_bias(b, h, hp):
    """(3h,) -> (1, 3hp): pad each gate block to hp lanes."""
    parts = [b[g * h:(g + 1) * h] for g in range(3)]
    parts = [jnp.pad(p, (0, hp - h)) for p in parts]
    return jnp.concatenate(parts).reshape(1, -1)


def prepare_gru_params(params, hidden_size):
    """One-time conversion of PyTorch-layout weights into padded Pallas layout.

    params: list of (w_x2h (3H,K), b_x2h (3H,), w_h2h (3H,H), b_h2h (3H,)).
    Returns list of (wx_p (K_l,3Hp), bx_p (1,3Hp), wh_p (Hp,3Hp), bh_p (1,3Hp)).
    """
    h = hidden_size
    hp = _round_up(h, LANE)
    prepped = []
    for l, (w_x2h, b_x2h, w_h2h, b_h2h) in enumerate(params):
        wx_p = _pad_gate_cols(w_x2h.T.astype(jnp.float32), h, hp)  # (K_l, 3Hp)
        if l > 0:
            # Layers >= 1 consume the padded (T,B,Hp) output of the previous
            # layer; padded input lanes are zero, pad matching zero weight rows.
            wx_p = jnp.pad(wx_p, ((0, hp - wx_p.shape[0]), (0, 0)))
        wh_p = _pad_gate_cols(w_h2h.T.astype(jnp.float32), h, hp)  # (H, 3Hp)
        wh_p = jnp.pad(wh_p, ((0, hp - h), (0, 0)))                # (Hp, 3Hp)
        bx_p = _pad_gate_bias(b_x2h.astype(jnp.float32), h, hp)
        bh_p = _pad_gate_bias(b_h2h.astype(jnp.float32), h, hp)
        prepped.append((wx_p, bx_p, wh_p, bh_p))
    return prepped


# ---------------------------------------------------------------------------
# Fused per-layer kernel: time-blocked projection + recurrence.
# grid=(T/T_BLK,), h carried in VMEM scratch, Wx/bx/Wh/bh VMEM-resident.
# ---------------------------------------------------------------------------
def gru_layer_kernel(x_ref, h0_ref, wx_ref, bx_ref, wh_ref, bh_ref,
                     out_ref, h_scr, gx_scr):
    tb = pl.program_id(0)
    t_blk, b, k = x_ref.shape
    hp = h_scr.shape[1]

    @pl.when(tb == 0)
    def _():
        h_scr[...] = h0_ref[...].astype(jnp.float32)

    # Fused input projection for the whole time block: one tall lane-dense
    # MXU matmul (T_BLK*B rows) instead of a per-step (B x K) sliver.
    x2d = x_ref[...].reshape(t_blk * b, k).astype(jnp.float32)
    gx = jnp.dot(x2d, wx_ref[...],
                 preferred_element_type=jnp.float32) + bx_ref[...]
    gx_scr[...] = gx.reshape(t_blk, b, 3 * hp)

    wh = wh_ref[...]
    bh = bh_ref[...]

    def step(t, h):
        g_h = jnp.dot(h, wh, preferred_element_type=jnp.float32) + bh
        g_x = gx_scr[t]                                  # (B, 3Hp)
        # Gate slices are Hp(=128)-aligned -> pure vreg views, no lane shuffles.
        x_r = g_x[:, 0 * hp:1 * hp]
        x_z = g_x[:, 1 * hp:2 * hp]
        x_n = g_x[:, 2 * hp:3 * hp]
        h_r = g_h[:, 0 * hp:1 * hp]
        h_z = g_h[:, 1 * hp:2 * hp]
        h_n = g_h[:, 2 * hp:3 * hp]

        r = jax.nn.sigmoid(x_r + h_r)
        z = jax.nn.sigmoid(x_z + h_z)
        n = jnp.tanh(x_n + r * h_n)
        hy = z * h + (1.0 - z) * n

        out_ref[t] = hy.astype(out_ref.dtype)
        return hy

    h_scr[...] = lax.fori_loop(0, t_blk, step, h_scr[...], unroll=True)


def gru_layer(x_seq, h0_p, wx_p, bx_p, wh_p, bh_p, hp, t_blk):
    """One GRU layer over the full (time-padded) sequence.

    x_seq: (T_pad, B, K) f32, h0_p: (B, Hp), wx_p: (K, 3Hp), wh_p: (Hp, 3Hp).
    Returns (T_pad, B, Hp) f32 with padded lanes identically zero.
    """
    t_len, b, k = x_seq.shape
    n_tb = t_len // t_blk

    return pl.pallas_call(
        gru_layer_kernel,
        out_shape=jax.ShapeDtypeStruct((t_len, b, hp), jnp.float32),
        grid_spec=pltpu.PrefetchScalarGridSpec(
            num_scalar_prefetch=0,
            grid=(n_tb,),
            in_specs=[
                pl.BlockSpec((t_blk, b, k), lambda i: (i, 0, 0)),   # streamed
                pl.BlockSpec((b, hp), lambda i: (0, 0)),            # resident
                pl.BlockSpec((k, 3 * hp), lambda i: (0, 0)),        # resident
                pl.BlockSpec((1, 3 * hp), lambda i: (0, 0)),        # resident
                pl.BlockSpec((hp, 3 * hp), lambda i: (0, 0)),       # resident
                pl.BlockSpec((1, 3 * hp), lambda i: (0, 0)),        # resident
            ],
            out_specs=pl.BlockSpec((t_blk, b, hp), lambda i: (i, 0, 0)),
            scratch_shapes=[
                pltpu.VMEM((b, hp), jnp.float32),           # hidden state
                pltpu.VMEM((t_blk, b, 3 * hp), jnp.float32)  # block projection
            ],
        ),
        compiler_params=pltpu.CompilerParams(
            dimension_semantics=("arbitrary",),              # serial time axis
            vmem_limit_bytes=32 * 1024 * 1024,
        ),
    )(x_seq, h0_p, wx_p, bx_p, wh_p, bh_p)


# ---------------------------------------------------------------------------
# Full GRU forward (matches the PyTorch GRU module, batch_first=True):
# returns (out (B,T,H), hidden_last (B,H)) exactly like the reference forward.
# ---------------------------------------------------------------------------
@functools.partial(jax.jit, static_argnames=("hidden_size", "t_block"))
def gru_forward(x, hx, prepped, *, hidden_size, t_block=16):
    b, t_len, _ = x.shape
    n_layers = len(prepped)
    h = hidden_size
    hp = _round_up(h, LANE)
    dtype = x.dtype

    if hx is None:
        hx = jnp.zeros((n_layers, b, h), dtype=jnp.float32)

    # Time blocking: pad T to a multiple of T_BLK (zero-padding at the end is
    # safe: the recurrence runs forward in time and padded outputs are sliced
    # off; they never feed back into real timesteps).
    t_blk = min(t_block, t_len)
    t_pad = _round_up(t_len, t_blk)

    layer_in = jnp.transpose(x, (1, 0, 2)).astype(jnp.float32)   # (T, B, K)
    if t_pad != t_len:
        layer_in = jnp.pad(layer_in, ((0, t_pad - t_len), (0, 0), (0, 0)))

    for l, (wx_p, bx_p, wh_p, bh_p) in enumerate(prepped):
        h0_p = jnp.pad(hx[l].astype(jnp.float32), ((0, 0), (0, hp - h)))
        layer_in = gru_layer(layer_in, h0_p, wx_p, bx_p, wh_p, bh_p, hp, t_blk)

    out = jnp.transpose(layer_in[:t_len, :, :h], (1, 0, 2)).astype(dtype)
    # PyTorch module returns (out, hidden_l) with hidden_l = last layer's h_T.
    return out, out[:, -1, :]


# ---------------------------------------------------------------------------
# Pure-JAX reference matching the PyTorch forward exactly.
# ---------------------------------------------------------------------------
def gru_ref(x, hx, params, hidden_size):
    b, t_len, _ = x.shape
    n_layers = len(params)
    if hx is None:
        hx = jnp.zeros((n_layers, b, hidden_size), dtype=x.dtype)
    hidden = [hx[l] for l in range(n_layers)]
    outs = []
    for t in range(t_len):
        inp = x[:, t, :]
        for l, (w_x2h, b_x2h, w_h2h, b_h2h) in enumerate(params):
            h_prev = hidden[l]
            x_t = inp @ w_x2h.T + b_x2h
            h_t = h_prev @ w_h2h.T + b_h2h
            x_r, x_z, x_n = jnp.split(x_t, 3, axis=1)
            h_r, h_z, h_n = jnp.split(h_t, 3, axis=1)
            r = jax.nn.sigmoid(x_r + h_r)
            z = jax.nn.sigmoid(x_z + h_z)
            n = jnp.tanh(x_n + r * h_n)
            hy = z * h_prev + (1.0 - z) * n
            hidden[l] = hy
            inp = hy
        outs.append(hidden[-1])
    out = jnp.stack(outs, axis=1)
    return out, hidden[-1]


if __name__ == "__main__":
    batch, seq, input_size, hidden_size, num_layers = 8, 8, 16, 32, 2

    key = jax.random.PRNGKey(0)
    keys = jax.random.split(key, 2 + 4 * num_layers)
    std = 1.0 / (hidden_size ** 0.5)

    params = []
    kidx = 2
    for l in range(num_layers):
        in_sz = input_size if l == 0 else hidden_size
        kw, kb, kwh, kbh = keys[kidx:kidx + 4]
        kidx += 4
        params.append((
            jax.random.uniform(kw, (3 * hidden_size, in_sz), jnp.float32, -std, std),
            jax.random.uniform(kb, (3 * hidden_size,), jnp.float32, -std, std),
            jax.random.uniform(kwh, (3 * hidden_size, hidden_size), jnp.float32, -std, std),
            jax.random.uniform(kbh, (3 * hidden_size,), jnp.float32, -std, std),
        ))

    x = jax.random.normal(keys[0], (batch, seq, input_size), dtype=jnp.float32)
    h0 = jax.random.normal(keys[1], (num_layers, batch, hidden_size), dtype=jnp.float32)

    # One-time parameter preparation (hoisted out of the jitted forward).
    prepped = prepare_gru_params(params, hidden_size)
    prepped = jax.tree_util.tree_map(jax.block_until_ready, prepped)

    # Provided initial hidden state.
    out, h_last = gru_forward(x, h0, prepped, hidden_size=hidden_size)
    out = jax.block_until_ready(out)
    ref_out, ref_h = gru_ref(x, h0, params, hidden_size)
    assert out.shape == (batch, seq, hidden_size)
    assert jnp.allclose(out, ref_out, atol=1e-4, rtol=1e-4)
    assert jnp.allclose(h_last, ref_h, atol=1e-4, rtol=1e-4)

    # Default hx=None path.
    out0, h_last0 = gru_forward(x, None, prepped, hidden_size=hidden_size)
    out0 = jax.block_until_ready(out0)
    ref_out0, ref_h0 = gru_ref(x, None, params, hidden_size)
    assert jnp.allclose(out0, ref_out0, atol=1e-4, rtol=1e-4)
    assert jnp.allclose(h_last0, ref_h0, atol=1e-4, rtol=1e-4)

    print("KERNEL_OK")
</pallas_src>

<mosaic_0001>
module attributes {stable_mosaic.version = 11 : i64} {
  func.func @gru_layer_kernel(%arg0: i32, %arg1: memref<8x8x16xf32, #tpu.memory_space<vmem>>, %arg2: memref<8x128xf32, #tpu.memory_space<vmem>>, %arg3: memref<16x384xf32, #tpu.memory_space<vmem>>, %arg4: memref<1x384xf32, #tpu.memory_space<vmem>>, %arg5: memref<128x384xf32, #tpu.memory_space<vmem>>, %arg6: memref<1x384xf32, #tpu.memory_space<vmem>>, %arg7: memref<8x8x128xf32, #tpu.memory_space<vmem>>, %arg8: memref<8x128xf32, #tpu.memory_space<vmem>>, %arg9: memref<8x8x384xf32, #tpu.memory_space<vmem>>) attributes {dimension_semantics = [#tpu.dimension_semantics<arbitrary>], iteration_bounds = array<i64: 1>, scalar_prefetch = 0 : i64, scratch_operands = 2 : i64, tpu.core_type = #tpu.core_type<tc>, window_params = [{transform_indices = @transform_0, window_bounds = array<i64: 8, 8, 16>}, {pipeline_mode = #tpu.pipeline_mode<synchronous>, transform_indices = @transform_1, window_bounds = array<i64: 8, 128>}, {pipeline_mode = #tpu.pipeline_mode<synchronous>, transform_indices = @transform_2, window_bounds = array<i64: 16, 384>}, {pipeline_mode = #tpu.pipeline_mode<synchronous>, transform_indices = @transform_3, window_bounds = array<i64: 1, 384>}, {pipeline_mode = #tpu.pipeline_mode<synchronous>, transform_indices = @transform_4, window_bounds = array<i64: 128, 384>}, {pipeline_mode = #tpu.pipeline_mode<synchronous>, transform_indices = @transform_5, window_bounds = array<i64: 1, 384>}, {transform_indices = @transform_6, window_bounds = array<i64: 8, 8, 128>}]} {
    %c0_i32 = arith.constant 0 : i32
    %0 = arith.cmpi eq, %arg0, %c0_i32 : i32
    %1 = arith.extui %0 : i1 to i32
    %c0_i32_0 = arith.constant 0 : i32
    %2 = arith.cmpi ne, %1, %c0_i32_0 : i32
    scf.if %2 {
      %c0_83 = arith.constant 0 : index
      %c0_84 = arith.constant 0 : index
      %304 = vector.load %arg2[%c0_83, %c0_84] : memref<8x128xf32, #tpu.memory_space<vmem>>, vector<8x128xf32>
      %c0_85 = arith.constant 0 : index
      %c0_86 = arith.constant 0 : index
      %305 = vector.load %arg8[%c0_85, %c0_86] : memref<8x128xf32, #tpu.memory_space<vmem>>, vector<8x128xf32>
      tpu.vector_store %arg8[%c0_85, %c0_86], %304 {strides = array<i32>} : memref<8x128xf32, #tpu.memory_space<vmem>>, vector<8x128xf32>,
    } else {
    }
    %c0 = arith.constant 0 : index
    %c0_1 = arith.constant 0 : index
    %c0_2 = arith.constant 0 : index
    %3 = vector.load %arg1[%c0, %c0_1, %c0_2] : memref<8x8x16xf32, #tpu.memory_space<vmem>>, vector<8x8x16xf32>
    %4 = vector.shape_cast %3 : vector<8x8x16xf32> to vector<64x16xf32>
    %c0_3 = arith.constant 0 : index
    %c0_4 = arith.constant 0 : index
    %5 = vector.load %arg3[%c0_3, %c0_4] : memref<16x384xf32, #tpu.memory_space<vmem>>, vector<16x384xf32>
    %cst = arith.constant dense<0.000000e+00> : vector<64x384xf32>
    %6 = tpu.matmul %4, %5, %cst {dimension_numbers = #tpu.dot_dimension_numbers<[1], [0], [0], [1], [0, 0, 1, 1], [], []>} : vector<64x16xf32>, vector<16x384xf32>, vector<64x384xf32> -> vector<64x384xf32>
    %c0_5 = arith.constant 0 : index
    %c0_6 = arith.constant 0 : index
    %7 = vector.load %arg4[%c0_5, %c0_6] : memref<1x384xf32, #tpu.memory_space<vmem>>, vector<1x384xf32>
    %8 = vector.broadcast %7 : vector<1x384xf32> to vector<64x384xf32>
    %9 = arith.addf %6, %8 : vector<64x384xf32>
    %10 = vector.shape_cast %9 : vector<64x384xf32> to vector<8x8x384xf32>
    %c0_7 = arith.constant 0 : index
    %c0_8 = arith.constant 0 : index
    %c0_9 = arith.constant 0 : index
    %11 = vector.load %arg9[%c0_7, %c0_8, %c0_9] : memref<8x8x384xf32, #tpu.memory_space<vmem>>, vector<8x8x384xf32>
    tpu.vector_store %arg9[%c0_7, %c0_8, %c0_9], %10 {strides = array<i32>} : memref<8x8x384xf32, #tpu.memory_space<vmem>>, vector<8x8x384xf32>,
    %c0_10 = arith.constant 0 : index
    %c0_11 = arith.constant 0 : index
    %12 = vector.load %arg5[%c0_10, %c0_11] : memref<128x384xf32, #tpu.memory_space<vmem>>, vector<128x384xf32>
    %c0_12 = arith.constant 0 : index
    %c0_13 = arith.constant 0 : index
    %13 = vector.load %arg6[%c0_12, %c0_13] : memref<1x384xf32, #tpu.memory_space<vmem>>, vector<1x384xf32>
    %c0_14 = arith.constant 0 : index
    %c0_15 = arith.constant 0 : index
    %14 = vector.load %arg8[%c0_14, %c0_15] : memref<8x128xf32, #tpu.memory_space<vmem>>, vector<8x128xf32>
    %c0_i32_16 = arith.constant 0 : i32
    %cst_17 = arith.constant dense<0.000000e+00> : vector<8x384xf32>
    %15 = tpu.matmul %14, %12, %cst_17 {dimension_numbers = #tpu.dot_dimension_numbers<[1], [0], [0], [1], [0, 0, 1, 1], [], []>} : vector<8x128xf32>, vector<128x384xf32>, vector<8x384xf32> -> vector<8x384xf32>
    %16 = vector.broadcast %13 : vector<1x384xf32> to vector<8x384xf32>
    %17 = arith.addf %15, %16 : vector<8x384xf32>
    %18 = arith.index_cast %c0_i32_16 : i32 to index
    %c0_18 = arith.constant 0 : index
    %c0_19 = arith.constant 0 : index
    %19 = vector.load %arg9[%18, %c0_18, %c0_19] : memref<8x8x384xf32, #tpu.memory_space<vmem>>, vector<1x8x384xf32>
    %20 = vector.shape_cast %19 : vector<1x8x384xf32> to vector<8x384xf32>
    %21 = vector.extract_strided_slice %20 {offsets = [0, 0], sizes = [8, 128], strides = [1, 1]} : vector<8x384xf32> to vector<8x128xf32>
    %22 = vector.extract_strided_slice %20 {offsets = [0, 128], sizes = [8, 128], strides = [1, 1]} : vector<8x384xf32> to vector<8x128xf32>
    %23 = vector.extract_strided_slice %20 {offsets = [0, 256], sizes = [8, 128], strides = [1, 1]} : vector<8x384xf32> to vector<8x128xf32>
    %24 = vector.extract_strided_slice %17 {offsets = [0, 0], sizes = [8, 128], strides = [1, 1]} : vector<8x384xf32> to vector<8x128xf32>
    %25 = vector.extract_strided_slice %17 {offsets = [0, 128], sizes = [8, 128], strides = [1, 1]} : vector<8x384xf32> to vector<8x128xf32>
    %26 = vector.extract_strided_slice %17 {offsets = [0, 256], sizes = [8, 128], strides = [1, 1]} : vector<8x384xf32> to vector<8x128xf32>
    %27 = arith.addf %21, %24 : vector<8x128xf32>
    %28 = arith.negf %27 : vector<8x128xf32>
    %29 = math.exp %28 : vector<8x128xf32>
    %cst_20 = arith.constant 1.000000e+00 : f32
    %30 = vector.broadcast %cst_20 : f32 to vector<8x128xf32>
    %31 = arith.addf %30, %29 : vector<8x128xf32>
    %32 = arith.divf %30, %31 : vector<8x128xf32>
    %33 = arith.addf %22, %25 : vector<8x128xf32>
    %34 = arith.negf %33 : vector<8x128xf32>
    %35 = math.exp %34 : vector<8x128xf32>
    %cst_21 = arith.constant 1.000000e+00 : f32
    %36 = vector.broadcast %cst_21 : f32 to vector<8x128xf32>
    %37 = arith.addf %36, %35 : vector<8x128xf32>
    %38 = arith.divf %36, %37 : vector<8x128xf32>
    %39 = arith.mulf %32, %26 : vector<8x128xf32>
    %40 = arith.addf %23, %39 : vector<8x128xf32>
    %41 = math.tanh %40 : vector<8x128xf32>
    %42 = arith.mulf %38, %14 : vector<8x128xf32>
    %cst_22 = arith.constant 1.000000e+00 : f32
    %43 = vector.broadcast %cst_22 : f32 to vector<8x128xf32>
    %44 = arith.subf %43, %38 : vector<8x128xf32>
    %45 = arith.mulf %44, %41 : vector<8x128xf32>
    %46 = arith.addf %42, %45 : vector<8x128xf32>
    %47 = arith.index_cast %c0_i32_16 : i32 to index
    %c0_23 = arith.constant 0 : index
    %c0_24 = arith.constant 0 : index
    %48 = vector.load %arg7[%47, %c0_23, %c0_24] : memref<8x8x128xf32, #tpu.memory_space<vmem>>, vector<1x8x128xf32>
    %49 = vector.shape_cast %48 : vector<1x8x128xf32> to vector<8x128xf32>
    %50 = vector.shape_cast %46 : vector<8x128xf32> to vector<1x8x128xf32>
    tpu.vector_store %arg7[%47, %c0_23, %c0_24], %50 {strides = array<i32>} : memref<8x8x128xf32, #tpu.memory_space<vmem>>, vector<1x8x128xf32>,
    %c1_i32 = arith.constant 1 : i32
    %cst_25 = arith.constant dense<0.000000e+00> : vector<8x384xf32>
    %51 = tpu.matmul %46, %12, %cst_25 {dimension_numbers = #tpu.dot_dimension_numbers<[1], [0], [0], [1], [0, 0, 1, 1], [], []>} : vector<8x128xf32>, vector<128x384xf32>, vector<8x384xf32> -> vector<8x384xf32>
    %52 = vector.broadcast %13 : vector<1x384xf32> to vector<8x384xf32>
    %53 = arith.addf %51, %52 : vector<8x384xf32>
    %54 = arith.index_cast %c1_i32 : i32 to index
    %c0_26 = arith.constant 0 : index
    %c0_27 = arith.constant 0 : index
    %55 = vector.load %arg9[%54, %c0_26, %c0_27] : memref<8x8x384xf32, #tpu.memory_space<vmem>>, vector<1x8x384xf32>
    %56 = vector.shape_cast %55 : vector<1x8x384xf32> to vector<8x384xf32>
    %57 = vector.extract_strided_slice %56 {offsets = [0, 0], sizes = [8, 128], strides = [1, 1]} : vector<8x384xf32> to vector<8x128xf32>
    %58 = vector.extract_strided_slice %56 {offsets = [0, 128], sizes = [8, 128], strides = [1, 1]} : vector<8x384xf32> to vector<8x128xf32>
    %59 = vector.extract_strided_slice %56 {offsets = [0, 256], sizes = [8, 128], strides = [1, 1]} : vector<8x384xf32> to vector<8x128xf32>
    %60 = vector.extract_strided_slice %53 {offsets = [0, 0], sizes = [8, 128], strides = [1, 1]} : vector<8x384xf32> to vector<8x128xf32>
    %61 = vector.extract_strided_slice %53 {offsets = [0, 128], sizes = [8, 128], strides = [1, 1]} : vector<8x384xf32> to vector<8x128xf32>
    %62 = vector.extract_strided_slice %53 {offsets = [0, 256], sizes = [8, 128], strides = [1, 1]} : vector<8x384xf32> to vector<8x128xf32>
    %63 = arith.addf %57, %60 : vector<8x128xf32>
    %64 = arith.negf %63 : vector<8x128xf32>
    %65 = math.exp %64 : vector<8x128xf32>
    %cst_28 = arith.constant 1.000000e+00 : f32
    %66 = vector.broadcast %cst_28 : f32 to vector<8x128xf32>
    %67 = arith.addf %66, %65 : vector<8x128xf32>
    %68 = arith.divf %66, %67 : vector<8x128xf32>
    %69 = arith.addf %58, %61 : vector<8x128xf32>
    %70 = arith.negf %69 : vector<8x128xf32>
    %71 = math.exp %70 : vector<8x128xf32>
    %cst_29 = arith.constant 1.000000e+00 : f32
    %72 = vector.broadcast %cst_29 : f32 to vector<8x128xf32>
    %73 = arith.addf %72, %71 : vector<8x128xf32>
    %74 = arith.divf %72, %73 : vector<8x128xf32>
    %75 = arith.mulf %68, %62 : vector<8x128xf32>
    %76 = arith.addf %59, %75 : vector<8x128xf32>
    %77 = math.tanh %76 : vector<8x128xf32>
    %78 = arith.mulf %74, %46 : vector<8x128xf32>
    %cst_30 = arith.constant 1.000000e+00 : f32
    %79 = vector.broadcast %cst_30 : f32 to vector<8x128xf32>
    %80 = arith.subf %79, %74 : vector<8x128xf32>
    %81 = arith.mulf %80, %77 : vector<8x128xf32>
    %82 = arith.addf %78, %81 : vector<8x128xf32>
    %83 = arith.index_cast %c1_i32 : i32 to index
    %c0_31 = arith.constant 0 : index
    %c0_32 = arith.constant 0 : index
    %84 = vector.load %arg7[%83, %c0_31, %c0_32] : memref<8x8x128xf32, #tpu.memory_space<vmem>>, vector<1x8x128xf32>
    %85 = vector.shape_cast %84 : vector<1x8x128xf32> to vector<8x128xf32>
    %86 = vector.shape_cast %82 : vector<8x128xf32> to vector<1x8x128xf32>
    tpu.vector_store %arg7[%83, %c0_31, %c0_32], %86 {strides = array<i32>} : memref<8x8x128xf32, #tpu.memory_space<vmem>>, vector<1x8x128xf32>,
    %c2_i32 = arith.constant 2 : i32
    %cst_33 = arith.constant dense<0.000000e+00> : vector<8x384xf32>
    %87 = tpu.matmul %82, %12, %cst_33 {dimension_numbers = #tpu.dot_dimension_numbers<[1], [0], [0], [1], [0, 0, 1, 1], [], []>} : vector<8x128xf32>, vector<128x384xf32>, vector<8x384xf32> -> vector<8x384xf32>
    %88 = vector.broadcast %13 : vector<1x384xf32> to vector<8x384xf32>
    %89 = arith.addf %87, %88 : vector<8x384xf32>
    %90 = arith.index_cast %c2_i32 : i32 to index
    %c0_34 = arith.constant 0 : index
    %c0_35 = arith.constant 0 : index
    %91 = vector.load %arg9[%90, %c0_34, %c0_35] : memref<8x8x384xf32, #tpu.memory_space<vmem>>, vector<1x8x384xf32>
    %92 = vector.shape_cast %91 : vector<1x8x384xf32> to vector<8x384xf32>
    %93 = vector.extract_strided_slice %92 {offsets = [0, 0], sizes = [8, 128], strides = [1, 1]} : vector<8x384xf32> to vector<8x128xf32>
    %94 = vector.extract_strided_slice %92 {offsets = [0, 128], sizes = [8, 128], strides = [1, 1]} : vector<8x384xf32> to vector<8x128xf32>
    %95 = vector.extract_strided_slice %92 {offsets = [0, 256], sizes = [8, 128], strides = [1, 1]} : vector<8x384xf32> to vector<8x128xf32>
    %96 = vector.extract_strided_slice %89 {offsets = [0, 0], sizes = [8, 128], strides = [1, 1]} : vector<8x384xf32> to vector<8x128xf32>
    %97 = vector.extract_strided_slice %89 {offsets = [0, 128], sizes = [8, 128], strides = [1, 1]} : vector<8x384xf32> to vector<8x128xf32>
    %98 = vector.extract_strided_slice %89 {offsets = [0, 256], sizes = [8, 128], strides = [1, 1]} : vector<8x384xf32> to vector<8x128xf32>
    %99 = arith.addf %93, %96 : vector<8x128xf32>
    %100 = arith.negf %99 : vector<8x128xf32>
    %101 = math.exp %100 : vector<8x128xf32>
    %cst_36 = arith.constant 1.000000e+00 : f32
    %102 = vector.broadcast %cst_36 : f32 to vector<8x128xf32>
    %103 = arith.addf %102, %101 : vector<8x128xf32>
    %104 = arith.divf %102, %103 : vector<8x128xf32>
    %105 = arith.addf %94, %97 : vector<8x128xf32>
    %106 = arith.negf %105 : vector<8x128xf32>
    %107 = math.exp %106 : vector<8x128xf32>
    %cst_37 = arith.constant 1.000000e+00 : f32
    %108 = vector.broadcast %cst_37 : f32 to vector<8x128xf32>
    %109 = arith.addf %108, %107 : vector<8x128xf32>
    %110 = arith.divf %108, %109 : vector<8x128xf32>
    %111 = arith.mulf %104, %98 : vector<8x128xf32>
    %112 = arith.addf %95, %111 : vector<8x128xf32>
    %113 = math.tanh %112 : vector<8x128xf32>
    %114 = arith.mulf %110, %82 : vector<8x128xf32>
    %cst_38 = arith.constant 1.000000e+00 : f32
    %115 = vector.broadcast %cst_38 : f32 to vector<8x128xf32>
    %116 = arith.subf %115, %110 : vector<8x128xf32>
    %117 = arith.mulf %116, %113 : vector<8x128xf32>
    %118 = arith.addf %114, %117 : vector<8x128xf32>
    %119 = arith.index_cast %c2_i32 : i32 to index
    %c0_39 = arith.constant 0 : index
    %c0_40 = arith.constant 0 : index
    %120 = vector.load %arg7[%119, %c0_39, %c0_40] : memref<8x8x128xf32, #tpu.memory_space<vmem>>, vector<1x8x128xf32>
    %121 = vector.shape_cast %120 : vector<1x8x128xf32> to vector<8x128xf32>
    %122 = vector.shape_cast %118 : vector<8x128xf32> to vector<1x8x128xf32>
    tpu.vector_store %arg7[%119, %c0_39, %c0_40], %122 {strides = array<i32>} : memref<8x8x128xf32, #tpu.memory_space<vmem>>, vector<1x8x128xf32>,
    %c3_i32 = arith.constant 3 : i32
    %cst_41 = arith.constant dense<0.000000e+00> : vector<8x384xf32>
    %123 = tpu.matmul %118, %12, %cst_41 {dimension_numbers = #tpu.dot_dimension_numbers<[1], [0], [0], [1], [0, 0, 1, 1], [], []>} : vector<8x128xf32>, vector<128x384xf32>, vector<8x384xf32> -> vector<8x384xf32>
    %124 = vector.broadcast %13 : vector<1x384xf32> to vector<8x384xf32>
    %125 = arith.addf %123, %124 : vector<8x384xf32>
    %126 = arith.index_cast %c3_i32 : i32 to index
    %c0_42 = arith.constant 0 : index
    %c0_43 = arith.constant 0 : index
    %127 = vector.load %arg9[%126, %c0_42, %c0_43] : memref<8x8x384xf32, #tpu.memory_space<vmem>>, vector<1x8x384xf32>
    %128 = vector.shape_cast %127 : vector<1x8x384xf32> to vector<8x384xf32>
    %129 = vector.extract_strided_slice %128 {offsets = [0, 0], sizes = [8, 128], strides = [1, 1]} : vector<8x384xf32> to vector<8x128xf32>
    %130 = vector.extract_strided_slice %128 {offsets = [0, 128], sizes = [8, 128], strides = [1, 1]} : vector<8x384xf32> to vector<8x128xf32>
    %131 = vector.extract_strided_slice %128 {offsets = [0, 256], sizes = [8, 128], strides = [1, 1]} : vector<8x384xf32> to vector<8x128xf32>
    %132 = vector.extract_strided_slice %125 {offsets = [0, 0], sizes = [8, 128], strides = [1, 1]} : vector<8x384xf32> to vector<8x128xf32>
    %133 = vector.extract_strided_slice %125 {offsets = [0, 128], sizes = [8, 128], strides = [1, 1]} : vector<8x384xf32> to vector<8x128xf32>
    %134 = vector.extract_strided_slice %125 {offsets = [0, 256], sizes = [8, 128], strides = [1, 1]} : vector<8x384xf32> to vector<8x128xf32>
    %135 = arith.addf %129, %132 : vector<8x128xf32>
    %136 = arith.negf %135 : vector<8x128xf32>
    %137 = math.exp %136 : vector<8x128xf32>
    %cst_44 = arith.constant 1.000000e+00 : f32
    %138 = vector.broadcast %cst_44 : f32 to vector<8x128xf32>
    %139 = arith.addf %138, %137 : vector<8x128xf32>
    %140 = arith.divf %138, %139 : vector<8x128xf32>
    %141 = arith.addf %130, %133 : vector<8x128xf32>
    %142 = arith.negf %141 : vector<8x128xf32>
    %143 = math.exp %142 : vector<8x128xf32>
    %cst_45 = arith.constant 1.000000e+00 : f32
    %144 = vector.broadcast %cst_45 : f32 to vector<8x128xf32>
    %145 = arith.addf %144, %143 : vector<8x128xf32>
    %146 = arith.divf %144, %145 : vector<8x128xf32>
    %147 = arith.mulf %140, %134 : vector<8x128xf32>
    %148 = arith.addf %131, %147 : vector<8x128xf32>
    %149 = math.tanh %148 : vector<8x128xf32>
    %150 = arith.mulf %146, %118 : vector<8x128xf32>
    %cst_46 = arith.constant 1.000000e+00 : f32
    %151 = vector.broadcast %cst_46 : f32 to vector<8x128xf32>
    %152 = arith.subf %151, %146 : vector<8x128xf32>
    %153 = arith.mulf %152, %149 : vector<8x128xf32>
    %154 = arith.addf %150, %153 : vector<8x128xf32>
    %155 = arith.index_cast %c3_i32 : i32 to index
    %c0_47 = arith.constant 0 : index
    %c0_48 = arith.constant 0 : index
    %156 = vector.load %arg7[%155, %c0_47, %c0_48] : memref<8x8x128xf32, #tpu.memory_space<vmem>>, vector<1x8x128xf32>
    %157 = vector.shape_cast %156 : vector<1x8x128xf32> to vector<8x128xf32>
    %158 = vector.shape_cast %154 : vector<8x128xf32> to vector<1x8x128xf32>
    tpu.vector_store %arg7[%155, %c0_47, %c0_48], %158 {strides = array<i32>} : memref<8x8x128xf32, #tpu.memory_space<vmem>>, vector<1x8x128xf32>,
    %c4_i32 = arith.constant 4 : i32
    %cst_49 = arith.constant dense<0.000000e+00> : vector<8x384xf32>
    %159 = tpu.matmul %154, %12, %cst_49 {dimension_numbers = #tpu.dot_dimension_numbers<[1], [0], [0], [1], [0, 0, 1, 1], [], []>} : vector<8x128xf32>, vector<128x384xf32>, vector<8x384xf32> -> vector<8x384xf32>
    %160 = vector.broadcast %13 : vector<1x384xf32> to vector<8x384xf32>
    %161 = arith.addf %159, %160 : vector<8x384xf32>
    %162 = arith.index_cast %c4_i32 : i32 to index
    %c0_50 = arith.constant 0 : index
    %c0_51 = arith.constant 0 : index
    %163 = vector.load %arg9[%162, %c0_50, %c0_51] : memref<8x8x384xf32, #tpu.memory_space<vmem>>, vector<1x8x384xf32>
    %164 = vector.shape_cast %163 : vector<1x8x384xf32> to vector<8x384xf32>
    %165 = vector.extract_strided_slice %164 {offsets = [0, 0], sizes = [8, 128], strides = [1, 1]} : vector<8x384xf32> to vector<8x128xf32>
    %166 = vector.extract_strided_slice %164 {offsets = [0, 128], sizes = [8, 128], strides = [1, 1]} : vector<8x384xf32> to vector<8x128xf32>
    %167 = vector.extract_strided_slice %164 {offsets = [0, 256], sizes = [8, 128], strides = [1, 1]} : vector<8x384xf32> to vector<8x128xf32>
    %168 = vector.extract_strided_slice %161 {offsets = [0, 0], sizes = [8, 128], strides = [1, 1]} : vector<8x384xf32> to vector<8x128xf32>
    %169 = vector.extract_strided_slice %161 {offsets = [0, 128], sizes = [8, 128], strides = [1, 1]} : vector<8x384xf32> to vector<8x128xf32>
    %170 = vector.extract_strided_slice %161 {offsets = [0, 256], sizes = [8, 128], strides = [1, 1]} : vector<8x384xf32> to vector<8x128xf32>
    %171 = arith.addf %165, %168 : vector<8x128xf32>
    %172 = arith.negf %171 : vector<8x128xf32>
    %173 = math.exp %172 : vector<8x128xf32>
    %cst_52 = arith.constant 1.000000e+00 : f32
    %174 = vector.broadcast %cst_52 : f32 to vector<8x128xf32>
    %175 = arith.addf %174, %173 : vector<8x128xf32>
    %176 = arith.divf %174, %175 : vector<8x128xf32>
    %177 = arith.addf %166, %169 : vector<8x128xf32>
    %178 = arith.negf %177 : vector<8x128xf32>
    %179 = math.exp %178 : vector<8x128xf32>
    %cst_53 = arith.constant 1.000000e+00 : f32
    %180 = vector.broadcast %cst_53 : f32 to vector<8x128xf32>
    %181 = arith.addf %180, %179 : vector<8x128xf32>
    %182 = arith.divf %180, %181 : vector<8x128xf32>
    %183 = arith.mulf %176, %170 : vector<8x128xf32>
    %184 = arith.addf %167, %183 : vector<8x128xf32>
    %185 = math.tanh %184 : vector<8x128xf32>
    %186 = arith.mulf %182, %154 : vector<8x128xf32>
    %cst_54 = arith.constant 1.000000e+00 : f32
    %187 = vector.broadcast %cst_54 : f32 to vector<8x128xf32>
    %188 = arith.subf %187, %182 : vector<8x128xf32>
    %189 = arith.mulf %188, %185 : vector<8x128xf32>
    %190 = arith.addf %186, %189 : vector<8x128xf32>
    %191 = arith.index_cast %c4_i32 : i32 to index
    %c0_55 = arith.constant 0 : index
    %c0_56 = arith.constant 0 : index
    %192 = vector.load %arg7[%191, %c0_55, %c0_56] : memref<8x8x128xf32, #tpu.memory_space<vmem>>, vector<1x8x128xf32>
    %193 = vector.shape_cast %192 : vector<1x8x128xf32> to vector<8x128xf32>
    %194 = vector.shape_cast %190 : vector<8x128xf32> to vector<1x8x128xf32>
    tpu.vector_store %arg7[%191, %c0_55, %c0_56], %194 {strides = array<i32>} : memref<8x8x128xf32, #tpu.memory_space<vmem>>, vector<1x8x128xf32>,
    %c5_i32 = arith.constant 5 : i32
    %cst_57 = arith.constant dense<0.000000e+00> : vector<8x384xf32>
    %195 = tpu.matmul %190, %12, %cst_57 {dimension_numbers = #tpu.dot_dimension_numbers<[1], [0], [0], [1], [0, 0, 1, 1], [], []>} : vector<8x128xf32>, vector<128x384xf32>, vector<8x384xf32> -> vector<8x384xf32>
    %196 = vector.broadcast %13 : vector<1x384xf32> to vector<8x384xf32>
    %197 = arith.addf %195, %196 : vector<8x384xf32>
    %198 = arith.index_cast %c5_i32 : i32 to index
    %c0_58 = arith.constant 0 : index
    %c0_59 = arith.constant 0 : index
    %199 = vector.load %arg9[%198, %c0_58, %c0_59] : memref<8x8x384xf32, #tpu.memory_space<vmem>>, vector<1x8x384xf32>
    %200 = vector.shape_cast %199 : vector<1x8x384xf32> to vector<8x384xf32>
    %201 = vector.extract_strided_slice %200 {offsets = [0, 0], sizes = [8, 128], strides = [1, 1]} : vector<8x384xf32> to vector<8x128xf32>
    %202 = vector.extract_strided_slice %200 {offsets = [0, 128], sizes = [8, 128], strides = [1, 1]} : vector<8x384xf32> to vector<8x128xf32>
    %203 = vector.extract_strided_slice %200 {offsets = [0, 256], sizes = [8, 128], strides = [1, 1]} : vector<8x384xf32> to vector<8x128xf32>
    %204 = vector.extract_strided_slice %197 {offsets = [0, 0], sizes = [8, 128], strides = [1, 1]} : vector<8x384xf32> to vector<8x128xf32>
    %205 = vector.extract_strided_slice %197 {offsets = [0, 128], sizes = [8, 128], strides = [1, 1]} : vector<8x384xf32> to vector<8x128xf32>
    %206 = vector.extract_strided_slice %197 {offsets = [0, 256], sizes = [8, 128], strides = [1, 1]} : vector<8x384xf32> to vector<8x128xf32>
    %207 = arith.addf %201, %204 : vector<8x128xf32>
    %208 = arith.negf %207 : vector<8x128xf32>
    %209 = math.exp %208 : vector<8x128xf32>
    %cst_60 = arith.constant 1.000000e+00 : f32
    %210 = vector.broadcast %cst_60 : f32 to vector<8x128xf32>
    %211 = arith.addf %210, %209 : vector<8x128xf32>
    %212 = arith.divf %210, %211 : vector<8x128xf32>
    %213 = arith.addf %202, %205 : vector<8x128xf32>
    %214 = arith.negf %213 : vector<8x128xf32>
    %215 = math.exp %214 : vector<8x128xf32>
    %cst_61 = arith.constant 1.000000e+00 : f32
    %216 = vector.broadcast %cst_61 : f32 to vector<8x128xf32>
    %217 = arith.addf %216, %215 : vector<8x128xf32>
    %218 = arith.divf %216, %217 : vector<8x128xf32>
    %219 = arith.mulf %212, %206 : vector<8x128xf32>
    %220 = arith.addf %203, %219 : vector<8x128xf32>
    %221 = math.tanh %220 : vector<8x128xf32>
    %222 = arith.mulf %218, %190 : vector<8x128xf32>
    %cst_62 = arith.constant 1.000000e+00 : f32
    %223 = vector.broadcast %cst_62 : f32 to vector<8x128xf32>
    %224 = arith.subf %223, %218 : vector<8x128xf32>
    %225 = arith.mulf %224, %221 : vector<8x128xf32>
    %226 = arith.addf %222, %225 : vector<8x128xf32>
    %227 = arith.index_cast %c5_i32 : i32 to index
    %c0_63 = arith.constant 0 : index
    %c0_64 = arith.constant 0 : index
    %228 = vector.load %arg7[%227, %c0_63, %c0_64] : memref<8x8x128xf32, #tpu.memory_space<vmem>>, vector<1x8x128xf32>
    %229 = vector.shape_cast %228 : vector<1x8x128xf32> to vector<8x128xf32>
    %230 = vector.shape_cast %226 : vector<8x128xf32> to vector<1x8x128xf32>
    tpu.vector_store %arg7[%227, %c0_63, %c0_64], %230 {strides = array<i32>} : memref<8x8x128xf32, #tpu.memory_space<vmem>>, vector<1x8x128xf32>,
    %c6_i32 = arith.constant 6 : i32
    %cst_65 = arith.constant dense<0.000000e+00> : vector<8x384xf32>
    %231 = tpu.matmul %226, %12, %cst_65 {dimension_numbers = #tpu.dot_dimension_numbers<[1], [0], [0], [1], [0, 0, 1, 1], [], []>} : vector<8x128xf32>, vector<128x384xf32>, vector<8x384xf32> -> vector<8x384xf32>
    %232 = vector.broadcast %13 : vector<1x384xf32> to vector<8x384xf32>
    %233 = arith.addf %231, %232 : vector<8x384xf32>
    %234 = arith.index_cast %c6_i32 : i32 to index
    %c0_66 = arith.constant 0 : index
    %c0_67 = arith.constant 0 : index
    %235 = vector.load %arg9[%234, %c0_66, %c0_67] : memref<8x8x384xf32, #tpu.memory_space<vmem>>, vector<1x8x384xf32>
    %236 = vector.shape_cast %235 : vector<1x8x384xf32> to vector<8x384xf32>
    %237 = vector.extract_strided_slice %236 {offsets = [0, 0], sizes = [8, 128], strides = [1, 1]} : vector<8x384xf32> to vector<8x128xf32>
    %238 = vector.extract_strided_slice %236 {offsets = [0, 128], sizes = [8, 128], strides = [1, 1]} : vector<8x384xf32> to vector<8x128xf32>
    %239 = vector.extract_strided_slice %236 {offsets = [0, 256], sizes = [8, 128], strides = [1, 1]} : vector<8x384xf32> to vector<8x128xf32>
    %240 = vector.extract_strided_slice %233 {offsets = [0, 0], sizes = [8, 128], strides = [1, 1]} : vector<8x384xf32> to vector<8x128xf32>
    %241 = vector.extract_strided_slice %233 {offsets = [0, 128], sizes = [8, 128], strides = [1, 1]} : vector<8x384xf32> to vector<8x128xf32>
    %242 = vector.extract_strided_slice %233 {offsets = [0, 256], sizes = [8, 128], strides = [1, 1]} : vector<8x384xf32> to vector<8x128xf32>
    %243 = arith.addf %237, %240 : vector<8x128xf32>
    %244 = arith.negf %243 : vector<8x128xf32>
    %245 = math.exp %244 : vector<8x128xf32>
    %cst_68 = arith.constant 1.000000e+00 : f32
    %246 = vector.broadcast %cst_68 : f32 to vector<8x128xf32>
    %247 = arith.addf %246, %245 : vector<8x128xf32>
    %248 = arith.divf %246, %247 : vector<8x128xf32>
    %249 = arith.addf %238, %241 : vector<8x128xf32>
    %250 = arith.negf %249 : vector<8x128xf32>
    %251 = math.exp %250 : vector<8x128xf32>
    %cst_69 = arith.constant 1.000000e+00 : f32
    %252 = vector.broadcast %cst_69 : f32 to vector<8x128xf32>
    %253 = arith.addf %252, %251 : vector<8x128xf32>
    %254 = arith.divf %252, %253 : vector<8x128xf32>
    %255 = arith.mulf %248, %242 : vector<8x128xf32>
    %256 = arith.addf %239, %255 : vector<8x128xf32>
    %257 = math.tanh %256 : vector<8x128xf32>
    %258 = arith.mulf %254, %226 : vector<8x128xf32>
    %cst_70 = arith.constant 1.000000e+00 : f32
    %259 = vector.broadcast %cst_70 : f32 to vector<8x128xf32>
    %260 = arith.subf %259, %254 : vector<8x128xf32>
    %261 = arith.mulf %260, %257 : vector<8x128xf32>
    %262 = arith.addf %258, %261 : vector<8x128xf32>
    %263 = arith.index_cast %c6_i32 : i32 to index
    %c0_71 = arith.constant 0 : index
    %c0_72 = arith.constant 0 : index
    %264 = vector.load %arg7[%263, %c0_71, %c0_72] : memref<8x8x128xf32, #tpu.memory_space<vmem>>, vector<1x8x128xf32>
    %265 = vector.shape_cast %264 : vector<1x8x128xf32> to vector<8x128xf32>
    %266 = vector.shape_cast %262 : vector<8x128xf32> to vector<1x8x128xf32>
    tpu.vector_store %arg7[%263, %c0_71, %c0_72], %266 {strides = array<i32>} : memref<8x8x128xf32, #tpu.memory_space<vmem>>, vector<1x8x128xf32>,
    %c7_i32 = arith.constant 7 : i32
    %cst_73 = arith.constant dense<0.000000e+00> : vector<8x384xf32>
    %267 = tpu.matmul %262, %12, %cst_73 {dimension_numbers = #tpu.dot_dimension_numbers<[1], [0], [0], [1], [0, 0, 1, 1], [], []>} : vector<8x128xf32>, vector<128x384xf32>, vector<8x384xf32> -> vector<8x384xf32>
    %268 = vector.broadcast %13 : vector<1x384xf32> to vector<8x384xf32>
    %269 = arith.addf %267, %268 : vector<8x384xf32>
    %270 = arith.index_cast %c7_i32 : i32 to index
    %c0_74 = arith.constant 0 : index
    %c0_75 = arith.constant 0 : index
    %271 = vector.load %arg9[%270, %c0_74, %c0_75] : memref<8x8x384xf32, #tpu.memory_space<vmem>>, vector<1x8x384xf32>
    %272 = vector.shape_cast %271 : vector<1x8x384xf32> to vector<8x384xf32>
    %273 = vector.extract_strided_slice %272 {offsets = [0, 0], sizes = [8, 128], strides = [1, 1]} : vector<8x384xf32> to vector<8x128xf32>
    %274 = vector.extract_strided_slice %272 {offsets = [0, 128], sizes = [8, 128], strides = [1, 1]} : vector<8x384xf32> to vector<8x128xf32>
    %275 = vector.extract_strided_slice %272 {offsets = [0, 256], sizes = [8, 128], strides = [1, 1]} : vector<8x384xf32> to vector<8x128xf32>
    %276 = vector.extract_strided_slice %269 {offsets = [0, 0], sizes = [8, 128], strides = [1, 1]} : vector<8x384xf32> to vector<8x128xf32>
    %277 = vector.extract_strided_slice %269 {offsets = [0, 128], sizes = [8, 128], strides = [1, 1]} : vector<8x384xf32> to vector<8x128xf32>
    %278 = vector.extract_strided_slice %269 {offsets = [0, 256], sizes = [8, 128], strides = [1, 1]} : vector<8x384xf32> to vector<8x128xf32>
    %279 = arith.addf %273, %276 : vector<8x128xf32>
    %280 = arith.negf %279 : vector<8x128xf32>
    %281 = math.exp %280 : vector<8x128xf32>
    %cst_76 = arith.constant 1.000000e+00 : f32
    %282 = vector.broadcast %cst_76 : f32 to vector<8x128xf32>
    %283 = arith.addf %282, %281 : vector<8x128xf32>
    %284 = arith.divf %282, %283 : vector<8x128xf32>
    %285 = arith.addf %274, %277 : vector<8x128xf32>
    %286 = arith.negf %285 : vector<8x128xf32>
    %287 = math.exp %286 : vector<8x128xf32>
    %cst_77 = arith.constant 1.000000e+00 : f32
    %288 = vector.broadcast %cst_77 : f32 to vector<8x128xf32>
    %289 = arith.addf %288, %287 : vector<8x128xf32>
    %290 = arith.divf %288, %289 : vector<8x128xf32>
    %291 = arith.mulf %284, %278 : vector<8x128xf32>
    %292 = arith.addf %275, %291 : vector<8x128xf32>
    %293 = math.tanh %292 : vector<8x128xf32>
    %294 = arith.mulf %290, %262 : vector<8x128xf32>
    %cst_78 = arith.constant 1.000000e+00 : f32
    %295 = vector.broadcast %cst_78 : f32 to vector<8x128xf32>
    %296 = arith.subf %295, %290 : vector<8x128xf32>
    %297 = arith.mulf %296, %293 : vector<8x128xf32>
    %298 = arith.addf %294, %297 : vector<8x128xf32>
    %299 = arith.index_cast %c7_i32 : i32 to index
    %c0_79 = arith.constant 0 : index
    %c0_80 = arith.constant 0 : index
    %300 = vector.load %arg7[%299, %c0_79, %c0_80] : memref<8x8x128xf32, #tpu.memory_space<vmem>>, vector<1x8x128xf32>
    %301 = vector.shape_cast %300 : vector<1x8x128xf32> to vector<8x128xf32>
    %302 = vector.shape_cast %298 : vector<8x128xf32> to vector<1x8x128xf32>
    tpu.vector_store %arg7[%299, %c0_79, %c0_80], %302 {strides = array<i32>} : memref<8x8x128xf32, #tpu.memory_space<vmem>>, vector<1x8x128xf32>,
    %c8_i32 = arith.constant 8 : i32
    %c0_81 = arith.constant 0 : index
    %c0_82 = arith.constant 0 : index
    %303 = vector.load %arg8[%c0_81, %c0_82] : memref<8x128xf32, #tpu.memory_space<vmem>>, vector<8x128xf32>
    tpu.vector_store %arg8[%c0_81, %c0_82], %298 {strides = array<i32>} : memref<8x128xf32, #tpu.memory_space<vmem>>, vector<8x128xf32>,
    return
  }
  func.func @transform_0(%arg0: i32) -> (i32, i32, i32) {
    %c0_i32 = arith.constant 0 : i32
    %c0_i32_0 = arith.constant 0 : i32
    %c0_i32_1 = arith.constant 0 : i32
    return %arg0, %c0_i32, %c0_i32_0 : i32, i32, i32
  }
  func.func @transform_1(%arg0: i32) -> (i32, i32) {
    %c0_i32 = arith.constant 0 : i32
    %c0_i32_0 = arith.constant 0 : i32
    %c0_i32_1 = arith.constant 0 : i32
    return %c0_i32, %c0_i32_0 : i32, i32
  }
  func.func @transform_2(%arg0: i32) -> (i32, i32) {
    %c0_i32 = arith.constant 0 : i32
    %c0_i32_0 = arith.constant 0 : i32
    %c0_i32_1 = arith.constant 0 : i32
    return %c0_i32, %c0_i32_0 : i32, i32
  }
  func.func @transform_3(%arg0: i32) -> (i32, i32) {
    %c0_i32 = arith.constant 0 : i32
    %c0_i32_0 = arith.constant 0 : i32
    %c0_i32_1 = arith.constant 0 : i32
    return %c0_i32, %c0_i32_0 : i32, i32
  }
  func.func @transform_4(%arg0: i32) -> (i32, i32) {
    %c0_i32 = arith.constant 0 : i32
    %c0_i32_0 = arith.constant 0 : i32
    %c0_i32_1 = arith.constant 0 : i32
    return %c0_i32, %c0_i32_0 : i32, i32
  }
  func.func @transform_5(%arg0: i32) -> (i32, i32) {
    %c0_i32 = arith.constant 0 : i32
    %c0_i32_0 = arith.constant 0 : i32
    %c0_i32_1 = arith.constant 0 : i32
    return %c0_i32, %c0_i32_0 : i32, i32
  }
  func.func @transform_6(%arg0: i32) -> (i32, i32, i32) {
    %c0_i32 = arith.constant 0 : i32
    %c0_i32_0 = arith.constant 0 : i32
    %c0_i32_1 = arith.constant 0 : i32
    return %arg0, %c0_i32, %c0_i32_0 : i32, i32, i32
  }
}

module attributes {stable_mosaic.version = 11 : i64} {
  func.func @gru_layer_kernel(%arg0: i32, %arg1: memref<8x8x128xf32, #tpu.memory_space<vmem>>, %arg2: memref<8x128xf32, #tpu.memory_space<vmem>>, %arg3: memref<128x384xf32, #tpu.memory_space<vmem>>, %arg4: memref<1x384xf32, #tpu.memory_space<vmem>>, %arg5: memref<128x384xf32, #tpu.memory_space<vmem>>, %arg6: memref<1x384xf32, #tpu.memory_space<vmem>>, %arg7: memref<8x8x128xf32, #tpu.memory_space<vmem>>, %arg8: memref<8x128xf32, #tpu.memory_space<vmem>>, %arg9: memref<8x8x384xf32, #tpu.memory_space<vmem>>) attributes {dimension_semantics = [#tpu.dimension_semantics<arbitrary>], iteration_bounds = array<i64: 1>, scalar_prefetch = 0 : i64, scratch_operands = 2 : i64, tpu.core_type = #tpu.core_type<tc>, window_params = [{transform_indices = @transform_0, window_bounds = array<i64: 8, 8, 128>}, {pipeline_mode = #tpu.pipeline_mode<synchronous>, transform_indices = @transform_1, window_bounds = array<i64: 8, 128>}, {pipeline_mode = #tpu.pipeline_mode<synchronous>, transform_indices = @transform_2, window_bounds = array<i64: 128, 384>}, {pipeline_mode = #tpu.pipeline_mode<synchronous>, transform_indices = @transform_3, window_bounds = array<i64: 1, 384>}, {pipeline_mode = #tpu.pipeline_mode<synchronous>, transform_indices = @transform_4, window_bounds = array<i64: 128, 384>}, {pipeline_mode = #tpu.pipeline_mode<synchronous>, transform_indices = @transform_5, window_bounds = array<i64: 1, 384>}, {transform_indices = @transform_6, window_bounds = array<i64: 8, 8, 128>}]} {
    %c0_i32 = arith.constant 0 : i32
    %0 = arith.cmpi eq, %arg0, %c0_i32 : i32
    %1 = arith.extui %0 : i1 to i32
    %c0_i32_0 = arith.constant 0 : i32
    %2 = arith.cmpi ne, %1, %c0_i32_0 : i32
    scf.if %2 {
      %c0_83 = arith.constant 0 : index
      %c0_84 = arith.constant 0 : index
      %304 = vector.load %arg2[%c0_83, %c0_84] : memref<8x128xf32, #tpu.memory_space<vmem>>, vector<8x128xf32>
      %c0_85 = arith.constant 0 : index
      %c0_86 = arith.constant 0 : index
      %305 = vector.load %arg8[%c0_85, %c0_86] : memref<8x128xf32, #tpu.memory_space<vmem>>, vector<8x128xf32>
      tpu.vector_store %arg8[%c0_85, %c0_86], %304 {strides = array<i32>} : memref<8x128xf32, #tpu.memory_space<vmem>>, vector<8x128xf32>,
    } else {
    }
    %c0 = arith.constant 0 : index
    %c0_1 = arith.constant 0 : index
    %c0_2 = arith.constant 0 : index
    %3 = vector.load %arg1[%c0, %c0_1, %c0_2] : memref<8x8x128xf32, #tpu.memory_space<vmem>>, vector<8x8x128xf32>
    %4 = vector.shape_cast %3 : vector<8x8x128xf32> to vector<64x128xf32>
    %c0_3 = arith.constant 0 : index
    %c0_4 = arith.constant 0 : index
    %5 = vector.load %arg3[%c0_3, %c0_4] : memref<128x384xf32, #tpu.memory_space<vmem>>, vector<128x384xf32>
    %cst = arith.constant dense<0.000000e+00> : vector<64x384xf32>
    %6 = tpu.matmul %4, %5, %cst {dimension_numbers = #tpu.dot_dimension_numbers<[1], [0], [0], [1], [0, 0, 1, 1], [], []>} : vector<64x128xf32>, vector<128x384xf32>, vector<64x384xf32> -> vector<64x384xf32>
    %c0_5 = arith.constant 0 : index
    %c0_6 = arith.constant 0 : index
    %7 = vector.load %arg4[%c0_5, %c0_6] : memref<1x384xf32, #tpu.memory_space<vmem>>, vector<1x384xf32>
    %8 = vector.broadcast %7 : vector<1x384xf32> to vector<64x384xf32>
    %9 = arith.addf %6, %8 : vector<64x384xf32>
    %10 = vector.shape_cast %9 : vector<64x384xf32> to vector<8x8x384xf32>
    %c0_7 = arith.constant 0 : index
    %c0_8 = arith.constant 0 : index
    %c0_9 = arith.constant 0 : index
    %11 = vector.load %arg9[%c0_7, %c0_8, %c0_9] : memref<8x8x384xf32, #tpu.memory_space<vmem>>, vector<8x8x384xf32>
    tpu.vector_store %arg9[%c0_7, %c0_8, %c0_9], %10 {strides = array<i32>} : memref<8x8x384xf32, #tpu.memory_space<vmem>>, vector<8x8x384xf32>,
    %c0_10 = arith.constant 0 : index
    %c0_11 = arith.constant 0 : index
    %12 = vector.load %arg5[%c0_10, %c0_11] : memref<128x384xf32, #tpu.memory_space<vmem>>, vector<128x384xf32>
    %c0_12 = arith.constant 0 : index
    %c0_13 = arith.constant 0 : index
    %13 = vector.load %arg6[%c0_12, %c0_13] : memref<1x384xf32, #tpu.memory_space<vmem>>, vector<1x384xf32>
    %c0_14 = arith.constant 0 : index
    %c0_15 = arith.constant 0 : index
    %14 = vector.load %arg8[%c0_14, %c0_15] : memref<8x128xf32, #tpu.memory_space<vmem>>, vector<8x128xf32>
    %c0_i32_16 = arith.constant 0 : i32
    %cst_17 = arith.constant dense<0.000000e+00> : vector<8x384xf32>
    %15 = tpu.matmul %14, %12, %cst_17 {dimension_numbers = #tpu.dot_dimension_numbers<[1], [0], [0], [1], [0, 0, 1, 1], [], []>} : vector<8x128xf32>, vector<128x384xf32>, vector<8x384xf32> -> vector<8x384xf32>
    %16 = vector.broadcast %13 : vector<1x384xf32> to vector<8x384xf32>
    %17 = arith.addf %15, %16 : vector<8x384xf32>
    %18 = arith.index_cast %c0_i32_16 : i32 to index
    %c0_18 = arith.constant 0 : index
    %c0_19 = arith.constant 0 : index
    %19 = vector.load %arg9[%18, %c0_18, %c0_19] : memref<8x8x384xf32, #tpu.memory_space<vmem>>, vector<1x8x384xf32>
    %20 = vector.shape_cast %19 : vector<1x8x384xf32> to vector<8x384xf32>
    %21 = vector.extract_strided_slice %20 {offsets = [0, 0], sizes = [8, 128], strides = [1, 1]} : vector<8x384xf32> to vector<8x128xf32>
    %22 = vector.extract_strided_slice %20 {offsets = [0, 128], sizes = [8, 128], strides = [1, 1]} : vector<8x384xf32> to vector<8x128xf32>
    %23 = vector.extract_strided_slice %20 {offsets = [0, 256], sizes = [8, 128], strides = [1, 1]} : vector<8x384xf32> to vector<8x128xf32>
    %24 = vector.extract_strided_slice %17 {offsets = [0, 0], sizes = [8, 128], strides = [1, 1]} : vector<8x384xf32> to vector<8x128xf32>
    %25 = vector.extract_strided_slice %17 {offsets = [0, 128], sizes = [8, 128], strides = [1, 1]} : vector<8x384xf32> to vector<8x128xf32>
    %26 = vector.extract_strided_slice %17 {offsets = [0, 256], sizes = [8, 128], strides = [1, 1]} : vector<8x384xf32> to vector<8x128xf32>
    %27 = arith.addf %21, %24 : vector<8x128xf32>
    %28 = arith.negf %27 : vector<8x128xf32>
    %29 = math.exp %28 : vector<8x128xf32>
    %cst_20 = arith.constant 1.000000e+00 : f32
    %30 = vector.broadcast %cst_20 : f32 to vector<8x128xf32>
    %31 = arith.addf %30, %29 : vector<8x128xf32>
    %32 = arith.divf %30, %31 : vector<8x128xf32>
    %33 = arith.addf %22, %25 : vector<8x128xf32>
    %34 = arith.negf %33 : vector<8x128xf32>
    %35 = math.exp %34 : vector<8x128xf32>
    %cst_21 = arith.constant 1.000000e+00 : f32
    %36 = vector.broadcast %cst_21 : f32 to vector<8x128xf32>
    %37 = arith.addf %36, %35 : vector<8x128xf32>
    %38 = arith.divf %36, %37 : vector<8x128xf32>
    %39 = arith.mulf %32, %26 : vector<8x128xf32>
    %40 = arith.addf %23, %39 : vector<8x128xf32>
    %41 = math.tanh %40 : vector<8x128xf32>
    %42 = arith.mulf %38, %14 : vector<8x128xf32>
    %cst_22 = arith.constant 1.000000e+00 : f32
    %43 = vector.broadcast %cst_22 : f32 to vector<8x128xf32>
    %44 = arith.subf %43, %38 : vector<8x128xf32>
    %45 = arith.mulf %44, %41 : vector<8x128xf32>
    %46 = arith.addf %42, %45 : vector<8x128xf32>
    %47 = arith.index_cast %c0_i32_16 : i32 to index
    %c0_23 = arith.constant 0 : index
    %c0_24 = arith.constant 0 : index
    %48 = vector.load %arg7[%47, %c0_23, %c0_24] : memref<8x8x128xf32, #tpu.memory_space<vmem>>, vector<1x8x128xf32>
    %49 = vector.shape_cast %48 : vector<1x8x128xf32> to vector<8x128xf32>
    %50 = vector.shape_cast %46 : vector<8x128xf32> to vector<1x8x128xf32>
    tpu.vector_store %arg7[%47, %c0_23, %c0_24], %50 {strides = array<i32>} : memref<8x8x128xf32, #tpu.memory_space<vmem>>, vector<1x8x128xf32>,
    %c1_i32 = arith.constant 1 : i32
    %cst_25 = arith.constant dense<0.000000e+00> : vector<8x384xf32>
    %51 = tpu.matmul %46, %12, %cst_25 {dimension_numbers = #tpu.dot_dimension_numbers<[1], [0], [0], [1], [0, 0, 1, 1], [], []>} : vector<8x128xf32>, vector<128x384xf32>, vector<8x384xf32> -> vector<8x384xf32>
    %52 = vector.broadcast %13 : vector<1x384xf32> to vector<8x384xf32>
    %53 = arith.addf %51, %52 : vector<8x384xf32>
    %54 = arith.index_cast %c1_i32 : i32 to index
    %c0_26 = arith.constant 0 : index
    %c0_27 = arith.constant 0 : index
    %55 = vector.load %arg9[%54, %c0_26, %c0_27] : memref<8x8x384xf32, #tpu.memory_space<vmem>>, vector<1x8x384xf32>
    %56 = vector.shape_cast %55 : vector<1x8x384xf32> to vector<8x384xf32>
    %57 = vector.extract_strided_slice %56 {offsets = [0, 0], sizes = [8, 128], strides = [1, 1]} : vector<8x384xf32> to vector<8x128xf32>
    %58 = vector.extract_strided_slice %56 {offsets = [0, 128], sizes = [8, 128], strides = [1, 1]} : vector<8x384xf32> to vector<8x128xf32>
    %59 = vector.extract_strided_slice %56 {offsets = [0, 256], sizes = [8, 128], strides = [1, 1]} : vector<8x384xf32> to vector<8x128xf32>
    %60 = vector.extract_strided_slice %53 {offsets = [0, 0], sizes = [8, 128], strides = [1, 1]} : vector<8x384xf32> to vector<8x128xf32>
    %61 = vector.extract_strided_slice %53 {offsets = [0, 128], sizes = [8, 128], strides = [1, 1]} : vector<8x384xf32> to vector<8x128xf32>
    %62 = vector.extract_strided_slice %53 {offsets = [0, 256], sizes = [8, 128], strides = [1, 1]} : vector<8x384xf32> to vector<8x128xf32>
    %63 = arith.addf %57, %60 : vector<8x128xf32>
    %64 = arith.negf %63 : vector<8x128xf32>
    %65 = math.exp %64 : vector<8x128xf32>
    %cst_28 = arith.constant 1.000000e+00 : f32
    %66 = vector.broadcast %cst_28 : f32 to vector<8x128xf32>
    %67 = arith.addf %66, %65 : vector<8x128xf32>
    %68 = arith.divf %66, %67 : vector<8x128xf32>
    %69 = arith.addf %58, %61 : vector<8x128xf32>
    %70 = arith.negf %69 : vector<8x128xf32>
    %71 = math.exp %70 : vector<8x128xf32>
    %cst_29 = arith.constant 1.000000e+00 : f32
    %72 = vector.broadcast %cst_29 : f32 to vector<8x128xf32>
    %73 = arith.addf %72, %71 : vector<8x128xf32>
    %74 = arith.divf %72, %73 : vector<8x128xf32>
    %75 = arith.mulf %68, %62 : vector<8x128xf32>
    %76 = arith.addf %59, %75 : vector<8x128xf32>
    %77 = math.tanh %76 : vector<8x128xf32>
    %78 = arith.mulf %74, %46 : vector<8x128xf32>
    %cst_30 = arith.constant 1.000000e+00 : f32
    %79 = vector.broadcast %cst_30 : f32 to vector<8x128xf32>
    %80 = arith.subf %79, %74 : vector<8x128xf32>
    %81 = arith.mulf %80, %77 : vector<8x128xf32>
    %82 = arith.addf %78, %81 : vector<8x128xf32>
    %83 = arith.index_cast %c1_i32 : i32 to index
    %c0_31 = arith.constant 0 : index
    %c0_32 = arith.constant 0 : index
    %84 = vector.load %arg7[%83, %c0_31, %c0_32] : memref<8x8x128xf32, #tpu.memory_space<vmem>>, vector<1x8x128xf32>
    %85 = vector.shape_cast %84 : vector<1x8x128xf32> to vector<8x128xf32>
    %86 = vector.shape_cast %82 : vector<8x128xf32> to vector<1x8x128xf32>
    tpu.vector_store %arg7[%83, %c0_31, %c0_32], %86 {strides = array<i32>} : memref<8x8x128xf32, #tpu.memory_space<vmem>>, vector<1x8x128xf32>,
    %c2_i32 = arith.constant 2 : i32
    %cst_33 = arith.constant dense<0.000000e+00> : vector<8x384xf32>
    %87 = tpu.matmul %82, %12, %cst_33 {dimension_numbers = #tpu.dot_dimension_numbers<[1], [0], [0], [1], [0, 0, 1, 1], [], []>} : vector<8x128xf32>, vector<128x384xf32>, vector<8x384xf32> -> vector<8x384xf32>
    %88 = vector.broadcast %13 : vector<1x384xf32> to vector<8x384xf32>
    %89 = arith.addf %87, %88 : vector<8x384xf32>
    %90 = arith.index_cast %c2_i32 : i32 to index
    %c0_34 = arith.constant 0 : index
    %c0_35 = arith.constant 0 : index
    %91 = vector.load %arg9[%90, %c0_34, %c0_35] : memref<8x8x384xf32, #tpu.memory_space<vmem>>, vector<1x8x384xf32>
    %92 = vector.shape_cast %91 : vector<1x8x384xf32> to vector<8x384xf32>
    %93 = vector.extract_strided_slice %92 {offsets = [0, 0], sizes = [8, 128], strides = [1, 1]} : vector<8x384xf32> to vector<8x128xf32>
    %94 = vector.extract_strided_slice %92 {offsets = [0, 128], sizes = [8, 128], strides = [1, 1]} : vector<8x384xf32> to vector<8x128xf32>
    %95 = vector.extract_strided_slice %92 {offsets = [0, 256], sizes = [8, 128], strides = [1, 1]} : vector<8x384xf32> to vector<8x128xf32>
    %96 = vector.extract_strided_slice %89 {offsets = [0, 0], sizes = [8, 128], strides = [1, 1]} : vector<8x384xf32> to vector<8x128xf32>
    %97 = vector.extract_strided_slice %89 {offsets = [0, 128], sizes = [8, 128], strides = [1, 1]} : vector<8x384xf32> to vector<8x128xf32>
    %98 = vector.extract_strided_slice %89 {offsets = [0, 256], sizes = [8, 128], strides = [1, 1]} : vector<8x384xf32> to vector<8x128xf32>
    %99 = arith.addf %93, %96 : vector<8x128xf32>
    %100 = arith.negf %99 : vector<8x128xf32>
    %101 = math.exp %100 : vector<8x128xf32>
    %cst_36 = arith.constant 1.000000e+00 : f32
    %102 = vector.broadcast %cst_36 : f32 to vector<8x128xf32>
    %103 = arith.addf %102, %101 : vector<8x128xf32>
    %104 = arith.divf %102, %103 : vector<8x128xf32>
    %105 = arith.addf %94, %97 : vector<8x128xf32>
    %106 = arith.negf %105 : vector<8x128xf32>
    %107 = math.exp %106 : vector<8x128xf32>
    %cst_37 = arith.constant 1.000000e+00 : f32
    %108 = vector.broadcast %cst_37 : f32 to vector<8x128xf32>
    %109 = arith.addf %108, %107 : vector<8x128xf32>
    %110 = arith.divf %108, %109 : vector<8x128xf32>
    %111 = arith.mulf %104, %98 : vector<8x128xf32>
    %112 = arith.addf %95, %111 : vector<8x128xf32>
    %113 = math.tanh %112 : vector<8x128xf32>
    %114 = arith.mulf %110, %82 : vector<8x128xf32>
    %cst_38 = arith.constant 1.000000e+00 : f32
    %115 = vector.broadcast %cst_38 : f32 to vector<8x128xf32>
    %116 = arith.subf %115, %110 : vector<8x128xf32>
    %117 = arith.mulf %116, %113 : vector<8x128xf32>
    %118 = arith.addf %114, %117 : vector<8x128xf32>
    %119 = arith.index_cast %c2_i32 : i32 to index
    %c0_39 = arith.constant 0 : index
    %c0_40 = arith.constant 0 : index
    %120 = vector.load %arg7[%119, %c0_39, %c0_40] : memref<8x8x128xf32, #tpu.memory_space<vmem>>, vector<1x8x128xf32>
    %121 = vector.shape_cast %120 : vector<1x8x128xf32> to vector<8x128xf32>
    %122 = vector.shape_cast %118 : vector<8x128xf32> to vector<1x8x128xf32>
    tpu.vector_store %arg7[%119, %c0_39, %c0_40], %122 {strides = array<i32>} : memref<8x8x128xf32, #tpu.memory_space<vmem>>, vector<1x8x128xf32>,
    %c3_i32 = arith.constant 3 : i32
    %cst_41 = arith.constant dense<0.000000e+00> : vector<8x384xf32>
    %123 = tpu.matmul %118, %12, %cst_41 {dimension_numbers = #tpu.dot_dimension_numbers<[1], [0], [0], [1], [0, 0, 1, 1], [], []>} : vector<8x128xf32>, vector<128x384xf32>, vector<8x384xf32> -> vector<8x384xf32>
    %124 = vector.broadcast %13 : vector<1x384xf32> to vector<8x384xf32>
    %125 = arith.addf %123, %124 : vector<8x384xf32>
    %126 = arith.index_cast %c3_i32 : i32 to index
    %c0_42 = arith.constant 0 : index
    %c0_43 = arith.constant 0 : index
    %127 = vector.load %arg9[%126, %c0_42, %c0_43] : memref<8x8x384xf32, #tpu.memory_space<vmem>>, vector<1x8x384xf32>
    %128 = vector.shape_cast %127 : vector<1x8x384xf32> to vector<8x384xf32>
    %129 = vector.extract_strided_slice %128 {offsets = [0, 0], sizes = [8, 128], strides = [1, 1]} : vector<8x384xf32> to vector<8x128xf32>
    %130 = vector.extract_strided_slice %128 {offsets = [0, 128], sizes = [8, 128], strides = [1, 1]} : vector<8x384xf32> to vector<8x128xf32>
    %131 = vector.extract_strided_slice %128 {offsets = [0, 256], sizes = [8, 128], strides = [1, 1]} : vector<8x384xf32> to vector<8x128xf32>
    %132 = vector.extract_strided_slice %125 {offsets = [0, 0], sizes = [8, 128], strides = [1, 1]} : vector<8x384xf32> to vector<8x128xf32>
    %133 = vector.extract_strided_slice %125 {offsets = [0, 128], sizes = [8, 128], strides = [1, 1]} : vector<8x384xf32> to vector<8x128xf32>
    %134 = vector.extract_strided_slice %125 {offsets = [0, 256], sizes = [8, 128], strides = [1, 1]} : vector<8x384xf32> to vector<8x128xf32>
    %135 = arith.addf %129, %132 : vector<8x128xf32>
    %136 = arith.negf %135 : vector<8x128xf32>
    %137 = math.exp %136 : vector<8x128xf32>
    %cst_44 = arith.constant 1.000000e+00 : f32
    %138 = vector.broadcast %cst_44 : f32 to vector<8x128xf32>
    %139 = arith.addf %138, %137 : vector<8x128xf32>
    %140 = arith.divf %138, %139 : vector<8x128xf32>
    %141 = arith.addf %130, %133 : vector<8x128xf32>
    %142 = arith.negf %141 : vector<8x128xf32>
    %143 = math.exp %142 : vector<8x128xf32>
    %cst_45 = arith.constant 1.000000e+00 : f32
    %144 = vector.broadcast %cst_45 : f32 to vector<8x128xf32>
    %145 = arith.addf %144, %143 : vector<8x128xf32>
    %146 = arith.divf %144, %145 : vector<8x128xf32>
    %147 = arith.mulf %140, %134 : vector<8x128xf32>
    %148 = arith.addf %131, %147 : vector<8x128xf32>
    %149 = math.tanh %148 : vector<8x128xf32>
    %150 = arith.mulf %146, %118 : vector<8x128xf32>
    %cst_46 = arith.constant 1.000000e+00 : f32
    %151 = vector.broadcast %cst_46 : f32 to vector<8x128xf32>
    %152 = arith.subf %151, %146 : vector<8x128xf32>
    %153 = arith.mulf %152, %149 : vector<8x128xf32>
    %154 = arith.addf %150, %153 : vector<8x128xf32>
    %155 = arith.index_cast %c3_i32 : i32 to index
    %c0_47 = arith.constant 0 : index
    %c0_48 = arith.constant 0 : index
    %156 = vector.load %arg7[%155, %c0_47, %c0_48] : memref<8x8x128xf32, #tpu.memory_space<vmem>>, vector<1x8x128xf32>
    %157 = vector.shape_cast %156 : vector<1x8x128xf32> to vector<8x128xf32>
    %158 = vector.shape_cast %154 : vector<8x128xf32> to vector<1x8x128xf32>
    tpu.vector_store %arg7[%155, %c0_47, %c0_48], %158 {strides = array<i32>} : memref<8x8x128xf32, #tpu.memory_space<vmem>>, vector<1x8x128xf32>,
    %c4_i32 = arith.constant 4 : i32
    %cst_49 = arith.constant dense<0.000000e+00> : vector<8x384xf32>
    %159 = tpu.matmul %154, %12, %cst_49 {dimension_numbers = #tpu.dot_dimension_numbers<[1], [0], [0], [1], [0, 0, 1, 1], [], []>} : vector<8x128xf32>, vector<128x384xf32>, vector<8x384xf32> -> vector<8x384xf32>
    %160 = vector.broadcast %13 : vector<1x384xf32> to vector<8x384xf32>
    %161 = arith.addf %159, %160 : vector<8x384xf32>
    %162 = arith.index_cast %c4_i32 : i32 to index
    %c0_50 = arith.constant 0 : index
    %c0_51 = arith.constant 0 : index
    %163 = vector.load %arg9[%162, %c0_50, %c0_51] : memref<8x8x384xf32, #tpu.memory_space<vmem>>, vector<1x8x384xf32>
    %164 = vector.shape_cast %163 : vector<1x8x384xf32> to vector<8x384xf32>
    %165 = vector.extract_strided_slice %164 {offsets = [0, 0], sizes = [8, 128], strides = [1, 1]} : vector<8x384xf32> to vector<8x128xf32>
    %166 = vector.extract_strided_slice %164 {offsets = [0, 128], sizes = [8, 128], strides = [1, 1]} : vector<8x384xf32> to vector<8x128xf32>
    %167 = vector.extract_strided_slice %164 {offsets = [0, 256], sizes = [8, 128], strides = [1, 1]} : vector<8x384xf32> to vector<8x128xf32>
    %168 = vector.extract_strided_slice %161 {offsets = [0, 0], sizes = [8, 128], strides = [1, 1]} : vector<8x384xf32> to vector<8x128xf32>
    %169 = vector.extract_strided_slice %161 {offsets = [0, 128], sizes = [8, 128], strides = [1, 1]} : vector<8x384xf32> to vector<8x128xf32>
    %170 = vector.extract_strided_slice %161 {offsets = [0, 256], sizes = [8, 128], strides = [1, 1]} : vector<8x384xf32> to vector<8x128xf32>
    %171 = arith.addf %165, %168 : vector<8x128xf32>
    %172 = arith.negf %171 : vector<8x128xf32>
    %173 = math.exp %172 : vector<8x128xf32>
    %cst_52 = arith.constant 1.000000e+00 : f32
    %174 = vector.broadcast %cst_52 : f32 to vector<8x128xf32>
    %175 = arith.addf %174, %173 : vector<8x128xf32>
    %176 = arith.divf %174, %175 : vector<8x128xf32>
    %177 = arith.addf %166, %169 : vector<8x128xf32>
    %178 = arith.negf %177 : vector<8x128xf32>
    %179 = math.exp %178 : vector<8x128xf32>
    %cst_53 = arith.constant 1.000000e+00 : f32
    %180 = vector.broadcast %cst_53 : f32 to vector<8x128xf32>
    %181 = arith.addf %180, %179 : vector<8x128xf32>
    %182 = arith.divf %180, %181 : vector<8x128xf32>
    %183 = arith.mulf %176, %170 : vector<8x128xf32>
    %184 = arith.addf %167, %183 : vector<8x128xf32>
    %185 = math.tanh %184 : vector<8x128xf32>
    %186 = arith.mulf %182, %154 : vector<8x128xf32>
    %cst_54 = arith.constant 1.000000e+00 : f32
    %187 = vector.broadcast %cst_54 : f32 to vector<8x128xf32>
    %188 = arith.subf %187, %182 : vector<8x128xf32>
    %189 = arith.mulf %188, %185 : vector<8x128xf32>
    %190 = arith.addf %186, %189 : vector<8x128xf32>
    %191 = arith.index_cast %c4_i32 : i32 to index
    %c0_55 = arith.constant 0 : index
    %c0_56 = arith.constant 0 : index
    %192 = vector.load %arg7[%191, %c0_55, %c0_56] : memref<8x8x128xf32, #tpu.memory_space<vmem>>, vector<1x8x128xf32>
    %193 = vector.shape_cast %192 : vector<1x8x128xf32> to vector<8x128xf32>
    %194 = vector.shape_cast %190 : vector<8x128xf32> to vector<1x8x128xf32>
    tpu.vector_store %arg7[%191, %c0_55, %c0_56], %194 {strides = array<i32>} : memref<8x8x128xf32, #tpu.memory_space<vmem>>, vector<1x8x128xf32>,
    %c5_i32 = arith.constant 5 : i32
    %cst_57 = arith.constant dense<0.000000e+00> : vector<8x384xf32>
    %195 = tpu.matmul %190, %12, %cst_57 {dimension_numbers = #tpu.dot_dimension_numbers<[1], [0], [0], [1], [0, 0, 1, 1], [], []>} : vector<8x128xf32>, vector<128x384xf32>, vector<8x384xf32> -> vector<8x384xf32>
    %196 = vector.broadcast %13 : vector<1x384xf32> to vector<8x384xf32>
    %197 = arith.addf %195, %196 : vector<8x384xf32>
    %198 = arith.index_cast %c5_i32 : i32 to index
    %c0_58 = arith.constant 0 : index
    %c0_59 = arith.constant 0 : index
    %199 = vector.load %arg9[%198, %c0_58, %c0_59] : memref<8x8x384xf32, #tpu.memory_space<vmem>>, vector<1x8x384xf32>
    %200 = vector.shape_cast %199 : vector<1x8x384xf32> to vector<8x384xf32>
    %201 = vector.extract_strided_slice %200 {offsets = [0, 0], sizes = [8, 128], strides = [1, 1]} : vector<8x384xf32> to vector<8x128xf32>
    %202 = vector.extract_strided_slice %200 {offsets = [0, 128], sizes = [8, 128], strides = [1, 1]} : vector<8x384xf32> to vector<8x128xf32>
    %203 = vector.extract_strided_slice %200 {offsets = [0, 256], sizes = [8, 128], strides = [1, 1]} : vector<8x384xf32> to vector<8x128xf32>
    %204 = vector.extract_strided_slice %197 {offsets = [0, 0], sizes = [8, 128], strides = [1, 1]} : vector<8x384xf32> to vector<8x128xf32>
    %205 = vector.extract_strided_slice %197 {offsets = [0, 128], sizes = [8, 128], strides = [1, 1]} : vector<8x384xf32> to vector<8x128xf32>
    %206 = vector.extract_strided_slice %197 {offsets = [0, 256], sizes = [8, 128], strides = [1, 1]} : vector<8x384xf32> to vector<8x128xf32>
    %207 = arith.addf %201, %204 : vector<8x128xf32>
    %208 = arith.negf %207 : vector<8x128xf32>
    %209 = math.exp %208 : vector<8x128xf32>
    %cst_60 = arith.constant 1.000000e+00 : f32
    %210 = vector.broadcast %cst_60 : f32 to vector<8x128xf32>
    %211 = arith.addf %210, %209 : vector<8x128xf32>
    %212 = arith.divf %210, %211 : vector<8x128xf32>
    %213 = arith.addf %202, %205 : vector<8x128xf32>
    %214 = arith.negf %213 : vector<8x128xf32>
    %215 = math.exp %214 : vector<8x128xf32>
    %cst_61 = arith.constant 1.000000e+00 : f32
    %216 = vector.broadcast %cst_61 : f32 to vector<8x128xf32>
    %217 = arith.addf %216, %215 : vector<8x128xf32>
    %218 = arith.divf %216, %217 : vector<8x128xf32>
    %219 = arith.mulf %212, %206 : vector<8x128xf32>
    %220 = arith.addf %203, %219 : vector<8x128xf32>
    %221 = math.tanh %220 : vector<8x128xf32>
    %222 = arith.mulf %218, %190 : vector<8x128xf32>
    %cst_62 = arith.constant 1.000000e+00 : f32
    %223 = vector.broadcast %cst_62 : f32 to vector<8x128xf32>
    %224 = arith.subf %223, %218 : vector<8x128xf32>
    %225 = arith.mulf %224, %221 : vector<8x128xf32>
    %226 = arith.addf %222, %225 : vector<8x128xf32>
    %227 = arith.index_cast %c5_i32 : i32 to index
    %c0_63 = arith.constant 0 : index
    %c0_64 = arith.constant 0 : index
    %228 = vector.load %arg7[%227, %c0_63, %c0_64] : memref<8x8x128xf32, #tpu.memory_space<vmem>>, vector<1x8x128xf32>
    %229 = vector.shape_cast %228 : vector<1x8x128xf32> to vector<8x128xf32>
    %230 = vector.shape_cast %226 : vector<8x128xf32> to vector<1x8x128xf32>
    tpu.vector_store %arg7[%227, %c0_63, %c0_64], %230 {strides = array<i32>} : memref<8x8x128xf32, #tpu.memory_space<vmem>>, vector<1x8x128xf32>,
    %c6_i32 = arith.constant 6 : i32
    %cst_65 = arith.constant dense<0.000000e+00> : vector<8x384xf32>
    %231 = tpu.matmul %226, %12, %cst_65 {dimension_numbers = #tpu.dot_dimension_numbers<[1], [0], [0], [1], [0, 0, 1, 1], [], []>} : vector<8x128xf32>, vector<128x384xf32>, vector<8x384xf32> -> vector<8x384xf32>
    %232 = vector.broadcast %13 : vector<1x384xf32> to vector<8x384xf32>
    %233 = arith.addf %231, %232 : vector<8x384xf32>
    %234 = arith.index_cast %c6_i32 : i32 to index
    %c0_66 = arith.constant 0 : index
    %c0_67 = arith.constant 0 : index
    %235 = vector.load %arg9[%234, %c0_66, %c0_67] : memref<8x8x384xf32, #tpu.memory_space<vmem>>, vector<1x8x384xf32>
    %236 = vector.shape_cast %235 : vector<1x8x384xf32> to vector<8x384xf32>
    %237 = vector.extract_strided_slice %236 {offsets = [0, 0], sizes = [8, 128], strides = [1, 1]} : vector<8x384xf32> to vector<8x128xf32>
    %238 = vector.extract_strided_slice %236 {offsets = [0, 128], sizes = [8, 128], strides = [1, 1]} : vector<8x384xf32> to vector<8x128xf32>
    %239 = vector.extract_strided_slice %236 {offsets = [0, 256], sizes = [8, 128], strides = [1, 1]} : vector<8x384xf32> to vector<8x128xf32>
    %240 = vector.extract_strided_slice %233 {offsets = [0, 0], sizes = [8, 128], strides = [1, 1]} : vector<8x384xf32> to vector<8x128xf32>
    %241 = vector.extract_strided_slice %233 {offsets = [0, 128], sizes = [8, 128], strides = [1, 1]} : vector<8x384xf32> to vector<8x128xf32>
    %242 = vector.extract_strided_slice %233 {offsets = [0, 256], sizes = [8, 128], strides = [1, 1]} : vector<8x384xf32> to vector<8x128xf32>
    %243 = arith.addf %237, %240 : vector<8x128xf32>
    %244 = arith.negf %243 : vector<8x128xf32>
    %245 = math.exp %244 : vector<8x128xf32>
    %cst_68 = arith.constant 1.000000e+00 : f32
    %246 = vector.broadcast %cst_68 : f32 to vector<8x128xf32>
    %247 = arith.addf %246, %245 : vector<8x128xf32>
    %248 = arith.divf %246, %247 : vector<8x128xf32>
    %249 = arith.addf %238, %241 : vector<8x128xf32>
    %250 = arith.negf %249 : vector<8x128xf32>
    %251 = math.exp %250 : vector<8x128xf32>
    %cst_69 = arith.constant 1.000000e+00 : f32
    %252 = vector.broadcast %cst_69 : f32 to vector<8x128xf32>
    %253 = arith.addf %252, %251 : vector<8x128xf32>
    %254 = arith.divf %252, %253 : vector<8x128xf32>
    %255 = arith.mulf %248, %242 : vector<8x128xf32>
    %256 = arith.addf %239, %255 : vector<8x128xf32>
    %257 = math.tanh %256 : vector<8x128xf32>
    %258 = arith.mulf %254, %226 : vector<8x128xf32>
    %cst_70 = arith.constant 1.000000e+00 : f32
    %259 = vector.broadcast %cst_70 : f32 to vector<8x128xf32>
    %260 = arith.subf %259, %254 : vector<8x128xf32>
    %261 = arith.mulf %260, %257 : vector<8x128xf32>
    %262 = arith.addf %258, %261 : vector<8x128xf32>
    %263 = arith.index_cast %c6_i32 : i32 to index
    %c0_71 = arith.constant 0 : index
    %c0_72 = arith.constant 0 : index
    %264 = vector.load %arg7[%263, %c0_71, %c0_72] : memref<8x8x128xf32, #tpu.memory_space<vmem>>, vector<1x8x128xf32>
    %265 = vector.shape_cast %264 : vector<1x8x128xf32> to vector<8x128xf32>
    %266 = vector.shape_cast %262 : vector<8x128xf32> to vector<1x8x128xf32>
    tpu.vector_store %arg7[%263, %c0_71, %c0_72], %266 {strides = array<i32>} : memref<8x8x128xf32, #tpu.memory_space<vmem>>, vector<1x8x128xf32>,
    %c7_i32 = arith.constant 7 : i32
    %cst_73 = arith.constant dense<0.000000e+00> : vector<8x384xf32>
    %267 = tpu.matmul %262, %12, %cst_73 {dimension_numbers = #tpu.dot_dimension_numbers<[1], [0], [0], [1], [0, 0, 1, 1], [], []>} : vector<8x128xf32>, vector<128x384xf32>, vector<8x384xf32> -> vector<8x384xf32>
    %268 = vector.broadcast %13 : vector<1x384xf32> to vector<8x384xf32>
    %269 = arith.addf %267, %268 : vector<8x384xf32>
    %270 = arith.index_cast %c7_i32 : i32 to index
    %c0_74 = arith.constant 0 : index
    %c0_75 = arith.constant 0 : index
    %271 = vector.load %arg9[%270, %c0_74, %c0_75] : memref<8x8x384xf32, #tpu.memory_space<vmem>>, vector<1x8x384xf32>
    %272 = vector.shape_cast %271 : vector<1x8x384xf32> to vector<8x384xf32>
    %273 = vector.extract_strided_slice %272 {offsets = [0, 0], sizes = [8, 128], strides = [1, 1]} : vector<8x384xf32> to vector<8x128xf32>
    %274 = vector.extract_strided_slice %272 {offsets = [0, 128], sizes = [8, 128], strides = [1, 1]} : vector<8x384xf32> to vector<8x128xf32>
    %275 = vector.extract_strided_slice %272 {offsets = [0, 256], sizes = [8, 128], strides = [1, 1]} : vector<8x384xf32> to vector<8x128xf32>
    %276 = vector.extract_strided_slice %269 {offsets = [0, 0], sizes = [8, 128], strides = [1, 1]} : vector<8x384xf32> to vector<8x128xf32>
    %277 = vector.extract_strided_slice %269 {offsets = [0, 128], sizes = [8, 128], strides = [1, 1]} : vector<8x384xf32> to vector<8x128xf32>
    %278 = vector.extract_strided_slice %269 {offsets = [0, 256], sizes = [8, 128], strides = [1, 1]} : vector<8x384xf32> to vector<8x128xf32>
    %279 = arith.addf %273, %276 : vector<8x128xf32>
    %280 = arith.negf %279 : vector<8x128xf32>
    %281 = math.exp %280 : vector<8x128xf32>
    %cst_76 = arith.constant 1.000000e+00 : f32
    %282 = vector.broadcast %cst_76 : f32 to vector<8x128xf32>
    %283 = arith.addf %282, %281 : vector<8x128xf32>
    %284 = arith.divf %282, %283 : vector<8x128xf32>
    %285 = arith.addf %274, %277 : vector<8x128xf32>
    %286 = arith.negf %285 : vector<8x128xf32>
    %287 = math.exp %286 : vector<8x128xf32>
    %cst_77 = arith.constant 1.000000e+00 : f32
    %288 = vector.broadcast %cst_77 : f32 to vector<8x128xf32>
    %289 = arith.addf %288, %287 : vector<8x128xf32>
    %290 = arith.divf %288, %289 : vector<8x128xf32>
    %291 = arith.mulf %284, %278 : vector<8x128xf32>
    %292 = arith.addf %275, %291 : vector<8x128xf32>
    %293 = math.tanh %292 : vector<8x128xf32>
    %294 = arith.mulf %290, %262 : vector<8x128xf32>
    %cst_78 = arith.constant 1.000000e+00 : f32
    %295 = vector.broadcast %cst_78 : f32 to vector<8x128xf32>
    %296 = arith.subf %295, %290 : vector<8x128xf32>
    %297 = arith.mulf %296, %293 : vector<8x128xf32>
    %298 = arith.addf %294, %297 : vector<8x128xf32>
    %299 = arith.index_cast %c7_i32 : i32 to index
    %c0_79 = arith.constant 0 : index
    %c0_80 = arith.constant 0 : index
    %300 = vector.load %arg7[%299, %c0_79, %c0_80] : memref<8x8x128xf32, #tpu.memory_space<vmem>>, vector<1x8x128xf32>
    %301 = vector.shape_cast %300 : vector<1x8x128xf32> to vector<8x128xf32>
    %302 = vector.shape_cast %298 : vector<8x128xf32> to vector<1x8x128xf32>
    tpu.vector_store %arg7[%299, %c0_79, %c0_80], %302 {strides = array<i32>} : memref<8x8x128xf32, #tpu.memory_space<vmem>>, vector<1x8x128xf32>,
    %c8_i32 = arith.constant 8 : i32
    %c0_81 = arith.constant 0 : index
    %c0_82 = arith.constant 0 : index
    %303 = vector.load %arg8[%c0_81, %c0_82] : memref<8x128xf32, #tpu.memory_space<vmem>>, vector<8x128xf32>
    tpu.vector_store %arg8[%c0_81, %c0_82], %298 {strides = array<i32>} : memref<8x128xf32, #tpu.memory_space<vmem>>, vector<8x128xf32>,
    return
  }
  func.func @transform_0(%arg0: i32) -> (i32, i32, i32) {
    %c0_i32 = arith.constant 0 : i32
    %c0_i32_0 = arith.constant 0 : i32
    %c0_i32_1 = arith.constant 0 : i32
    return %arg0, %c0_i32, %c0_i32_0 : i32, i32, i32
  }
  func.func @transform_1(%arg0: i32) -> (i32, i32) {
    %c0_i32 = arith.constant 0 : i32
    %c0_i32_0 = arith.constant 0 : i32
    %c0_i32_1 = arith.constant 0 : i32
    return %c0_i32, %c0_i32_0 : i32, i32
  }
  func.func @transform_2(%arg0: i32) -> (i32, i32) {
    %c0_i32 = arith.constant 0 : i32
    %c0_i32_0 = arith.constant 0 : i32
    %c0_i32_1 = arith.constant 0 : i32
    return %c0_i32, %c0_i32_0 : i32, i32
  }
  func.func @transform_3(%arg0: i32) -> (i32, i32) {
    %c0_i32 = arith.constant 0 : i32
    %c0_i32_0 = arith.constant 0 : i32
    %c0_i32_1 = arith.constant 0 : i32
    return %c0_i32, %c0_i32_0 : i32, i32
  }
  func.func @transform_4(%arg0: i32) -> (i32, i32) {
    %c0_i32 = arith.constant 0 : i32
    %c0_i32_0 = arith.constant 0 : i32
    %c0_i32_1 = arith.constant 0 : i32
    return %c0_i32, %c0_i32_0 : i32, i32
  }
  func.func @transform_5(%arg0: i32) -> (i32, i32) {
    %c0_i32 = arith.constant 0 : i32
    %c0_i32_0 = arith.constant 0 : i32
    %c0_i32_1 = arith.constant 0 : i32
    return %c0_i32, %c0_i32_0 : i32, i32
  }
  func.func @transform_6(%arg0: i32) -> (i32, i32, i32) {
    %c0_i32 = arith.constant 0 : i32
    %c0_i32_0 = arith.constant 0 : i32
    %c0_i32_1 = arith.constant 0 : i32
    return %arg0, %c0_i32, %c0_i32_0 : i32, i32, i32
  }
}

</mosaic_0001>

<llo_original>
// kernel: gru_forward.3
$region0: #{gru_forward.3}
  #allocation0 [shape = 'u32[]', space=smem, size = 0x4, offset = 0x4, fixed_abs, tag = 'smem constant byte address 0x4 - core index']
  #allocation1 [shape = 'u32[72,128]{1,0:T(1,128)}', space=vmem, size = 0x9000, scoped, tag = 'internal scratch']
  #allocation2 [shape = 'f32[8,128]{1,0:T(8,128)}', space=vmem, size = 0x1000, scoped, tag = 'scratch operand']
  #allocation3 [shape = 'f32[8,8,384]{2,1,0:T(8,128)}', space=vmem, size = 0x18000, scoped, tag = 'scratch operand']
  %s0 = inlined_call_operand.vmem [shape: f32[8,8,128], index: 0, kind: input, shape index: {}]
  %s1 = inlined_call_operand.vmem [shape: f32[8,128], index: 1, kind: input, shape index: {}]
  %s2 = inlined_call_operand.hbm [shape: f32[128,384], index: 2, kind: input, shape index: {}]
  %s3 = inlined_call_operand.vmem [shape: f32[1,384], index: 3, kind: input, shape index: {}]
  %s4 = inlined_call_operand.hbm [shape: f32[128,384], index: 4, kind: input, shape index: {}]
  %s5 = inlined_call_operand.vmem [shape: f32[1,384], index: 5, kind: input, shape index: {}]
  %s6 = inlined_call_operand.vmem [shape: f32[8,8,128], index: 6, kind: output, shape index: {}]
  %s7 = sld [smem:[#allocation0]]
  $region46: #{gru_forward.3} parent=0
    _
  %s9 = ssub.s32 1, %s7
  %s10 = scalar_select 0, %s9, %s7
  $region1: #{gru_forward.3} parent=0
    #allocation4 [shape = 'u8[196608]{0}', space=vmem, size = 0x30000, scoped, tag = 'input window, operand 2, single buffered']
    #allocation5 [shape = 's32[1]{0}', space=sflag, size = 0x4, scoped, tag = 'scoped memory for gru_forward.3']
    #allocation6 [shape = 'u8[196608]{0}', space=vmem, size = 0x30000, scoped, tag = 'input window, operand 4, single buffered']
    #allocation7 [shape = 's32[1]{0}', space=sflag, size = 0x4, scoped, tag = 'scoped memory for gru_forward.3']
    %11 = vsyncpa [#allocation5], 0
    %12 = vsyncpa [#allocation7], 0
    // Predicated region
    $region2: #{gru_forward.3} parent=1 // pred_check
      _
    $region3: #{gru_forward.3} parent=1 // pred_check_branch
      %14 = sbr.rel (0) target = $region5
    $region4: #{gru_forward.3} parent=1 // pred_region
      _
    $region5: #{gru_forward.3} parent=1 // pred_fallthru
      _
    // Predicated region
    $region6: #{gru_forward.3} parent=1 // pred_check
      _
    $region7: #{gru_forward.3} parent=1 // pred_check_branch
      %16 = sbr.rel (0) target = $region9
    $region8: #{gru_forward.3} parent=1 // pred_region
      _
    $region9: #{gru_forward.3} parent=1 // pred_fallthru
      _
    // Predicated region
    $region10: #{gru_forward.3} parent=1 // pred_check
      _
    $region11: #{gru_forward.3} parent=1 // pred_check_branch
      %18 = sbr.rel (0) target = $region13
    $region12: #{gru_forward.3} parent=1 // pred_region
      %20 = vsyncadd [#allocation5], 0
      %s21 = sshll.u32 %s2, 4
      %s22 = int_to_ptr.hbm [resolvable:$true] %s21
      %s23 = sshll.u32 [#allocation4], 4
      %s24 = int_to_ptr.vmem [resolvable:$true] %s23
      %29 = dma.hbm_to_vmem [thread:$0]  %s22, 6144, %s24, [#allocation5], 384, 384, 24
    $region13: #{gru_forward.3} parent=1 // pred_fallthru
      _
    // Predicated region
    $region14: #{gru_forward.3} parent=1 // pred_check
      _
    $region15: #{gru_forward.3} parent=1 // pred_check_branch
      %31 = sbr.rel (0) target = $region17
    $region16: #{gru_forward.3} parent=1 // pred_region
      _
    $region17: #{gru_forward.3} parent=1 // pred_fallthru
      _
    // Predicated region
    $region18: #{gru_forward.3} parent=1 // pred_check
      _
    $region19: #{gru_forward.3} parent=1 // pred_check_branch
      %33 = sbr.rel (0) target = $region21
    $region20: #{gru_forward.3} parent=1 // pred_region
      %35 = vsyncadd [#allocation7], 0
      %s36 = sshll.u32 %s4, 4
      %s37 = int_to_ptr.hbm [resolvable:$true] %s36
      %s38 = sshll.u32 [#allocation6], 4
      %s39 = int_to_ptr.vmem [resolvable:$true] %s38
      %44 = dma.hbm_to_vmem [thread:$0]  %s37, 6144, %s39, [#allocation7], 384, 384, 24
    $region21: #{gru_forward.3} parent=1 // pred_fallthru
      _
    // Predicated region
    $region22: #{gru_forward.3} parent=1 // pred_check
      _
    $region23: #{gru_forward.3} parent=1 // pred_check_branch
      %46 = sbr.rel (0) target = $region25
    $region24: #{gru_forward.3} parent=1 // pred_region
      _
    $region25: #{gru_forward.3} parent=1 // pred_fallthru
      _
    // Predicated region
    $region26: #{gru_forward.3} parent=1 // pred_check
      _
    $region27: #{gru_forward.3} parent=1 // pred_check_branch
      %48 = sbr.rel (0) target = $region29
    $region28: #{gru_forward.3} parent=1 // pred_region
      %50 = dma.done [#allocation5], 6144
    $region29: #{gru_forward.3} parent=1 // pred_fallthru
      _
    // Predicated region
    $region30: #{gru_forward.3} parent=1 // pred_check
      _
    $region31: #{gru_forward.3} parent=1 // pred_check_branch
      %52 = sbr.rel (0) target = $region33
    $region32: #{gru_forward.3} parent=1 // pred_region
      %54 = dma.done [#allocation7], 6144
    $region33: #{gru_forward.3} parent=1 // pred_fallthru
      _
    %p55 = scmp.eq.s32.totalorder 0, 0
    // Predicated region
    $region34: #{gru_forward.3} parent=1 // pred_check
      %p56 = pneg %p55
    $region35: #{gru_forward.3} parent=1 // pred_check_branch
      %58 = sbr.rel (%p56) target = $region37
    $region36: #{gru_forward.3} parent=1 // pred_region
      %v59 = vld [vmem:[%s1] sm:$0xff]
      %60 = vst [vmem:[#allocation2] sm:$0xff] %v59
    $region37: #{gru_forward.3} parent=1 // pred_fallthru
      _
    %v61 = vld [vmem:[%s0] sm:$0xff]
    %v62 = vld [vmem:[%s0 + $0x8] sm:$0xff]
    %v63 = vld [vmem:[%s0 + $0x10] sm:$0xff]
    %v64 = vld [vmem:[%s0 + $0x18] sm:$0xff]
    %v65 = vld [vmem:[%s0 + $0x20] sm:$0xff]
    %v66 = vld [vmem:[%s0 + $0x28] sm:$0xff]
    %v67 = vld [vmem:[%s0 + $0x30] sm:$0xff]
    %v68 = vld [vmem:[%s0 + $0x38] sm:$0xff]
    %v69 = vld [vmem:[#allocation4] sm:$0xff]
    %v70 = vld [vmem:[#allocation4 + $0x8] sm:$0xff]
    %v71 = vld [vmem:[#allocation4 + $0x10] sm:$0xff]
    %v72 = vld [vmem:[#allocation4 + $0x18] sm:$0xff]
    %v73 = vld [vmem:[#allocation4 + $0x20] sm:$0xff]
    %v74 = vld [vmem:[#allocation4 + $0x28] sm:$0xff]
    %v75 = vld [vmem:[#allocation4 + $0x30] sm:$0xff]
    %v76 = vld [vmem:[#allocation4 + $0x38] sm:$0xff]
    %v77 = vld [vmem:[#allocation4 + $0x40] sm:$0xff]
    %v78 = vld [vmem:[#allocation4 + $0x48] sm:$0xff]
    %v79 = vld [vmem:[#allocation4 + $0x50] sm:$0xff]
    %v80 = vld [vmem:[#allocation4 + $0x58] sm:$0xff]
    %v81 = vld [vmem:[#allocation4 + $0x60] sm:$0xff]
    %v82 = vld [vmem:[#allocation4 + $0x68] sm:$0xff]
    %v83 = vld [vmem:[#allocation4 + $0x70] sm:$0xff]
    %v84 = vld [vmem:[#allocation4 + $0x78] sm:$0xff]
    %v85 = vld [vmem:[#allocation4 + $0x80] sm:$0xff]
    %v86 = vld [vmem:[#allocation4 + $0x88] sm:$0xff]
    %v87 = vld [vmem:[#allocation4 + $0x90] sm:$0xff]
    %v88 = vld [vmem:[#allocation4 + $0x98] sm:$0xff]
    %v89 = vld [vmem:[#allocation4 + $0xa0] sm:$0xff]
    %v90 = vld [vmem:[#allocation4 + $0xa8] sm:$0xff]
    %v91 = vld [vmem:[#allocation4 + $0xb0] sm:$0xff]
    %v92 = vld [vmem:[#allocation4 + $0xb8] sm:$0xff]
    %v93 = vld [vmem:[#allocation4 + $0xc0] sm:$0xff]
    %v94 = vld [vmem:[#allocation4 + $0xc8] sm:$0xff]
    %v95 = vld [vmem:[#allocation4 + $0xd0] sm:$0xff]
    %v96 = vld [vmem:[#allocation4 + $0xd8] sm:$0xff]
    %v97 = vld [vmem:[#allocation4 + $0xe0] sm:$0xff]
    %v98 = vld [vmem:[#allocation4 + $0xe8] sm:$0xff]
    %v99 = vld [vmem:[#allocation4 + $0xf0] sm:$0xff]
    %v100 = vld [vmem:[#allocation4 + $0xf8] sm:$0xff]
    %v101 = vld [vmem:[#allocation4 + $0x100] sm:$0xff]
    %v102 = vld [vmem:[#allocation4 + $0x108] sm:$0xff]
    %v103 = vld [vmem:[#allocation4 + $0x110] sm:$0xff]
    %v104 = vld [vmem:[#allocation4 + $0x118] sm:$0xff]
    %v105 = vld [vmem:[#allocation4 + $0x120] sm:$0xff]
    %v106 = vld [vmem:[#allocation4 + $0x128] sm:$0xff]
    %v107 = vld [vmem:[#allocation4 + $0x130] sm:$0xff]
    %v108 = vld [vmem:[#allocation4 + $0x138] sm:$0xff]
    %v109 = vld [vmem:[#allocation4 + $0x140] sm:$0xff]
    %v110 = vld [vmem:[#allocation4 + $0x148] sm:$0xff]
    %v111 = vld [vmem:[#allocation4 + $0x150] sm:$0xff]
    %v112 = vld [vmem:[#allocation4 + $0x158] sm:$0xff]
    %v113 = vld [vmem:[#allocation4 + $0x160] sm:$0xff]
    %v114 = vld [vmem:[#allocation4 + $0x168] sm:$0xff]
    %v115 = vld [vmem:[#allocation4 + $0x170] sm:$0xff]
    %v116 = vld [vmem:[#allocation4 + $0x178] sm:$0xff]
    %v117 = vld [vmem:[%s3] sm:$0x7]
    %v119 = vperm.slane %v117, 0
    %v120 = vperm.slane %v117, 1
    %v121 = vperm.slane %v117, 2
    %125 = vmatpush.msra.mxu0 %v114
    %126 = vmatpush.msra.mxu0 %v111
    %127 = vmatpush.msra.mxu0 %v108
    %128 = vmatpush.msra.mxu0 %v105
    %129 = vmatpush.msra.mxu0 %v102
    %130 = vmatpush.msra.mxu0 %v99
    %131 = vmatpush.msra.mxu0 %v96
    %132 = vmatpush.msra.mxu0 %v93
    %133 = vmatpush.msra.mxu0 %v90
    %134 = vmatpush.msra.mxu0 %v87
    %135 = vmatpush.msra.mxu0 %v84
    %136 = vmatpush.msra.mxu0 %v81
    %137 = vmatpush.msra.mxu0 %v78
    %138 = vmatpush.msra.mxu0 %v75
    %139 = vmatpush.msra.mxu0 %v72
    %140 = vmatpush.msra.mxu0 %v69
    %141 = vmatmul.f32.gmra.mxu0 %v61
    %v142 = vpop.f32.mrf.mxu0
    %v143 = vadd.f32 %v119, %v142
    %144 = vmatmul.f32.gmra.mxu0 %v62
    %v145 = vpop.f32.mrf.mxu0
    %v146 = vadd.f32 %v119, %v145
    %147 = vmatmul.f32.gmra.mxu0 %v63
    %v148 = vpop.f32.mrf.mxu0
    %v149 = vadd.f32 %v119, %v148
    %150 = vmatmul.f32.gmra.mxu0 %v64
    %v151 = vpop.f32.mrf.mxu0
    %v152 = vadd.f32 %v119, %v151
    %153 = vmatmul.f32.gmra.mxu0 %v65
    %v154 = vpop.f32.mrf.mxu0
    %v155 = vadd.f32 %v119, %v154
    %156 = vmatmul.f32.gmra.mxu0 %v66
    %v157 = vpop.f32.mrf.mxu0
    %v158 = vadd.f32 %v119, %v157
    %159 = vmatmul.f32.gmra.mxu0 %v67
    %v160 = vpop.f32.mrf.mxu0
    %v161 = vadd.f32 %v119, %v160
    %162 = vmatmul.f32.gmra.mxu0 %v68
    %v163 = vpop.f32.mrf.mxu0
    %v164 = vadd.f32 %v119, %v163
    %165 = vdwg.mxu0
    %166 = vmatpush.msra.mxu0 %v115
    %167 = vmatpush.msra.mxu0 %v112
    %168 = vmatpush.msra.mxu0 %v109
    %169 = vmatpush.msra.mxu0 %v106
    %170 = vmatpush.msra.mxu0 %v103
    %171 = vmatpush.msra.mxu0 %v100
    %172 = vmatpush.msra.mxu0 %v97
    %173 = vmatpush.msra.mxu0 %v94
    %174 = vmatpush.msra.mxu0 %v91
    %175 = vmatpush.msra.mxu0 %v88
    %176 = vmatpush.msra.mxu0 %v85
    %177 = vmatpush.msra.mxu0 %v82
    %178 = vmatpush.msra.mxu0 %v79
    %179 = vmatpush.msra.mxu0 %v76
    %180 = vmatpush.msra.mxu0 %v73
    %181 = vmatpush.msra.mxu0 %v70
    %182 = vmatmul.f32.gmra.mxu0 %v61
    %v183 = vpop.f32.mrf.mxu0
    %v184 = vadd.f32 %v120, %v183
    %185 = vmatmul.f32.gmra.mxu0 %v62
    %v186 = vpop.f32.mrf.mxu0
    %v187 = vadd.f32 %v120, %v186
    %188 = vmatmul.f32.gmra.mxu0 %v63
    %v189 = vpop.f32.mrf.mxu0
    %v190 = vadd.f32 %v120, %v189
    %191 = vmatmul.f32.gmra.mxu0 %v64
    %v192 = vpop.f32.mrf.mxu0
    %v193 = vadd.f32 %v120, %v192
    %194 = vmatmul.f32.gmra.mxu0 %v65
    %v195 = vpop.f32.mrf.mxu0
    %v196 = vadd.f32 %v120, %v195
    %197 = vmatmul.f32.gmra.mxu0 %v66
    %v198 = vpop.f32.mrf.mxu0
    %v199 = vadd.f32 %v120, %v198
    %200 = vmatmul.f32.gmra.mxu0 %v67
    %v201 = vpop.f32.mrf.mxu0
    %v202 = vadd.f32 %v120, %v201
    %203 = vmatmul.f32.gmra.mxu0 %v68
    %v204 = vpop.f32.mrf.mxu0
    %v205 = vadd.f32 %v120, %v204
    %206 = vdwg.mxu0
    %207 = vmatpush.msra.mxu0 %v116
    %208 = vmatpush.msra.mxu0 %v113
    %209 = vmatpush.msra.mxu0 %v110
    %210 = vmatpush.msra.mxu0 %v107
    %211 = vmatpush.msra.mxu0 %v104
    %212 = vmatpush.msra.mxu0 %v101
    %213 = vmatpush.msra.mxu0 %v98
    %214 = vmatpush.msra.mxu0 %v95
    %215 = vmatpush.msra.mxu0 %v92
    %216 = vmatpush.msra.mxu0 %v89
    %217 = vmatpush.msra.mxu0 %v86
    %218 = vmatpush.msra.mxu0 %v83
    %219 = vmatpush.msra.mxu0 %v80
    %220 = vmatpush.msra.mxu0 %v77
    %221 = vmatpush.msra.mxu0 %v74
    %222 = vmatpush.msra.mxu0 %v71
    %223 = vmatmul.f32.gmra.mxu0 %v61
    %v224 = vpop.f32.mrf.mxu0
    %v225 = vadd.f32 %v121, %v224
    %226 = vmatmul.f32.gmra.mxu0 %v62
    %v227 = vpop.f32.mrf.mxu0
    %v228 = vadd.f32 %v121, %v227
    %229 = vmatmul.f32.gmra.mxu0 %v63
    %v230 = vpop.f32.mrf.mxu0
    %v231 = vadd.f32 %v121, %v230
    %232 = vmatmul.f32.gmra.mxu0 %v64
    %v233 = vpop.f32.mrf.mxu0
    %v234 = vadd.f32 %v121, %v233
    %235 = vmatmul.f32.gmra.mxu0 %v65
    %v236 = vpop.f32.mrf.mxu0
    %v237 = vadd.f32 %v121, %v236
    %238 = vmatmul.f32.gmra.mxu0 %v66
    %v239 = vpop.f32.mrf.mxu0
    %v240 = vadd.f32 %v121, %v239
    %241 = vmatmul.f32.gmra.mxu0 %v67
    %v242 = vpop.f32.mrf.mxu0
    %v243 = vadd.f32 %v121, %v242
    %244 = vmatmul.f32.gmra.mxu0 %v68
    %v245 = vpop.f32.mrf.mxu0
    %v246 = vadd.f32 %v121, %v245
    %247 = vdwg.mxu0
    %248 = vst [vmem:[#allocation3] sm:$0xff] %v143
    %249 = vst [vmem:[#allocation3 + $0x8] sm:$0xff] %v184
    %250 = vst [vmem:[#allocation3 + $0x10] sm:$0xff] %v225
    %251 = vst [vmem:[#allocation3 + $0x18] sm:$0xff] %v146
    %252 = vst [vmem:[#allocation3 + $0x20] sm:$0xff] %v187
    %253 = vst [vmem:[#allocation3 + $0x28] sm:$0xff] %v228
    %254 = vst [vmem:[#allocation3 + $0x30] sm:$0xff] %v149
    %255 = vst [vmem:[#allocation3 + $0x38] sm:$0xff] %v190
    %256 = vst [vmem:[#allocation3 + $0x40] sm:$0xff] %v231
    %257 = vst [vmem:[#allocation3 + $0x48] sm:$0xff] %v152
    %258 = vst [vmem:[#allocation3 + $0x50] sm:$0xff] %v193
    %259 = vst [vmem:[#allocation3 + $0x58] sm:$0xff] %v234
    %260 = vst [vmem:[#allocation3 + $0x60] sm:$0xff] %v155
    %261 = vst [vmem:[#allocation3 + $0x68] sm:$0xff] %v196
    %262 = vst [vmem:[#allocation3 + $0x70] sm:$0xff] %v237
    %263 = vst [vmem:[#allocation3 + $0x78] sm:$0xff] %v158
    %264 = vst [vmem:[#allocation3 + $0x80] sm:$0xff] %v199
    %265 = vst [vmem:[#allocation3 + $0x88] sm:$0xff] %v240
    %266 = vst [vmem:[#allocation3 + $0x90] sm:$0xff] %v161
    %267 = vst [vmem:[#allocation3 + $0x98] sm:$0xff] %v202
    %268 = vst [vmem:[#allocation3 + $0xa0] sm:$0xff] %v243
    %269 = vst [vmem:[#allocation3 + $0xa8] sm:$0xff] %v164
    %270 = vst [vmem:[#allocation3 + $0xb0] sm:$0xff] %v205
    %271 = vst [vmem:[#allocation3 + $0xb8] sm:$0xff] %v246
    %v272 = vld [vmem:[#allocation6] sm:$0xff]
    %v273 = vld [vmem:[#allocation6 + $0x8] sm:$0xff]
    %v274 = vld [vmem:[#allocation6 + $0x10] sm:$0xff]
    %v275 = vld [vmem:[#allocation6 + $0x18] sm:$0xff]
    %v276 = vld [vmem:[#allocation6 + $0x20] sm:$0xff]
    %v277 = vld [vmem:[#allocation6 + $0x28] sm:$0xff]
    %v278 = vld [vmem:[#allocation6 + $0x30] sm:$0xff]
    %v279 = vld [vmem:[#allocation6 + $0x38] sm:$0xff]
    %v280 = vld [vmem:[#allocation6 + $0x40] sm:$0xff]
    %v281 = vld [vmem:[#allocation6 + $0x48] sm:$0xff]
    %v282 = vld [vmem:[#allocation6 + $0x50] sm:$0xff]
    %v283 = vld [vmem:[#allocation6 + $0x58] sm:$0xff]
    %v284 = vld [vmem:[#allocation6 + $0x60] sm:$0xff]
    %v285 = vld [vmem:[#allocation6 + $0x68] sm:$0xff]
    %v286 = vld [vmem:[#allocation6 + $0x70] sm:$0xff]
    %v287 = vld [vmem:[#allocation6 + $0x78] sm:$0xff]
    %v288 = vld [vmem:[#allocation6 + $0x80] sm:$0xff]
    %v289 = vld [vmem:[#allocation6 + $0x88] sm:$0xff]
    %v290 = vld [vmem:[#allocation6 + $0x90] sm:$0xff]
    %v291 = vld [vmem:[#allocation6 + $0x98] sm:$0xff]
    %v292 = vld [vmem:[#allocation6 + $0xa0] sm:$0xff]
    %v293 = vld [vmem:[#allocation6 + $0xa8] sm:$0xff]
    %v294 = vld [vmem:[#allocation6 + $0xb0] sm:$0xff]
    %v295 = vld [vmem:[#allocation6 + $0xb8] sm:$0xff]
    %v296 = vld [vmem:[#allocation6 + $0xc0] sm:$0xff]
    %v297 = vld [vmem:[#allocation6 + $0xc8] sm:$0xff]
    %v298 = vld [vmem:[#allocation6 + $0xd0] sm:$0xff]
    %v299 = vld [vmem:[#allocation6 + $0xd8] sm:$0xff]
    %v300 = vld [vmem:[#allocation6 + $0xe0] sm:$0xff]
    %v301 = vld [vmem:[#allocation6 + $0xe8] sm:$0xff]
    %v302 = vld [vmem:[#allocation6 + $0xf0] sm:$0xff]
    %v303 = vld [vmem:[#allocation6 + $0xf8] sm:$0xff]
    %v304 = vld [vmem:[#allocation6 + $0x100] sm:$0xff]
    %v305 = vld [vmem:[#allocation6 + $0x108] sm:$0xff]
    %v306 = vld [vmem:[#allocation6 + $0x110] sm:$0xff]
    %v307 = vld [vmem:[#allocation6 + $0x118] sm:$0xff]
    %v308 = vld [vmem:[#allocation6 + $0x120] sm:$0xff]
    %v309 = vld [vmem:[#allocation6 + $0x128] sm:$0xff]
    %v310 = vld [vmem:[#allocation6 + $0x130] sm:$0xff]
    %v311 = vld [vmem:[#allocation6 + $0x138] sm:$0xff]
    %v312 = vld [vmem:[#allocation6 + $0x140] sm:$0xff]
    %v313 = vld [vmem:[#allocation6 + $0x148] sm:$0xff]
    %v314 = vld [vmem:[#allocation6 + $0x150] sm:$0xff]
    %v315 = vld [vmem:[#allocation6 + $0x158] sm:$0xff]
    %v316 = vld [vmem:[#allocation6 + $0x160] sm:$0xff]
    %v317 = vld [vmem:[#allocation6 + $0x168] sm:$0xff]
    %v318 = vld [vmem:[#allocation6 + $0x170] sm:$0xff]
    %v319 = vld [vmem:[#allocation6 + $0x178] sm:$0xff]
    %v320 = vld [vmem:[%s5] sm:$0x7]
    %v321 = vld [vmem:[#allocation2] sm:$0xff]
    %v323 = vperm.slane %v320, 0
    %v324 = vperm.slane %v320, 1
    %v325 = vperm.slane %v320, 2
    %329 = vmatpush.msra.mxu0 %v317
    %330 = vmatpush.msra.mxu0 %v314
    %331 = vmatpush.msra.mxu0 %v311
    %332 = vmatpush.msra.mxu0 %v308
    %333 = vmatpush.msra.mxu0 %v305
    %334 = vmatpush.msra.mxu0 %v302
    %335 = vmatpush.msra.mxu0 %v299
    %336 = vmatpush.msra.mxu0 %v296
    %337 = vmatpush.msra.mxu0 %v293
    %338 = vmatpush.msra.mxu0 %v290
    %339 = vmatpush.msra.mxu0 %v287
    %340 = vmatpush.msra.mxu0 %v284
    %341 = vmatpush.msra.mxu0 %v281
    %342 = vmatpush.msra.mxu0 %v278
    %343 = vmatpush.msra.mxu0 %v275
    %344 = vmatpush.msra.mxu0 %v272
    %345 = vmatmul.f32.gmra.mxu0 %v321
    %v346 = vpop.f32.mrf.mxu0
    %v347 = vadd.f32 %v323, %v346
    %348 = vdwg.mxu0
    %349 = vmatpush.msra.mxu0 %v318
    %350 = vmatpush.msra.mxu0 %v315
    %351 = vmatpush.msra.mxu0 %v312
    %352 = vmatpush.msra.mxu0 %v309
    %353 = vmatpush.msra.mxu0 %v306
    %354 = vmatpush.msra.mxu0 %v303
    %355 = vmatpush.msra.mxu0 %v300
    %356 = vmatpush.msra.mxu0 %v297
    %357 = vmatpush.msra.mxu0 %v294
    %358 = vmatpush.msra.mxu0 %v291
    %359 = vmatpush.msra.mxu0 %v288
    %360 = vmatpush.msra.mxu0 %v285
    %361 = vmatpush.msra.mxu0 %v282
    %362 = vmatpush.msra.mxu0 %v279
    %363 = vmatpush.msra.mxu0 %v276
    %364 = vmatpush.msra.mxu0 %v273
    %365 = vmatmul.f32.gmra.mxu0 %v321
    %v366 = vpop.f32.mrf.mxu0
    %v367 = vadd.f32 %v324, %v366
    %368 = vdwg.mxu0
    %369 = vmatpush.msra.mxu0 %v319
    %370 = vmatpush.msra.mxu0 %v316
    %371 = vmatpush.msra.mxu0 %v313
    %372 = vmatpush.msra.mxu0 %v310
    %373 = vmatpush.msra.mxu0 %v307
    %374 = vmatpush.msra.mxu0 %v304
    %375 = vmatpush.msra.mxu0 %v301
    %376 = vmatpush.msra.mxu0 %v298
    %377 = vmatpush.msra.mxu0 %v295
    %378 = vmatpush.msra.mxu0 %v292
    %379 = vmatpush.msra.mxu0 %v289
    %380 = vmatpush.msra.mxu0 %v286
    %381 = vmatpush.msra.mxu0 %v283
    %382 = vmatpush.msra.mxu0 %v280
    %383 = vmatpush.msra.mxu0 %v277
    %384 = vmatpush.msra.mxu0 %v274
    %385 = vmatmul.f32.gmra.mxu0 %v321
    %v386 = vpop.f32.mrf.mxu0
    %v387 = vadd.f32 %v325, %v386
    %388 = vdwg.mxu0
    %v389 = vld [vmem:[#allocation3] sm:$0xff]
    %v390 = vld [vmem:[#allocation3 + $0x8] sm:$0xff]
    %v391 = vld [vmem:[#allocation3 + $0x10] sm:$0xff]
    %v392 = vadd.f32 %v389, %v347
    %v393 = vxor.u32 %v392, 2147483648
    %v394 = vmul.f32 %v393, 1.442695
    %v395 = vpow.pop %v394
    %v396 = vadd.f32 %v395, 1.0
    %v397 = vrcp.pop %v396
    %v398 = vmul.f32 %v396, %v397
    %v399 = vsub.f32 1.0, %v398
    %v400 = vmul.f32 %v397, %v399
    %v401 = vadd.f32 %v397, %v400
    %vm402 = vweird.f32 %v396
    %vm403 = vweird.f32 %v397
    %vm404 = vmor %vm402, %vm403
    %v405 = vsel %vm404, %v397, %v401
    %v406 = vand.u32 2147483647, %v396
    %vm407 = vcmp.eq.f32.partialorder %v406, 8.507059e+37
    %v408 = vand.u32 %v396, 2147483648
    %v409 = vor.u32 1.1754944e-38, %v408
    %v410 = vsel %vm407, %v409, %v405
    %v411 = vmul.f32 1.0, %v410
    %v412 = vadd.f32 %v390, %v367
    %v413 = vxor.u32 %v412, 2147483648
    %v414 = vmul.f32 %v413, 1.442695
    %v415 = vpow.pop %v414
    %v416 = vadd.f32 %v415, 1.0
    %v417 = vrcp.pop %v416
    %v418 = vmul.f32 %v416, %v417
    %v419 = vsub.f32 1.0, %v418
    %v420 = vmul.f32 %v417, %v419
    %v421 = vadd.f32 %v417, %v420
    %vm422 = vweird.f32 %v416
    %vm423 = vweird.f32 %v417
    %vm424 = vmor %vm422, %vm423
    %v425 = vsel %vm424, %v417, %v421
    %v426 = vand.u32 2147483647, %v416
    %vm427 = vcmp.eq.f32.partialorder %v426, 8.507059e+37
    %v428 = vand.u32 %v416, 2147483648
    %v429 = vor.u32 1.1754944e-38, %v428
    %v430 = vsel %vm427, %v429, %v425
    %v431 = vmul.f32 1.0, %v430
    %v432 = vmul.f32 %v411, %v387
    %v433 = vadd.f32 %v391, %v432
    %v434 = vtanh.pop %v433
    %v435 = vmul.f32 %v431, %v321
    %v436 = vsub.f32 1.0, %v431
    %v437 = vmul.f32 %v436, %v434
    %v438 = vadd.f32 %v435, %v437
    %439 = vst [vmem:[%s6] sm:$0xff] %v438
    %440 = vmatpush.msra.mxu0 %v317
    %441 = vmatpush.msra.mxu0 %v314
    %442 = vmatpush.msra.mxu0 %v311
    %443 = vmatpush.msra.mxu0 %v308
    %444 = vmatpush.msra.mxu0 %v305
    %445 = vmatpush.msra.mxu0 %v302
    %446 = vmatpush.msra.mxu0 %v299
    %447 = vmatpush.msra.mxu0 %v296
    %448 = vmatpush.msra.mxu0 %v293
    %449 = vmatpush.msra.mxu0 %v290
    %450 = vmatpush.msra.mxu0 %v287
    %451 = vmatpush.msra.mxu0 %v284
    %452 = vmatpush.msra.mxu0 %v281
    %453 = vmatpush.msra.mxu0 %v278
    %454 = vmatpush.msra.mxu0 %v275
    %455 = vmatpush.msra.mxu0 %v272
    %456 = vmatmul.f32.gmra.mxu0 %v438
    %v457 = vpop.f32.mrf.mxu0
    %v458 = vadd.f32 %v323, %v457
    %459 = vdwg.mxu0
    %460 = vmatpush.msra.mxu0 %v318
    %461 = vmatpush.msra.mxu0 %v315
    %462 = vmatpush.msra.mxu0 %v312
    %463 = vmatpush.msra.mxu0 %v309
    %464 = vmatpush.msra.mxu0 %v306
    %465 = vmatpush.msra.mxu0 %v303
    %466 = vmatpush.msra.mxu0 %v300
    %467 = vmatpush.msra.mxu0 %v297
    %468 = vmatpush.msra.mxu0 %v294
    %469 = vmatpush.msra.mxu0 %v291
    %470 = vmatpush.msra.mxu0 %v288
    %471 = vmatpush.msra.mxu0 %v285
    %472 = vmatpush.msra.mxu0 %v282
    %473 = vmatpush.msra.mxu0 %v279
    %474 = vmatpush.msra.mxu0 %v276
    %475 = vmatpush.msra.mxu0 %v273
    %476 = vmatmul.f32.gmra.mxu0 %v438
    %v477 = vpop.f32.mrf.mxu0
    %v478 = vadd.f32 %v324, %v477
    %479 = vdwg.mxu0
    %480 = vmatpush.msra.mxu0 %v319
    %481 = vmatpush.msra.mxu0 %v316
    %482 = vmatpush.msra.mxu0 %v313
    %483 = vmatpush.msra.mxu0 %v310
    %484 = vmatpush.msra.mxu0 %v307
    %485 = vmatpush.msra.mxu0 %v304
    %486 = vmatpush.msra.mxu0 %v301
    %487 = vmatpush.msra.mxu0 %v298
    %488 = vmatpush.msra.mxu0 %v295
    %489 = vmatpush.msra.mxu0 %v292
    %490 = vmatpush.msra.mxu0 %v289
    %491 = vmatpush.msra.mxu0 %v286
    %492 = vmatpush.msra.mxu0 %v283
    %493 = vmatpush.msra.mxu0 %v280
    %494 = vmatpush.msra.mxu0 %v277
    %495 = vmatpush.msra.mxu0 %v274
    %496 = vmatmul.f32.gmra.mxu0 %v438
    %v497 = vpop.f32.mrf.mxu0
    %v498 = vadd.f32 %v325, %v497
    %499 = vdwg.mxu0
    %s500 = scalar_lea.vmem [#allocation3], 24
    %v501 = vld [vmem:[%s500] sm:$0xff]
    %v502 = vld [vmem:[%s500 + $0x8] sm:$0xff]
    %v503 = vld [vmem:[%s500 + $0x10] sm:$0xff]
    %v504 = vadd.f32 %v501, %v458
    %v505 = vxor.u32 %v504, 2147483648
    %v506 = vmul.f32 %v505, 1.442695
    %v507 = vpow.pop %v506
    %v508 = vadd.f32 %v507, 1.0
    %v509 = vrcp.pop %v508
    %v510 = vmul.f32 %v508, %v509
    %v511 = vsub.f32 1.0, %v510
    %v512 = vmul.f32 %v509, %v511
    %v513 = vadd.f32 %v509, %v512
    %vm514 = vweird.f32 %v508
    %vm515 = vweird.f32 %v509
    %vm516 = vmor %vm514, %vm515
    %v517 = vsel %vm516, %v509, %v513
    %v518 = vand.u32 2147483647, %v508
    %vm519 = vcmp.eq.f32.partialorder %v518, 8.507059e+37
    %v520 = vand.u32 %v508, 2147483648
    %v521 = vor.u32 1.1754944e-38, %v520
    %v522 = vsel %vm519, %v521, %v517
    %v523 = vmul.f32 1.0, %v522
    %v524 = vadd.f32 %v502, %v478
    %v525 = vxor.u32 %v524, 2147483648
    %v526 = vmul.f32 %v525, 1.442695
    %v527 = vpow.pop %v526
    %v528 = vadd.f32 %v527, 1.0
    %v529 = vrcp.pop %v528
    %v530 = vmul.f32 %v528, %v529
    %v531 = vsub.f32 1.0, %v530
    %v532 = vmul.f32 %v529, %v531
    %v533 = vadd.f32 %v529, %v532
    %vm534 = vweird.f32 %v528
    %vm535 = vweird.f32 %v529
    %vm536 = vmor %vm534, %vm535
    %v537 = vsel %vm536, %v529, %v533
    %v538 = vand.u32 2147483647, %v528
    %vm539 = vcmp.eq.f32.partialorder %v538, 8.507059e+37
    %v540 = vand.u32 %v528, 2147483648
    %v541 = vor.u32 1.1754944e-38, %v540
    %v542 = vsel %vm539, %v541, %v537
    %v543 = vmul.f32 1.0, %v542
    %v544 = vmul.f32 %v523, %v498
    %v545 = vadd.f32 %v503, %v544
    %v546 = vtanh.pop %v545
    %v547 = vmul.f32 %v543, %v438
    %v548 = vsub.f32 1.0, %v543
    %v549 = vmul.f32 %v548, %v546
    %v550 = vadd.f32 %v547, %v549
    %s551 = scalar_lea.vmem %s6, 8
    %552 = vst [vmem:[%s551] sm:$0xff] %v550
    %553 = vmatpush.msra.mxu0 %v317
    %554 = vmatpush.msra.mxu0 %v314
    %555 = vmatpush.msra.mxu0 %v311
    %556 = vmatpush.msra.mxu0 %v308
    %557 = vmatpush.msra.mxu0 %v305
    %558 = vmatpush.msra.mxu0 %v302
    %559 = vmatpush.msra.mxu0 %v299
    %560 = vmatpush.msra.mxu0 %v296
    %561 = vmatpush.msra.mxu0 %v293
    %562 = vmatpush.msra.mxu0 %v290
    %563 = vmatpush.msra.mxu0 %v287
    %564 = vmatpush.msra.mxu0 %v284
    %565 = vmatpush.msra.mxu0 %v281
    %566 = vmatpush.msra.mxu0 %v278
    %567 = vmatpush.msra.mxu0 %v275
    %568 = vmatpush.msra.mxu0 %v272
    %569 = vmatmul.f32.gmra.mxu0 %v550
    %v570 = vpop.f32.mrf.mxu0
    %v571 = vadd.f32 %v323, %v570
    %572 = vdwg.mxu0
    %573 = vmatpush.msra.mxu0 %v318
    %574 = vmatpush.msra.mxu0 %v315
    %575 = vmatpush.msra.mxu0 %v312
    %576 = vmatpush.msra.mxu0 %v309
    %577 = vmatpush.msra.mxu0 %v306
    %578 = vmatpush.msra.mxu0 %v303
    %579 = vmatpush.msra.mxu0 %v300
    %580 = vmatpush.msra.mxu0 %v297
    %581 = vmatpush.msra.mxu0 %v294
    %582 = vmatpush.msra.mxu0 %v291
    %583 = vmatpush.msra.mxu0 %v288
    %584 = vmatpush.msra.mxu0 %v285
    %585 = vmatpush.msra.mxu0 %v282
    %586 = vmatpush.msra.mxu0 %v279
    %587 = vmatpush.msra.mxu0 %v276
    %588 = vmatpush.msra.mxu0 %v273
    %589 = vmatmul.f32.gmra.mxu0 %v550
    %v590 = vpop.f32.mrf.mxu0
    %v591 = vadd.f32 %v324, %v590
    %592 = vdwg.mxu0
    %593 = vmatpush.msra.mxu0 %v319
    %594 = vmatpush.msra.mxu0 %v316
    %595 = vmatpush.msra.mxu0 %v313
    %596 = vmatpush.msra.mxu0 %v310
    %597 = vmatpush.msra.mxu0 %v307
    %598 = vmatpush.msra.mxu0 %v304
    %599 = vmatpush.msra.mxu0 %v301
    %600 = vmatpush.msra.mxu0 %v298
    %601 = vmatpush.msra.mxu0 %v295
    %602 = vmatpush.msra.mxu0 %v292
    %603 = vmatpush.msra.mxu0 %v289
    %604 = vmatpush.msra.mxu0 %v286
    %605 = vmatpush.msra.mxu0 %v283
    %606 = vmatpush.msra.mxu0 %v280
    %607 = vmatpush.msra.mxu0 %v277
    %608 = vmatpush.msra.mxu0 %v274
    %609 = vmatmul.f32.gmra.mxu0 %v550
    %v610 = vpop.f32.mrf.mxu0
    %v611 = vadd.f32 %v325, %v610
    %612 = vdwg.mxu0
    %s613 = scalar_lea.vmem [#allocation3], 48
    %v614 = vld [vmem:[%s613] sm:$0xff]
    %v615 = vld [vmem:[%s613 + $0x8] sm:$0xff]
    %v616 = vld [vmem:[%s613 + $0x10] sm:$0xff]
    %v617 = vadd.f32 %v614, %v571
    %v618 = vxor.u32 %v617, 2147483648
    %v619 = vmul.f32 %v618, 1.442695
    %v620 = vpow.pop %v619
    %v621 = vadd.f32 %v620, 1.0
    %v622 = vrcp.pop %v621
    %v623 = vmul.f32 %v621, %v622
    %v624 = vsub.f32 1.0, %v623
    %v625 = vmul.f32 %v622, %v624
    %v626 = vadd.f32 %v622, %v625
    %vm627 = vweird.f32 %v621
    %vm628 = vweird.f32 %v622
    %vm629 = vmor %vm627, %vm628
    %v630 = vsel %vm629, %v622, %v626
    %v631 = vand.u32 2147483647, %v621
    %vm632 = vcmp.eq.f32.partialorder %v631, 8.507059e+37
    %v633 = vand.u32 %v621, 2147483648
    %v634 = vor.u32 1.1754944e-38, %v633
    %v635 = vsel %vm632, %v634, %v630
    %v636 = vmul.f32 1.0, %v635
    %v637 = vadd.f32 %v615, %v591
    %v638 = vxor.u32 %v637, 2147483648
    %v639 = vmul.f32 %v638, 1.442695
    %v640 = vpow.pop %v639
    %v641 = vadd.f32 %v640, 1.0
    %v642 = vrcp.pop %v641
    %v643 = vmul.f32 %v641, %v642
    %v644 = vsub.f32 1.0, %v643
    %v645 = vmul.f32 %v642, %v644
    %v646 = vadd.f32 %v642, %v645
    %vm647 = vweird.f32 %v641
    %vm648 = vweird.f32 %v642
    %vm649 = vmor %vm647, %vm648
    %v650 = vsel %vm649, %v642, %v646
    %v651 = vand.u32 2147483647, %v641
    %vm652 = vcmp.eq.f32.partialorder %v651, 8.507059e+37
    %v653 = vand.u32 %v641, 2147483648
    %v654 = vor.u32 1.1754944e-38, %v653
    %v655 = vsel %vm652, %v654, %v650
    %v656 = vmul.f32 1.0, %v655
    %v657 = vmul.f32 %v636, %v611
    %v658 = vadd.f32 %v616, %v657
    %v659 = vtanh.pop %v658
    %v660 = vmul.f32 %v656, %v550
    %v661 = vsub.f32 1.0, %v656
    %v662 = vmul.f32 %v661, %v659
    %v663 = vadd.f32 %v660, %v662
    %s664 = scalar_lea.vmem %s6, 16
    %665 = vst [vmem:[%s664] sm:$0xff] %v663
    %666 = vmatpush.msra.mxu0 %v317
    %667 = vmatpush.msra.mxu0 %v314
    %668 = vmatpush.msra.mxu0 %v311
    %669 = vmatpush.msra.mxu0 %v308
    %670 = vmatpush.msra.mxu0 %v305
    %671 = vmatpush.msra.mxu0 %v302
    %672 = vmatpush.msra.mxu0 %v299
    %673 = vmatpush.msra.mxu0 %v296
    %674 = vmatpush.msra.mxu0 %v293
    %675 = vmatpush.msra.mxu0 %v290
    %676 = vmatpush.msra.mxu0 %v287
    %677 = vmatpush.msra.mxu0 %v284
    %678 = vmatpush.msra.mxu0 %v281
    %679 = vmatpush.msra.mxu0 %v278
    %680 = vmatpush.msra.mxu0 %v275
    %681 = vmatpush.msra.mxu0 %v272
    %682 = vmatmul.f32.gmra.mxu0 %v663
    %v683 = vpop.f32.mrf.mxu0
    %v684 = vadd.f32 %v323, %v683
    %685 = vdwg.mxu0
    %686 = vmatpush.msra.mxu0 %v318
    %687 = vmatpush.msra.mxu0 %v315
    %688 = vmatpush.msra.mxu0 %v312
    %689 = vmatpush.msra.mxu0 %v309
    %690 = vmatpush.msra.mxu0 %v306
    %691 = vmatpush.msra.mxu0 %v303
    %692 = vmatpush.msra.mxu0 %v300
    %693 = vmatpush.msra.mxu0 %v297
    %694 = vmatpush.msra.mxu0 %v294
    %695 = vmatpush.msra.mxu0 %v291
    %696 = vmatpush.msra.mxu0 %v288
    %697 = vmatpush.msra.mxu0 %v285
    %698 = vmatpush.msra.mxu0 %v282
    %699 = vmatpush.msra.mxu0 %v279
    %700 = vmatpush.msra.mxu0 %v276
    %701 = vmatpush.msra.mxu0 %v273
    %702 = vmatmul.f32.gmra.mxu0 %v663
    %v703 = vpop.f32.mrf.mxu0
    %v704 = vadd.f32 %v324, %v703
    %705 = vdwg.mxu0
    %706 = vmatpush.msra.mxu0 %v319
    %707 = vmatpush.msra.mxu0 %v316
    %708 = vmatpush.msra.mxu0 %v313
    %709 = vmatpush.msra.mxu0 %v310
    %710 = vmatpush.msra.mxu0 %v307
    %711 = vmatpush.msra.mxu0 %v304
    %712 = vmatpush.msra.mxu0 %v301
    %713 = vmatpush.msra.mxu0 %v298
    %714 = vmatpush.msra.mxu0 %v295
    %715 = vmatpush.msra.mxu0 %v292
    %716 = vmatpush.msra.mxu0 %v289
    %717 = vmatpush.msra.mxu0 %v286
    %718 = vmatpush.msra.mxu0 %v283
    %719 = vmatpush.msra.mxu0 %v280
    %720 = vmatpush.msra.mxu0 %v277
    %721 = vmatpush.msra.mxu0 %v274
    %722 = vmatmul.f32.gmra.mxu0 %v663
    %v723 = vpop.f32.mrf.mxu0
    %v724 = vadd.f32 %v325, %v723
    %725 = vdwg.mxu0
    %s726 = scalar_lea.vmem [#allocation3], 72
    %v727 = vld [vmem:[%s726] sm:$0xff]
    %v728 = vld [vmem:[%s726 + $0x8] sm:$0xff]
    %v729 = vld [vmem:[%s726 + $0x10] sm:$0xff]
    %v730 = vadd.f32 %v727, %v684
    %v731 = vxor.u32 %v730, 2147483648
    %v732 = vmul.f32 %v731, 1.442695
    %v733 = vpow.pop %v732
    %v734 = vadd.f32 %v733, 1.0
    %v735 = vrcp.pop %v734
    %v736 = vmul.f32 %v734, %v735
    %v737 = vsub.f32 1.0, %v736
    %v738 = vmul.f32 %v735, %v737
    %v739 = vadd.f32 %v735, %v738
    %vm740 = vweird.f32 %v734
    %vm741 = vweird.f32 %v735
    %vm742 = vmor %vm740, %vm741
    %v743 = vsel %vm742, %v735, %v739
    %v744 = vand.u32 2147483647, %v734
    %vm745 = vcmp.eq.f32.partialorder %v744, 8.507059e+37
    %v746 = vand.u32 %v734, 2147483648
    %v747 = vor.u32 1.1754944e-38, %v746
    %v748 = vsel %vm745, %v747, %v743
    %v749 = vmul.f32 1.0, %v748
    %v750 = vadd.f32 %v728, %v704
    %v751 = vxor.u32 %v750, 2147483648
    %v752 = vmul.f32 %v751, 1.442695
    %v753 = vpow.pop %v752
    %v754 = vadd.f32 %v753, 1.0
    %v755 = vrcp.pop %v754
    %v756 = vmul.f32 %v754, %v755
    %v757 = vsub.f32 1.0, %v756
    %v758 = vmul.f32 %v755, %v757
    %v759 = vadd.f32 %v755, %v758
    %vm760 = vweird.f32 %v754
    %vm761 = vweird.f32 %v755
    %vm762 = vmor %vm760, %vm761
    %v763 = vsel %vm762, %v755, %v759
    %v764 = vand.u32 2147483647, %v754
    %vm765 = vcmp.eq.f32.partialorder %v764, 8.507059e+37
    %v766 = vand.u32 %v754, 2147483648
    %v767 = vor.u32 1.1754944e-38, %v766
    %v768 = vsel %vm765, %v767, %v763
    %v769 = vmul.f32 1.0, %v768
    %v770 = vmul.f32 %v749, %v724
    %v771 = vadd.f32 %v729, %v770
    %v772 = vtanh.pop %v771
    %v773 = vmul.f32 %v769, %v663
    %v774 = vsub.f32 1.0, %v769
    %v775 = vmul.f32 %v774, %v772
    %v776 = vadd.f32 %v773, %v775
    %s777 = scalar_lea.vmem %s6, 24
    %778 = vst [vmem:[%s777] sm:$0xff] %v776
    %779 = vmatpush.msra.mxu0 %v317
    %780 = vmatpush.msra.mxu0 %v314
    %781 = vmatpush.msra.mxu0 %v311
    %782 = vmatpush.msra.mxu0 %v308
    %783 = vmatpush.msra.mxu0 %v305
    %784 = vmatpush.msra.mxu0 %v302
    %785 = vmatpush.msra.mxu0 %v299
    %786 = vmatpush.msra.mxu0 %v296
    %787 = vmatpush.msra.mxu0 %v293
    %788 = vmatpush.msra.mxu0 %v290
    %789 = vmatpush.msra.mxu0 %v287
    %790 = vmatpush.msra.mxu0 %v284
    %791 = vmatpush.msra.mxu0 %v281
    %792 = vmatpush.msra.mxu0 %v278
    %793 = vmatpush.msra.mxu0 %v275
    %794 = vmatpush.msra.mxu0 %v272
    %795 = vmatmul.f32.gmra.mxu0 %v776
    %v796 = vpop.f32.mrf.mxu0
    %v797 = vadd.f32 %v323, %v796
    %798 = vdwg.mxu0
    %799 = vmatpush.msra.mxu0 %v318
    %800 = vmatpush.msra.mxu0 %v315
    %801 = vmatpush.msra.mxu0 %v312
    %802 = vmatpush.msra.mxu0 %v309
    %803 = vmatpush.msra.mxu0 %v306
    %804 = vmatpush.msra.mxu0 %v303
    %805 = vmatpush.msra.mxu0 %v300
    %806 = vmatpush.msra.mxu0 %v297
    %807 = vmatpush.msra.mxu0 %v294
    %808 = vmatpush.msra.mxu0 %v291
    %809 = vmatpush.msra.mxu0 %v288
    %810 = vmatpush.msra.mxu0 %v285
    %811 = vmatpush.msra.mxu0 %v282
    %812 = vmatpush.msra.mxu0 %v279
    %813 = vmatpush.msra.mxu0 %v276
    %814 = vmatpush.msra.mxu0 %v273
    %815 = vmatmul.f32.gmra.mxu0 %v776
    %v816 = vpop.f32.mrf.mxu0
    %v817 = vadd.f32 %v324, %v816
    %818 = vdwg.mxu0
    %819 = vmatpush.msra.mxu0 %v319
    %820 = vmatpush.msra.mxu0 %v316
    %821 = vmatpush.msra.mxu0 %v313
    %822 = vmatpush.msra.mxu0 %v310
    %823 = vmatpush.msra.mxu0 %v307
    %824 = vmatpush.msra.mxu0 %v304
    %825 = vmatpush.msra.mxu0 %v301
    %826 = vmatpush.msra.mxu0 %v298
    %827 = vmatpush.msra.mxu0 %v295
    %828 = vmatpush.msra.mxu0 %v292
    %829 = vmatpush.msra.mxu0 %v289
    %830 = vmatpush.msra.mxu0 %v286
    %831 = vmatpush.msra.mxu0 %v283
    %832 = vmatpush.msra.mxu0 %v280
    %833 = vmatpush.msra.mxu0 %v277
    %834 = vmatpush.msra.mxu0 %v274
    %835 = vmatmul.f32.gmra.mxu0 %v776
    %v836 = vpop.f32.mrf.mxu0
    %v837 = vadd.f32 %v325, %v836
    %838 = vdwg.mxu0
    %s839 = scalar_lea.vmem [#allocation3], 96
    %v840 = vld [vmem:[%s839] sm:$0xff]
    %v841 = vld [vmem:[%s839 + $0x8] sm:$0xff]
    %v842 = vld [vmem:[%s839 + $0x10] sm:$0xff]
    %v843 = vadd.f32 %v840, %v797
    %v844 = vxor.u32 %v843, 2147483648
    %v845 = vmul.f32 %v844, 1.442695
    %v846 = vpow.pop %v845
    %v847 = vadd.f32 %v846, 1.0
    %v848 = vrcp.pop %v847
    %v849 = vmul.f32 %v847, %v848
    %v850 = vsub.f32 1.0, %v849
    %v851 = vmul.f32 %v848, %v850
    %v852 = vadd.f32 %v848, %v851
    %vm853 = vweird.f32 %v847
    %vm854 = vweird.f32 %v848
    %vm855 = vmor %vm853, %vm854
    %v856 = vsel %vm855, %v848, %v852
    %v857 = vand.u32 2147483647, %v847
    %vm858 = vcmp.eq.f32.partialorder %v857, 8.507059e+37
    %v859 = vand.u32 %v847, 2147483648
    %v860 = vor.u32 1.1754944e-38, %v859
    %v861 = vsel %vm858, %v860, %v856
    %v862 = vmul.f32 1.0, %v861
    %v863 = vadd.f32 %v841, %v817
    %v864 = vxor.u32 %v863, 2147483648
    %v865 = vmul.f32 %v864, 1.442695
    %v866 = vpow.pop %v865
    %v867 = vadd.f32 %v866, 1.0
    %v868 = vrcp.pop %v867
    %v869 = vmul.f32 %v867, %v868
    %v870 = vsub.f32 1.0, %v869
    %v871 = vmul.f32 %v868, %v870
    %v872 = vadd.f32 %v868, %v871
    %vm873 = vweird.f32 %v867
    %vm874 = vweird.f32 %v868
    %vm875 = vmor %vm873, %vm874
    %v876 = vsel %vm875, %v868, %v872
    %v877 = vand.u32 2147483647, %v867
    %vm878 = vcmp.eq.f32.partialorder %v877, 8.507059e+37
    %v879 = vand.u32 %v867, 2147483648
    %v880 = vor.u32 1.1754944e-38, %v879
    %v881 = vsel %vm878, %v880, %v876
    %v882 = vmul.f32 1.0, %v881
    %v883 = vmul.f32 %v862, %v837
    %v884 = vadd.f32 %v842, %v883
    %v885 = vtanh.pop %v884
    %v886 = vmul.f32 %v882, %v776
    %v887 = vsub.f32 1.0, %v882
    %v888 = vmul.f32 %v887, %v885
    %v889 = vadd.f32 %v886, %v888
    %s890 = scalar_lea.vmem %s6, 32
    %891 = vst [vmem:[%s890] sm:$0xff] %v889
    %892 = vmatpush.msra.mxu0 %v317
    %893 = vmatpush.msra.mxu0 %v314
    %894 = vmatpush.msra.mxu0 %v311
    %895 = vmatpush.msra.mxu0 %v308
    %896 = vmatpush.msra.mxu0 %v305
    %897 = vmatpush.msra.mxu0 %v302
    %898 = vmatpush.msra.mxu0 %v299
    %899 = vmatpush.msra.mxu0 %v296
    %900 = vmatpush.msra.mxu0 %v293
    %901 = vmatpush.msra.mxu0 %v290
    %902 = vmatpush.msra.mxu0 %v287
    %903 = vmatpush.msra.mxu0 %v284
    %904 = vmatpush.msra.mxu0 %v281
    %905 = vmatpush.msra.mxu0 %v278
    %906 = vmatpush.msra.mxu0 %v275
    %907 = vmatpush.msra.mxu0 %v272
    %908 = vmatmul.f32.gmra.mxu0 %v889
    %v909 = vpop.f32.mrf.mxu0
    %v910 = vadd.f32 %v323, %v909
    %911 = vdwg.mxu0
    %912 = vmatpush.msra.mxu0 %v318
    %913 = vmatpush.msra.mxu0 %v315
    %914 = vmatpush.msra.mxu0 %v312
    %915 = vmatpush.msra.mxu0 %v309
    %916 = vmatpush.msra.mxu0 %v306
    %917 = vmatpush.msra.mxu0 %v303
    %918 = vmatpush.msra.mxu0 %v300
    %919 = vmatpush.msra.mxu0 %v297
    %920 = vmatpush.msra.mxu0 %v294
    %921 = vmatpush.msra.mxu0 %v291
    %922 = vmatpush.msra.mxu0 %v288
    %923 = vmatpush.msra.mxu0 %v285
    %924 = vmatpush.msra.mxu0 %v282
    %925 = vmatpush.msra.mxu0 %v279
    %926 = vmatpush.msra.mxu0 %v276
    %927 = vmatpush.msra.mxu0 %v273
    %928 = vmatmul.f32.gmra.mxu0 %v889
    %v929 = vpop.f32.mrf.mxu0
    %v930 = vadd.f32 %v324, %v929
    %931 = vdwg.mxu0
    %932 = vmatpush.msra.mxu0 %v319
    %933 = vmatpush.msra.mxu0 %v316
    %934 = vmatpush.msra.mxu0 %v313
    %935 = vmatpush.msra.mxu0 %v310
    %936 = vmatpush.msra.mxu0 %v307
    %937 = vmatpush.msra.mxu0 %v304
    %938 = vmatpush.msra.mxu0 %v301
    %939 = vmatpush.msra.mxu0 %v298
    %940 = vmatpush.msra.mxu0 %v295
    %941 = vmatpush.msra.mxu0 %v292
    %942 = vmatpush.msra.mxu0 %v289
    %943 = vmatpush.msra.mxu0 %v286
    %944 = vmatpush.msra.mxu0 %v283
    %945 = vmatpush.msra.mxu0 %v280
    %946 = vmatpush.msra.mxu0 %v277
    %947 = vmatpush.msra.mxu0 %v274
    %948 = vmatmul.f32.gmra.mxu0 %v889
    %v949 = vpop.f32.mrf.mxu0
    %v950 = vadd.f32 %v325, %v949
    %951 = vdwg.mxu0
    %s952 = scalar_lea.vmem [#allocation3], 120
    %v953 = vld [vmem:[%s952] sm:$0xff]
    %v954 = vld [vmem:[%s952 + $0x8] sm:$0xff]
    %v955 = vld [vmem:[%s952 + $0x10] sm:$0xff]
    %v956 = vadd.f32 %v953, %v910
    %v957 = vxor.u32 %v956, 2147483648
    %v958 = vmul.f32 %v957, 1.442695
    %v959 = vpow.pop %v958
    %v960 = vadd.f32 %v959, 1.0
    %v961 = vrcp.pop %v960
    %v962 = vmul.f32 %v960, %v961
    %v963 = vsub.f32 1.0, %v962
    %v964 = vmul.f32 %v961, %v963
    %v965 = vadd.f32 %v961, %v964
    %vm966 = vweird.f32 %v960
    %vm967 = vweird.f32 %v961
    %vm968 = vmor %vm966, %vm967
    %v969 = vsel %vm968, %v961, %v965
    %v970 = vand.u32 2147483647, %v960
    %vm971 = vcmp.eq.f32.partialorder %v970, 8.507059e+37
    %v972 = vand.u32 %v960, 2147483648
    %v973 = vor.u32 1.1754944e-38, %v972
    %v974 = vsel %vm971, %v973, %v969
    %v975 = vmul.f32 1.0, %v974
    %v976 = vadd.f32 %v954, %v930
    %v977 = vxor.u32 %v976, 2147483648
    %v978 = vmul.f32 %v977, 1.442695
    %v979 = vpow.pop %v978
    %v980 = vadd.f32 %v979, 1.0
    %v981 = vrcp.pop %v980
    %v982 = vmul.f32 %v980, %v981
    %v983 = vsub.f32 1.0, %v982
    %v984 = vmul.f32 %v981, %v983
    %v985 = vadd.f32 %v981, %v984
    %vm986 = vweird.f32 %v980
    %vm987 = vweird.f32 %v981
    %vm988 = vmor %vm986, %vm987
    %v989 = vsel %vm988, %v981, %v985
    %v990 = vand.u32 2147483647, %v980
    %vm991 = vcmp.eq.f32.partialorder %v990, 8.507059e+37
    %v992 = vand.u32 %v980, 2147483648
    %v993 = vor.u32 1.1754944e-38, %v992
    %v994 = vsel %vm991, %v993, %v989
    %v995 = vmul.f32 1.0, %v994
    %v996 = vmul.f32 %v975, %v950
    %v997 = vadd.f32 %v955, %v996
    %v998 = vtanh.pop %v997
    %v999 = vmul.f32 %v995, %v889
    %v1000 = vsub.f32 1.0, %v995
    %v1001 = vmul.f32 %v1000, %v998
    %v1002 = vadd.f32 %v999, %v1001
    %s1003 = scalar_lea.vmem %s6, 40
    %1004 = vst [vmem:[%s1003] sm:$0xff] %v1002
    %1005 = vmatpush.msra.mxu0 %v317
    %1006 = vmatpush.msra.mxu0 %v314
    %1007 = vmatpush.msra.mxu0 %v311
    %1008 = vmatpush.msra.mxu0 %v308
    %1009 = vmatpush.msra.mxu0 %v305
    %1010 = vmatpush.msra.mxu0 %v302
    %1011 = vmatpush.msra.mxu0 %v299
    %1012 = vmatpush.msra.mxu0 %v296
    %1013 = vmatpush.msra.mxu0 %v293
    %1014 = vmatpush.msra.mxu0 %v290
    %1015 = vmatpush.msra.mxu0 %v287
    %1016 = vmatpush.msra.mxu0 %v284
    %1017 = vmatpush.msra.mxu0 %v281
    %1018 = vmatpush.msra.mxu0 %v278
    %1019 = vmatpush.msra.mxu0 %v275
    %1020 = vmatpush.msra.mxu0 %v272
    %1021 = vmatmul.f32.gmra.mxu0 %v1002
    %v1022 = vpop.f32.mrf.mxu0
    %v1023 = vadd.f32 %v323, %v1022
    %1024 = vdwg.mxu0
    %1025 = vmatpush.msra.mxu0 %v318
    %1026 = vmatpush.msra.mxu0 %v315
    %1027 = vmatpush.msra.mxu0 %v312
    %1028 = vmatpush.msra.mxu0 %v309
    %1029 = vmatpush.msra.mxu0 %v306
    %1030 = vmatpush.msra.mxu0 %v303
    %1031 = vmatpush.msra.mxu0 %v300
    %1032 = vmatpush.msra.mxu0 %v297
    %1033 = vmatpush.msra.mxu0 %v294
    %1034 = vmatpush.msra.mxu0 %v291
    %1035 = vmatpush.msra.mxu0 %v288
    %1036 = vmatpush.msra.mxu0 %v285
    %1037 = vmatpush.msra.mxu0 %v282
    %1038 = vmatpush.msra.mxu0 %v279
    %1039 = vmatpush.msra.mxu0 %v276
    %1040 = vmatpush.msra.mxu0 %v273
    %1041 = vmatmul.f32.gmra.mxu0 %v1002
    %v1042 = vpop.f32.mrf.mxu0
    %v1043 = vadd.f32 %v324, %v1042
    %1044 = vdwg.mxu0
    %1045 = vmatpush.msra.mxu0 %v319
    %1046 = vmatpush.msra.mxu0 %v316
    %1047 = vmatpush.msra.mxu0 %v313
    %1048 = vmatpush.msra.mxu0 %v310
    %1049 = vmatpush.msra.mxu0 %v307
    %1050 = vmatpush.msra.mxu0 %v304
    %1051 = vmatpush.msra.mxu0 %v301
    %1052 = vmatpush.msra.mxu0 %v298
    %1053 = vmatpush.msra.mxu0 %v295
    %1054 = vmatpush.msra.mxu0 %v292
    %1055 = vmatpush.msra.mxu0 %v289
    %1056 = vmatpush.msra.mxu0 %v286
    %1057 = vmatpush.msra.mxu0 %v283
    %1058 = vmatpush.msra.mxu0 %v280
    %1059 = vmatpush.msra.mxu0 %v277
    %1060 = vmatpush.msra.mxu0 %v274
    %1061 = vmatmul.f32.gmra.mxu0 %v1002
    %v1062 = vpop.f32.mrf.mxu0
    %v1063 = vadd.f32 %v325, %v1062
    %1064 = vdwg.mxu0
    %s1065 = scalar_lea.vmem [#allocation3], 144
    %v1066 = vld [vmem:[%s1065] sm:$0xff]
    %v1067 = vld [vmem:[%s1065 + $0x8] sm:$0xff]
    %v1068 = vld [vmem:[%s1065 + $0x10] sm:$0xff]
    %v1069 = vadd.f32 %v1066, %v1023
    %v1070 = vxor.u32 %v1069, 2147483648
    %v1071 = vmul.f32 %v1070, 1.442695
    %v1072 = vpow.pop %v1071
    %v1073 = vadd.f32 %v1072, 1.0
    %v1074 = vrcp.pop %v1073
    %v1075 = vmul.f32 %v1073, %v1074
    %v1076 = vsub.f32 1.0, %v1075
    %v1077 = vmul.f32 %v1074, %v1076
    %v1078 = vadd.f32 %v1074, %v1077
    %vm1079 = vweird.f32 %v1073
    %vm1080 = vweird.f32 %v1074
    %vm1081 = vmor %vm1079, %vm1080
    %v1082 = vsel %vm1081, %v1074, %v1078
    %v1083 = vand.u32 2147483647, %v1073
    %vm1084 = vcmp.eq.f32.partialorder %v1083, 8.507059e+37
    %v1085 = vand.u32 %v1073, 2147483648
    %v1086 = vor.u32 1.1754944e-38, %v1085
    %v1087 = vsel %vm1084, %v1086, %v1082
    %v1088 = vmul.f32 1.0, %v1087
    %v1089 = vadd.f32 %v1067, %v1043
    %v1090 = vxor.u32 %v1089, 2147483648
    %v1091 = vmul.f32 %v1090, 1.442695
    %v1092 = vpow.pop %v1091
    %v1093 = vadd.f32 %v1092, 1.0
    %v1094 = vrcp.pop %v1093
    %v1095 = vmul.f32 %v1093, %v1094
    %v1096 = vsub.f32 1.0, %v1095
    %v1097 = vmul.f32 %v1094, %v1096
    %v1098 = vadd.f32 %v1094, %v1097
    %vm1099 = vweird.f32 %v1093
    %vm1100 = vweird.f32 %v1094
    %vm1101 = vmor %vm1099, %vm1100
    %v1102 = vsel %vm1101, %v1094, %v1098
    %v1103 = vand.u32 2147483647, %v1093
    %vm1104 = vcmp.eq.f32.partialorder %v1103, 8.507059e+37
    %v1105 = vand.u32 %v1093, 2147483648
    %v1106 = vor.u32 1.1754944e-38, %v1105
    %v1107 = vsel %vm1104, %v1106, %v1102
    %v1108 = vmul.f32 1.0, %v1107
    %v1109 = vmul.f32 %v1088, %v1063
    %v1110 = vadd.f32 %v1068, %v1109
    %v1111 = vtanh.pop %v1110
    %v1112 = vmul.f32 %v1108, %v1002
    %v1113 = vsub.f32 1.0, %v1108
    %v1114 = vmul.f32 %v1113, %v1111
    %v1115 = vadd.f32 %v1112, %v1114
    %s1116 = scalar_lea.vmem %s6, 48
    %1117 = vst [vmem:[%s1116] sm:$0xff] %v1115
    %1118 = vmatpush.msra.mxu0 %v317
    %1119 = vmatpush.msra.mxu0 %v314
    %1120 = vmatpush.msra.mxu0 %v311
    %1121 = vmatpush.msra.mxu0 %v308
    %1122 = vmatpush.msra.mxu0 %v305
    %1123 = vmatpush.msra.mxu0 %v302
    %1124 = vmatpush.msra.mxu0 %v299
    %1125 = vmatpush.msra.mxu0 %v296
    %1126 = vmatpush.msra.mxu0 %v293
    %1127 = vmatpush.msra.mxu0 %v290
    %1128 = vmatpush.msra.mxu0 %v287
    %1129 = vmatpush.msra.mxu0 %v284
    %1130 = vmatpush.msra.mxu0 %v281
    %1131 = vmatpush.msra.mxu0 %v278
    %1132 = vmatpush.msra.mxu0 %v275
    %1133 = vmatpush.msra.mxu0 %v272
    %1134 = vmatmul.f32.gmra.mxu0 %v1115
    %v1135 = vpop.f32.mrf.mxu0
    %v1136 = vadd.f32 %v323, %v1135
    %1137 = vdwg.mxu0
    %1138 = vmatpush.msra.mxu0 %v318
    %1139 = vmatpush.msra.mxu0 %v315
    %1140 = vmatpush.msra.mxu0 %v312
    %1141 = vmatpush.msra.mxu0 %v309
    %1142 = vmatpush.msra.mxu0 %v306
    %1143 = vmatpush.msra.mxu0 %v303
    %1144 = vmatpush.msra.mxu0 %v300
    %1145 = vmatpush.msra.mxu0 %v297
    %1146 = vmatpush.msra.mxu0 %v294
    %1147 = vmatpush.msra.mxu0 %v291
    %1148 = vmatpush.msra.mxu0 %v288
    %1149 = vmatpush.msra.mxu0 %v285
    %1150 = vmatpush.msra.mxu0 %v282
    %1151 = vmatpush.msra.mxu0 %v279
    %1152 = vmatpush.msra.mxu0 %v276
    %1153 = vmatpush.msra.mxu0 %v273
    %1154 = vmatmul.f32.gmra.mxu0 %v1115
    %v1155 = vpop.f32.mrf.mxu0
    %v1156 = vadd.f32 %v324, %v1155
    %1157 = vdwg.mxu0
    %1158 = vmatpush.msra.mxu0 %v319
    %1159 = vmatpush.msra.mxu0 %v316
    %1160 = vmatpush.msra.mxu0 %v313
    %1161 = vmatpush.msra.mxu0 %v310
    %1162 = vmatpush.msra.mxu0 %v307
    %1163 = vmatpush.msra.mxu0 %v304
    %1164 = vmatpush.msra.mxu0 %v301
    %1165 = vmatpush.msra.mxu0 %v298
    %1166 = vmatpush.msra.mxu0 %v295
    %1167 = vmatpush.msra.mxu0 %v292
    %1168 = vmatpush.msra.mxu0 %v289
    %1169 = vmatpush.msra.mxu0 %v286
    %1170 = vmatpush.msra.mxu0 %v283
    %1171 = vmatpush.msra.mxu0 %v280
    %1172 = vmatpush.msra.mxu0 %v277
    %1173 = vmatpush.msra.mxu0 %v274
    %1174 = vmatmul.f32.gmra.mxu0 %v1115
    %v1175 = vpop.f32.mrf.mxu0
    %v1176 = vadd.f32 %v325, %v1175
    %1177 = vdwg.mxu0
    %s1178 = scalar_lea.vmem [#allocation3], 168
    %v1179 = vld [vmem:[%s1178] sm:$0xff]
    %v1180 = vld [vmem:[%s1178 + $0x8] sm:$0xff]
    %v1181 = vld [vmem:[%s1178 + $0x10] sm:$0xff]
    %v1182 = vadd.f32 %v1179, %v1136
    %v1183 = vxor.u32 %v1182, 2147483648
    %v1184 = vmul.f32 %v1183, 1.442695
    %v1185 = vpow.pop %v1184
    %v1186 = vadd.f32 %v1185, 1.0
    %v1187 = vrcp.pop %v1186
    %v1188 = vmul.f32 %v1186, %v1187
    %v1189 = vsub.f32 1.0, %v1188
    %v1190 = vmul.f32 %v1187, %v1189
    %v1191 = vadd.f32 %v1187, %v1190
    %vm1192 = vweird.f32 %v1186
    %vm1193 = vweird.f32 %v1187
    %vm1194 = vmor %vm1192, %vm1193
    %v1195 = vsel %vm1194, %v1187, %v1191
    %v1196 = vand.u32 2147483647, %v1186
    %vm1197 = vcmp.eq.f32.partialorder %v1196, 8.507059e+37
    %v1198 = vand.u32 %v1186, 2147483648
    %v1199 = vor.u32 1.1754944e-38, %v1198
    %v1200 = vsel %vm1197, %v1199, %v1195
    %v1201 = vmul.f32 1.0, %v1200
    %v1202 = vadd.f32 %v1180, %v1156
    %v1203 = vxor.u32 %v1202, 2147483648
    %v1204 = vmul.f32 %v1203, 1.442695
    %v1205 = vpow.pop %v1204
    %v1206 = vadd.f32 %v1205, 1.0
    %v1207 = vrcp.pop %v1206
    %v1208 = vmul.f32 %v1206, %v1207
    %v1209 = vsub.f32 1.0, %v1208
    %v1210 = vmul.f32 %v1207, %v1209
    %v1211 = vadd.f32 %v1207, %v1210
    %vm1212 = vweird.f32 %v1206
    %vm1213 = vweird.f32 %v1207
    %vm1214 = vmor %vm1212, %vm1213
    %v1215 = vsel %vm1214, %v1207, %v1211
    %v1216 = vand.u32 2147483647, %v1206
    %vm1217 = vcmp.eq.f32.partialorder %v1216, 8.507059e+37
    %v1218 = vand.u32 %v1206, 2147483648
    %v1219 = vor.u32 1.1754944e-38, %v1218
    %v1220 = vsel %vm1217, %v1219, %v1215
    %v1221 = vmul.f32 1.0, %v1220
    %v1222 = vmul.f32 %v1201, %v1176
    %v1223 = vadd.f32 %v1181, %v1222
    %v1224 = vtanh.pop %v1223
    %v1225 = vmul.f32 %v1221, %v1115
    %v1226 = vsub.f32 1.0, %v1221
    %v1227 = vmul.f32 %v1226, %v1224
    %v1228 = vadd.f32 %v1225, %v1227
    %s1229 = scalar_lea.vmem %s6, 56
    %1230 = vst [vmem:[%s1229] sm:$0xff] %v1228
    %1231 = vst [vmem:[#allocation2] sm:$0xff] %v1228
    // Predicated region
    $region38: #{gru_forward.3} parent=1 // pred_check
      _
    $region39: #{gru_forward.3} parent=1 // pred_check_branch
      %1233 = sbr.rel (0) target = $region41
    $region40: #{gru_forward.3} parent=1 // pred_region
      _
    $region41: #{gru_forward.3} parent=1 // pred_fallthru
      _
    // Predicated region
    $region42: #{gru_forward.3} parent=1 // pred_check
      _
    $region43: #{gru_forward.3} parent=1 // pred_check_branch
      %1235 = sbr.rel (0) target = $region45
    $region44: #{gru_forward.3} parent=1 // pred_region
      _
    $region45: #{gru_forward.3} parent=1 // pred_fallthru
      _
    %1236 = vsyncpa [#allocation5], 1
    %1237 = vsyncpa [#allocation7], 1

// kernel: gru_forward.2
$region0: #{gru_forward.2}
  #allocation0 [shape = 'u32[]', space=smem, size = 0x4, offset = 0x4, fixed_abs, tag = 'smem constant byte address 0x4 - core index']
  #allocation1 [shape = 'u32[72,128]{1,0:T(1,128)}', space=vmem, size = 0x9000, scoped, tag = 'internal scratch']
  #allocation2 [shape = 'f32[8,128]{1,0:T(8,128)}', space=vmem, size = 0x1000, scoped, tag = 'scratch operand']
  #allocation3 [shape = 'f32[8,8,384]{2,1,0:T(8,128)}', space=vmem, size = 0x18000, scoped, tag = 'scratch operand']
  %s0 = inlined_call_operand.vmem [shape: f32[8,8,16], index: 0, kind: input, shape index: {}]
  %s1 = inlined_call_operand.vmem [shape: f32[8,128], index: 1, kind: input, shape index: {}]
  %s2 = inlined_call_operand.vmem [shape: f32[16,384], index: 2, kind: input, shape index: {}]
  %s3 = inlined_call_operand.vmem [shape: f32[1,384], index: 3, kind: input, shape index: {}]
  %s4 = inlined_call_operand.hbm [shape: f32[128,384], index: 4, kind: input, shape index: {}]
  %s5 = inlined_call_operand.vmem [shape: f32[1,384], index: 5, kind: input, shape index: {}]
  %s6 = inlined_call_operand.vmem [shape: f32[8,8,128], index: 6, kind: output, shape index: {}]
  %s7 = sld [smem:[#allocation0]]
  $region42: #{gru_forward.2} parent=0
    _
  %s9 = ssub.s32 1, %s7
  %s10 = scalar_select 0, %s9, %s7
  $region1: #{gru_forward.2} parent=0
    #allocation4 [shape = 'u8[196608]{0}', space=vmem, size = 0x30000, scoped, tag = 'input window, operand 4, single buffered']
    #allocation5 [shape = 's32[1]{0}', space=sflag, size = 0x4, scoped, tag = 'scoped memory for gru_forward.2']
    %11 = vsyncpa [#allocation5], 0
    // Predicated region
    $region2: #{gru_forward.2} parent=1 // pred_check
      _
    $region3: #{gru_forward.2} parent=1 // pred_check_branch
      %13 = sbr.rel (0) target = $region5
    $region4: #{gru_forward.2} parent=1 // pred_region
      _
    $region5: #{gru_forward.2} parent=1 // pred_fallthru
      _
    // Predicated region
    $region6: #{gru_forward.2} parent=1 // pred_check
      _
    $region7: #{gru_forward.2} parent=1 // pred_check_branch
      %15 = sbr.rel (0) target = $region9
    $region8: #{gru_forward.2} parent=1 // pred_region
      _
    $region9: #{gru_forward.2} parent=1 // pred_fallthru
      _
    // Predicated region
    $region10: #{gru_forward.2} parent=1 // pred_check
      _
    $region11: #{gru_forward.2} parent=1 // pred_check_branch
      %17 = sbr.rel (0) target = $region13
    $region12: #{gru_forward.2} parent=1 // pred_region
      _
    $region13: #{gru_forward.2} parent=1 // pred_fallthru
      _
    // Predicated region
    $region14: #{gru_forward.2} parent=1 // pred_check
      _
    $region15: #{gru_forward.2} parent=1 // pred_check_branch
      %19 = sbr.rel (0) target = $region17
    $region16: #{gru_forward.2} parent=1 // pred_region
      _
    $region17: #{gru_forward.2} parent=1 // pred_fallthru
      _
    // Predicated region
    $region18: #{gru_forward.2} parent=1 // pred_check
      _
    $region19: #{gru_forward.2} parent=1 // pred_check_branch
      %21 = sbr.rel (0) target = $region21
    $region20: #{gru_forward.2} parent=1 // pred_region
      %23 = vsyncadd [#allocation5], 0
      %s24 = sshll.u32 %s4, 4
      %s25 = int_to_ptr.hbm [resolvable:$true] %s24
      %s26 = sshll.u32 [#allocation4], 4
      %s27 = int_to_ptr.vmem [resolvable:$true] %s26
      %32 = dma.hbm_to_vmem [thread:$0]  %s25, 6144, %s27, [#allocation5], 384, 384, 24
    $region21: #{gru_forward.2} parent=1 // pred_fallthru
      _
    // Predicated region
    $region22: #{gru_forward.2} parent=1 // pred_check
      _
    $region23: #{gru_forward.2} parent=1 // pred_check_branch
      %34 = sbr.rel (0) target = $region25
    $region24: #{gru_forward.2} parent=1 // pred_region
      _
    $region25: #{gru_forward.2} parent=1 // pred_fallthru
      _
    // Predicated region
    $region26: #{gru_forward.2} parent=1 // pred_check
      _
    $region27: #{gru_forward.2} parent=1 // pred_check_branch
      %36 = sbr.rel (0) target = $region29
    $region28: #{gru_forward.2} parent=1 // pred_region
      %38 = dma.done [#allocation5], 6144
    $region29: #{gru_forward.2} parent=1 // pred_fallthru
      _
    %p39 = scmp.eq.s32.totalorder 0, 0
    // Predicated region
    $region30: #{gru_forward.2} parent=1 // pred_check
      %p40 = pneg %p39
    $region31: #{gru_forward.2} parent=1 // pred_check_branch
      %42 = sbr.rel (%p40) target = $region33
    $region32: #{gru_forward.2} parent=1 // pred_region
      %v43 = vld [vmem:[%s1] sm:$0xff]
      %44 = vst [vmem:[#allocation2] sm:$0xff] %v43
    $region33: #{gru_forward.2} parent=1 // pred_fallthru
      _
    %v45 = vld [vmem:[%s0] sm:$0xff]
    %v46 = vld [vmem:[%s0 + $0x8] sm:$0xff]
    %v47 = vld [vmem:[%s0 + $0x10] sm:$0xff]
    %v48 = vld [vmem:[%s0 + $0x18] sm:$0xff]
    %v49 = vld [vmem:[%s0 + $0x20] sm:$0xff]
    %v50 = vld [vmem:[%s0 + $0x28] sm:$0xff]
    %v51 = vld [vmem:[%s0 + $0x30] sm:$0xff]
    %v52 = vld [vmem:[%s0 + $0x38] sm:$0xff]
    %v53 = vld [vmem:[%s2] sm:$0xff]
    %v54 = vld [vmem:[%s2 + $0x8] sm:$0xff]
    %v55 = vld [vmem:[%s2 + $0x10] sm:$0xff]
    %v56 = vld [vmem:[%s2 + $0x18] sm:$0xff]
    %v57 = vld [vmem:[%s2 + $0x20] sm:$0xff]
    %v58 = vld [vmem:[%s2 + $0x28] sm:$0xff]
    %v59 = vld [vmem:[%s3] sm:$0x7]
    %v61 = vperm.slane %v59, 0
    %v62 = vperm.slane %v59, 1
    %v63 = vperm.slane %v59, 2
    %vm67 = vcmask 130048
    %v69 = vsel %vm67, %v45, 0
    %v72 = vsel %vm67, %v46, 0
    %v75 = vsel %vm67, %v47, 0
    %v78 = vsel %vm67, %v48, 0
    %v81 = vsel %vm67, %v49, 0
    %v84 = vsel %vm67, %v50, 0
    %v87 = vsel %vm67, %v51, 0
    %v90 = vsel %vm67, %v52, 0
    %92 = vmatpush.msra.mxu0 0.0
    %93 = vmatpush.msra.mxu0 0.0
    %94 = vmatpush.msra.mxu0 0.0
    %95 = vmatpush.msra.mxu0 0.0
    %96 = vmatpush.msra.mxu0 0.0
    %97 = vmatpush.msra.mxu0 0.0
    %98 = vmatpush.msra.mxu0 0.0
    %99 = vmatpush.msra.mxu0 0.0
    %100 = vmatpush.msra.mxu0 0.0
    %101 = vmatpush.msra.mxu0 0.0
    %102 = vmatpush.msra.mxu0 0.0
    %103 = vmatpush.msra.mxu0 0.0
    %104 = vmatpush.msra.mxu0 0.0
    %105 = vmatpush.msra.mxu0 0.0
    %106 = vmatpush.msra.mxu0 %v56
    %107 = vmatpush.msra.mxu0 %v53
    %108 = vmatmul.f32.gmra.mxu0 %v69
    %v109 = vpop.f32.mrf.mxu0
    %v110 = vadd.f32 %v61, %v109
    %111 = vmatmul.f32.gmra.mxu0 %v72
    %v112 = vpop.f32.mrf.mxu0
    %v113 = vadd.f32 %v61, %v112
    %114 = vmatmul.f32.gmra.mxu0 %v75
    %v115 = vpop.f32.mrf.mxu0
    %v116 = vadd.f32 %v61, %v115
    %117 = vmatmul.f32.gmra.mxu0 %v78
    %v118 = vpop.f32.mrf.mxu0
    %v119 = vadd.f32 %v61, %v118
    %120 = vmatmul.f32.gmra.mxu0 %v81
    %v121 = vpop.f32.mrf.mxu0
    %v122 = vadd.f32 %v61, %v121
    %123 = vmatmul.f32.gmra.mxu0 %v84
    %v124 = vpop.f32.mrf.mxu0
    %v125 = vadd.f32 %v61, %v124
    %126 = vmatmul.f32.gmra.mxu0 %v87
    %v127 = vpop.f32.mrf.mxu0
    %v128 = vadd.f32 %v61, %v127
    %129 = vmatmul.f32.gmra.mxu0 %v90
    %v130 = vpop.f32.mrf.mxu0
    %v131 = vadd.f32 %v61, %v130
    %132 = vdwg.mxu0
    %133 = vmatpush.msra.mxu0 0.0
    %134 = vmatpush.msra.mxu0 0.0
    %135 = vmatpush.msra.mxu0 0.0
    %136 = vmatpush.msra.mxu0 0.0
    %137 = vmatpush.msra.mxu0 0.0
    %138 = vmatpush.msra.mxu0 0.0
    %139 = vmatpush.msra.mxu0 0.0
    %140 = vmatpush.msra.mxu0 0.0
    %141 = vmatpush.msra.mxu0 0.0
    %142 = vmatpush.msra.mxu0 0.0
    %143 = vmatpush.msra.mxu0 0.0
    %144 = vmatpush.msra.mxu0 0.0
    %145 = vmatpush.msra.mxu0 0.0
    %146 = vmatpush.msra.mxu0 0.0
    %147 = vmatpush.msra.mxu0 %v57
    %148 = vmatpush.msra.mxu0 %v54
    %149 = vmatmul.f32.gmra.mxu0 %v69
    %v150 = vpop.f32.mrf.mxu0
    %v151 = vadd.f32 %v62, %v150
    %152 = vmatmul.f32.gmra.mxu0 %v72
    %v153 = vpop.f32.mrf.mxu0
    %v154 = vadd.f32 %v62, %v153
    %155 = vmatmul.f32.gmra.mxu0 %v75
    %v156 = vpop.f32.mrf.mxu0
    %v157 = vadd.f32 %v62, %v156
    %158 = vmatmul.f32.gmra.mxu0 %v78
    %v159 = vpop.f32.mrf.mxu0
    %v160 = vadd.f32 %v62, %v159
    %161 = vmatmul.f32.gmra.mxu0 %v81
    %v162 = vpop.f32.mrf.mxu0
    %v163 = vadd.f32 %v62, %v162
    %164 = vmatmul.f32.gmra.mxu0 %v84
    %v165 = vpop.f32.mrf.mxu0
    %v166 = vadd.f32 %v62, %v165
    %167 = vmatmul.f32.gmra.mxu0 %v87
    %v168 = vpop.f32.mrf.mxu0
    %v169 = vadd.f32 %v62, %v168
    %170 = vmatmul.f32.gmra.mxu0 %v90
    %v171 = vpop.f32.mrf.mxu0
    %v172 = vadd.f32 %v62, %v171
    %173 = vdwg.mxu0
    %174 = vmatpush.msra.mxu0 0.0
    %175 = vmatpush.msra.mxu0 0.0
    %176 = vmatpush.msra.mxu0 0.0
    %177 = vmatpush.msra.mxu0 0.0
    %178 = vmatpush.msra.mxu0 0.0
    %179 = vmatpush.msra.mxu0 0.0
    %180 = vmatpush.msra.mxu0 0.0
    %181 = vmatpush.msra.mxu0 0.0
    %182 = vmatpush.msra.mxu0 0.0
    %183 = vmatpush.msra.mxu0 0.0
    %184 = vmatpush.msra.mxu0 0.0
    %185 = vmatpush.msra.mxu0 0.0
    %186 = vmatpush.msra.mxu0 0.0
    %187 = vmatpush.msra.mxu0 0.0
    %188 = vmatpush.msra.mxu0 %v58
    %189 = vmatpush.msra.mxu0 %v55
    %190 = vmatmul.f32.gmra.mxu0 %v69
    %v191 = vpop.f32.mrf.mxu0
    %v192 = vadd.f32 %v63, %v191
    %193 = vmatmul.f32.gmra.mxu0 %v72
    %v194 = vpop.f32.mrf.mxu0
    %v195 = vadd.f32 %v63, %v194
    %196 = vmatmul.f32.gmra.mxu0 %v75
    %v197 = vpop.f32.mrf.mxu0
    %v198 = vadd.f32 %v63, %v197
    %199 = vmatmul.f32.gmra.mxu0 %v78
    %v200 = vpop.f32.mrf.mxu0
    %v201 = vadd.f32 %v63, %v200
    %202 = vmatmul.f32.gmra.mxu0 %v81
    %v203 = vpop.f32.mrf.mxu0
    %v204 = vadd.f32 %v63, %v203
    %205 = vmatmul.f32.gmra.mxu0 %v84
    %v206 = vpop.f32.mrf.mxu0
    %v207 = vadd.f32 %v63, %v206
    %208 = vmatmul.f32.gmra.mxu0 %v87
    %v209 = vpop.f32.mrf.mxu0
    %v210 = vadd.f32 %v63, %v209
    %211 = vmatmul.f32.gmra.mxu0 %v90
    %v212 = vpop.f32.mrf.mxu0
    %v213 = vadd.f32 %v63, %v212
    %214 = vdwg.mxu0
    %215 = vst [vmem:[#allocation3] sm:$0xff] %v110
    %216 = vst [vmem:[#allocation3 + $0x8] sm:$0xff] %v151
    %217 = vst [vmem:[#allocation3 + $0x10] sm:$0xff] %v192
    %218 = vst [vmem:[#allocation3 + $0x18] sm:$0xff] %v113
    %219 = vst [vmem:[#allocation3 + $0x20] sm:$0xff] %v154
    %220 = vst [vmem:[#allocation3 + $0x28] sm:$0xff] %v195
    %221 = vst [vmem:[#allocation3 + $0x30] sm:$0xff] %v116
    %222 = vst [vmem:[#allocation3 + $0x38] sm:$0xff] %v157
    %223 = vst [vmem:[#allocation3 + $0x40] sm:$0xff] %v198
    %224 = vst [vmem:[#allocation3 + $0x48] sm:$0xff] %v119
    %225 = vst [vmem:[#allocation3 + $0x50] sm:$0xff] %v160
    %226 = vst [vmem:[#allocation3 + $0x58] sm:$0xff] %v201
    %227 = vst [vmem:[#allocation3 + $0x60] sm:$0xff] %v122
    %228 = vst [vmem:[#allocation3 + $0x68] sm:$0xff] %v163
    %229 = vst [vmem:[#allocation3 + $0x70] sm:$0xff] %v204
    %230 = vst [vmem:[#allocation3 + $0x78] sm:$0xff] %v125
    %231 = vst [vmem:[#allocation3 + $0x80] sm:$0xff] %v166
    %232 = vst [vmem:[#allocation3 + $0x88] sm:$0xff] %v207
    %233 = vst [vmem:[#allocation3 + $0x90] sm:$0xff] %v128
    %234 = vst [vmem:[#allocation3 + $0x98] sm:$0xff] %v169
    %235 = vst [vmem:[#allocation3 + $0xa0] sm:$0xff] %v210
    %236 = vst [vmem:[#allocation3 + $0xa8] sm:$0xff] %v131
    %237 = vst [vmem:[#allocation3 + $0xb0] sm:$0xff] %v172
    %238 = vst [vmem:[#allocation3 + $0xb8] sm:$0xff] %v213
    %v239 = vld [vmem:[#allocation4] sm:$0xff]
    %v240 = vld [vmem:[#allocation4 + $0x8] sm:$0xff]
    %v241 = vld [vmem:[#allocation4 + $0x10] sm:$0xff]
    %v242 = vld [vmem:[#allocation4 + $0x18] sm:$0xff]
    %v243 = vld [vmem:[#allocation4 + $0x20] sm:$0xff]
    %v244 = vld [vmem:[#allocation4 + $0x28] sm:$0xff]
    %v245 = vld [vmem:[#allocation4 + $0x30] sm:$0xff]
    %v246 = vld [vmem:[#allocation4 + $0x38] sm:$0xff]
    %v247 = vld [vmem:[#allocation4 + $0x40] sm:$0xff]
    %v248 = vld [vmem:[#allocation4 + $0x48] sm:$0xff]
    %v249 = vld [vmem:[#allocation4 + $0x50] sm:$0xff]
    %v250 = vld [vmem:[#allocation4 + $0x58] sm:$0xff]
    %v251 = vld [vmem:[#allocation4 + $0x60] sm:$0xff]
    %v252 = vld [vmem:[#allocation4 + $0x68] sm:$0xff]
    %v253 = vld [vmem:[#allocation4 + $0x70] sm:$0xff]
    %v254 = vld [vmem:[#allocation4 + $0x78] sm:$0xff]
    %v255 = vld [vmem:[#allocation4 + $0x80] sm:$0xff]
    %v256 = vld [vmem:[#allocation4 + $0x88] sm:$0xff]
    %v257 = vld [vmem:[#allocation4 + $0x90] sm:$0xff]
    %v258 = vld [vmem:[#allocation4 + $0x98] sm:$0xff]
    %v259 = vld [vmem:[#allocation4 + $0xa0] sm:$0xff]
    %v260 = vld [vmem:[#allocation4 + $0xa8] sm:$0xff]
    %v261 = vld [vmem:[#allocation4 + $0xb0] sm:$0xff]
    %v262 = vld [vmem:[#allocation4 + $0xb8] sm:$0xff]
    %v263 = vld [vmem:[#allocation4 + $0xc0] sm:$0xff]
    %v264 = vld [vmem:[#allocation4 + $0xc8] sm:$0xff]
    %v265 = vld [vmem:[#allocation4 + $0xd0] sm:$0xff]
    %v266 = vld [vmem:[#allocation4 + $0xd8] sm:$0xff]
    %v267 = vld [vmem:[#allocation4 + $0xe0] sm:$0xff]
    %v268 = vld [vmem:[#allocation4 + $0xe8] sm:$0xff]
    %v269 = vld [vmem:[#allocation4 + $0xf0] sm:$0xff]
    %v270 = vld [vmem:[#allocation4 + $0xf8] sm:$0xff]
    %v271 = vld [vmem:[#allocation4 + $0x100] sm:$0xff]
    %v272 = vld [vmem:[#allocation4 + $0x108] sm:$0xff]
    %v273 = vld [vmem:[#allocation4 + $0x110] sm:$0xff]
    %v274 = vld [vmem:[#allocation4 + $0x118] sm:$0xff]
    %v275 = vld [vmem:[#allocation4 + $0x120] sm:$0xff]
    %v276 = vld [vmem:[#allocation4 + $0x128] sm:$0xff]
    %v277 = vld [vmem:[#allocation4 + $0x130] sm:$0xff]
    %v278 = vld [vmem:[#allocation4 + $0x138] sm:$0xff]
    %v279 = vld [vmem:[#allocation4 + $0x140] sm:$0xff]
    %v280 = vld [vmem:[#allocation4 + $0x148] sm:$0xff]
    %v281 = vld [vmem:[#allocation4 + $0x150] sm:$0xff]
    %v282 = vld [vmem:[#allocation4 + $0x158] sm:$0xff]
    %v283 = vld [vmem:[#allocation4 + $0x160] sm:$0xff]
    %v284 = vld [vmem:[#allocation4 + $0x168] sm:$0xff]
    %v285 = vld [vmem:[#allocation4 + $0x170] sm:$0xff]
    %v286 = vld [vmem:[#allocation4 + $0x178] sm:$0xff]
    %v287 = vld [vmem:[%s5] sm:$0x7]
    %v288 = vld [vmem:[#allocation2] sm:$0xff]
    %v290 = vperm.slane %v287, 0
    %v291 = vperm.slane %v287, 1
    %v292 = vperm.slane %v287, 2
    %296 = vmatpush.msra.mxu0 %v284
    %297 = vmatpush.msra.mxu0 %v281
    %298 = vmatpush.msra.mxu0 %v278
    %299 = vmatpush.msra.mxu0 %v275
    %300 = vmatpush.msra.mxu0 %v272
    %301 = vmatpush.msra.mxu0 %v269
    %302 = vmatpush.msra.mxu0 %v266
    %303 = vmatpush.msra.mxu0 %v263
    %304 = vmatpush.msra.mxu0 %v260
    %305 = vmatpush.msra.mxu0 %v257
    %306 = vmatpush.msra.mxu0 %v254
    %307 = vmatpush.msra.mxu0 %v251
    %308 = vmatpush.msra.mxu0 %v248
    %309 = vmatpush.msra.mxu0 %v245
    %310 = vmatpush.msra.mxu0 %v242
    %311 = vmatpush.msra.mxu0 %v239
    %312 = vmatmul.f32.gmra.mxu0 %v288
    %v313 = vpop.f32.mrf.mxu0
    %v314 = vadd.f32 %v290, %v313
    %315 = vdwg.mxu0
    %316 = vmatpush.msra.mxu0 %v285
    %317 = vmatpush.msra.mxu0 %v282
    %318 = vmatpush.msra.mxu0 %v279
    %319 = vmatpush.msra.mxu0 %v276
    %320 = vmatpush.msra.mxu0 %v273
    %321 = vmatpush.msra.mxu0 %v270
    %322 = vmatpush.msra.mxu0 %v267
    %323 = vmatpush.msra.mxu0 %v264
    %324 = vmatpush.msra.mxu0 %v261
    %325 = vmatpush.msra.mxu0 %v258
    %326 = vmatpush.msra.mxu0 %v255
    %327 = vmatpush.msra.mxu0 %v252
    %328 = vmatpush.msra.mxu0 %v249
    %329 = vmatpush.msra.mxu0 %v246
    %330 = vmatpush.msra.mxu0 %v243
    %331 = vmatpush.msra.mxu0 %v240
    %332 = vmatmul.f32.gmra.mxu0 %v288
    %v333 = vpop.f32.mrf.mxu0
    %v334 = vadd.f32 %v291, %v333
    %335 = vdwg.mxu0
    %336 = vmatpush.msra.mxu0 %v286
    %337 = vmatpush.msra.mxu0 %v283
    %338 = vmatpush.msra.mxu0 %v280
    %339 = vmatpush.msra.mxu0 %v277
    %340 = vmatpush.msra.mxu0 %v274
    %341 = vmatpush.msra.mxu0 %v271
    %342 = vmatpush.msra.mxu0 %v268
    %343 = vmatpush.msra.mxu0 %v265
    %344 = vmatpush.msra.mxu0 %v262
    %345 = vmatpush.msra.mxu0 %v259
    %346 = vmatpush.msra.mxu0 %v256
    %347 = vmatpush.msra.mxu0 %v253
    %348 = vmatpush.msra.mxu0 %v250
    %349 = vmatpush.msra.mxu0 %v247
    %350 = vmatpush.msra.mxu0 %v244
    %351 = vmatpush.msra.mxu0 %v241
    %352 = vmatmul.f32.gmra.mxu0 %v288
    %v353 = vpop.f32.mrf.mxu0
    %v354 = vadd.f32 %v292, %v353
    %355 = vdwg.mxu0
    %v356 = vld [vmem:[#allocation3] sm:$0xff]
    %v357 = vld [vmem:[#allocation3 + $0x8] sm:$0xff]
    %v358 = vld [vmem:[#allocation3 + $0x10] sm:$0xff]
    %v359 = vadd.f32 %v356, %v314
    %v360 = vxor.u32 %v359, 2147483648
    %v361 = vmul.f32 %v360, 1.442695
    %v362 = vpow.pop %v361
    %v363 = vadd.f32 %v362, 1.0
    %v364 = vrcp.pop %v363
    %v365 = vmul.f32 %v363, %v364
    %v366 = vsub.f32 1.0, %v365
    %v367 = vmul.f32 %v364, %v366
    %v368 = vadd.f32 %v364, %v367
    %vm369 = vweird.f32 %v363
    %vm370 = vweird.f32 %v364
    %vm371 = vmor %vm369, %vm370
    %v372 = vsel %vm371, %v364, %v368
    %v373 = vand.u32 2147483647, %v363
    %vm374 = vcmp.eq.f32.partialorder %v373, 8.507059e+37
    %v375 = vand.u32 %v363, 2147483648
    %v376 = vor.u32 1.1754944e-38, %v375
    %v377 = vsel %vm374, %v376, %v372
    %v378 = vmul.f32 1.0, %v377
    %v379 = vadd.f32 %v357, %v334
    %v380 = vxor.u32 %v379, 2147483648
    %v381 = vmul.f32 %v380, 1.442695
    %v382 = vpow.pop %v381
    %v383 = vadd.f32 %v382, 1.0
    %v384 = vrcp.pop %v383
    %v385 = vmul.f32 %v383, %v384
    %v386 = vsub.f32 1.0, %v385
    %v387 = vmul.f32 %v384, %v386
    %v388 = vadd.f32 %v384, %v387
    %vm389 = vweird.f32 %v383
    %vm390 = vweird.f32 %v384
    %vm391 = vmor %vm389, %vm390
    %v392 = vsel %vm391, %v384, %v388
    %v393 = vand.u32 2147483647, %v383
    %vm394 = vcmp.eq.f32.partialorder %v393, 8.507059e+37
    %v395 = vand.u32 %v383, 2147483648
    %v396 = vor.u32 1.1754944e-38, %v395
    %v397 = vsel %vm394, %v396, %v392
    %v398 = vmul.f32 1.0, %v397
    %v399 = vmul.f32 %v378, %v354
    %v400 = vadd.f32 %v358, %v399
    %v401 = vtanh.pop %v400
    %v402 = vmul.f32 %v398, %v288
    %v403 = vsub.f32 1.0, %v398
    %v404 = vmul.f32 %v403, %v401
    %v405 = vadd.f32 %v402, %v404
    %406 = vst [vmem:[%s6] sm:$0xff] %v405
    %407 = vmatpush.msra.mxu0 %v284
    %408 = vmatpush.msra.mxu0 %v281
    %409 = vmatpush.msra.mxu0 %v278
    %410 = vmatpush.msra.mxu0 %v275
    %411 = vmatpush.msra.mxu0 %v272
    %412 = vmatpush.msra.mxu0 %v269
    %413 = vmatpush.msra.mxu0 %v266
    %414 = vmatpush.msra.mxu0 %v263
    %415 = vmatpush.msra.mxu0 %v260
    %416 = vmatpush.msra.mxu0 %v257
    %417 = vmatpush.msra.mxu0 %v254
    %418 = vmatpush.msra.mxu0 %v251
    %419 = vmatpush.msra.mxu0 %v248
    %420 = vmatpush.msra.mxu0 %v245
    %421 = vmatpush.msra.mxu0 %v242
    %422 = vmatpush.msra.mxu0 %v239
    %423 = vmatmul.f32.gmra.mxu0 %v405
    %v424 = vpop.f32.mrf.mxu0
    %v425 = vadd.f32 %v290, %v424
    %426 = vdwg.mxu0
    %427 = vmatpush.msra.mxu0 %v285
    %428 = vmatpush.msra.mxu0 %v282
    %429 = vmatpush.msra.mxu0 %v279
    %430 = vmatpush.msra.mxu0 %v276
    %431 = vmatpush.msra.mxu0 %v273
    %432 = vmatpush.msra.mxu0 %v270
    %433 = vmatpush.msra.mxu0 %v267
    %434 = vmatpush.msra.mxu0 %v264
    %435 = vmatpush.msra.mxu0 %v261
    %436 = vmatpush.msra.mxu0 %v258
    %437 = vmatpush.msra.mxu0 %v255
    %438 = vmatpush.msra.mxu0 %v252
    %439 = vmatpush.msra.mxu0 %v249
    %440 = vmatpush.msra.mxu0 %v246
    %441 = vmatpush.msra.mxu0 %v243
    %442 = vmatpush.msra.mxu0 %v240
    %443 = vmatmul.f32.gmra.mxu0 %v405
    %v444 = vpop.f32.mrf.mxu0
    %v445 = vadd.f32 %v291, %v444
    %446 = vdwg.mxu0
    %447 = vmatpush.msra.mxu0 %v286
    %448 = vmatpush.msra.mxu0 %v283
    %449 = vmatpush.msra.mxu0 %v280
    %450 = vmatpush.msra.mxu0 %v277
    %451 = vmatpush.msra.mxu0 %v274
    %452 = vmatpush.msra.mxu0 %v271
    %453 = vmatpush.msra.mxu0 %v268
    %454 = vmatpush.msra.mxu0 %v265
    %455 = vmatpush.msra.mxu0 %v262
    %456 = vmatpush.msra.mxu0 %v259
    %457 = vmatpush.msra.mxu0 %v256
    %458 = vmatpush.msra.mxu0 %v253
    %459 = vmatpush.msra.mxu0 %v250
    %460 = vmatpush.msra.mxu0 %v247
    %461 = vmatpush.msra.mxu0 %v244
    %462 = vmatpush.msra.mxu0 %v241
    %463 = vmatmul.f32.gmra.mxu0 %v405
    %v464 = vpop.f32.mrf.mxu0
    %v465 = vadd.f32 %v292, %v464
    %466 = vdwg.mxu0
    %s467 = scalar_lea.vmem [#allocation3], 24
    %v468 = vld [vmem:[%s467] sm:$0xff]
    %v469 = vld [vmem:[%s467 + $0x8] sm:$0xff]
    %v470 = vld [vmem:[%s467 + $0x10] sm:$0xff]
    %v471 = vadd.f32 %v468, %v425
    %v472 = vxor.u32 %v471, 2147483648
    %v473 = vmul.f32 %v472, 1.442695
    %v474 = vpow.pop %v473
    %v475 = vadd.f32 %v474, 1.0
    %v476 = vrcp.pop %v475
    %v477 = vmul.f32 %v475, %v476
    %v478 = vsub.f32 1.0, %v477
    %v479 = vmul.f32 %v476, %v478
    %v480 = vadd.f32 %v476, %v479
    %vm481 = vweird.f32 %v475
    %vm482 = vweird.f32 %v476
    %vm483 = vmor %vm481, %vm482
    %v484 = vsel %vm483, %v476, %v480
    %v485 = vand.u32 2147483647, %v475
    %vm486 = vcmp.eq.f32.partialorder %v485, 8.507059e+37
    %v487 = vand.u32 %v475, 2147483648
    %v488 = vor.u32 1.1754944e-38, %v487
    %v489 = vsel %vm486, %v488, %v484
    %v490 = vmul.f32 1.0, %v489
    %v491 = vadd.f32 %v469, %v445
    %v492 = vxor.u32 %v491, 2147483648
    %v493 = vmul.f32 %v492, 1.442695
    %v494 = vpow.pop %v493
    %v495 = vadd.f32 %v494, 1.0
    %v496 = vrcp.pop %v495
    %v497 = vmul.f32 %v495, %v496
    %v498 = vsub.f32 1.0, %v497
    %v499 = vmul.f32 %v496, %v498
    %v500 = vadd.f32 %v496, %v499
    %vm501 = vweird.f32 %v495
    %vm502 = vweird.f32 %v496
    %vm503 = vmor %vm501, %vm502
    %v504 = vsel %vm503, %v496, %v500
    %v505 = vand.u32 2147483647, %v495
    %vm506 = vcmp.eq.f32.partialorder %v505, 8.507059e+37
    %v507 = vand.u32 %v495, 2147483648
    %v508 = vor.u32 1.1754944e-38, %v507
    %v509 = vsel %vm506, %v508, %v504
    %v510 = vmul.f32 1.0, %v509
    %v511 = vmul.f32 %v490, %v465
    %v512 = vadd.f32 %v470, %v511
    %v513 = vtanh.pop %v512
    %v514 = vmul.f32 %v510, %v405
    %v515 = vsub.f32 1.0, %v510
    %v516 = vmul.f32 %v515, %v513
    %v517 = vadd.f32 %v514, %v516
    %s518 = scalar_lea.vmem %s6, 8
    %519 = vst [vmem:[%s518] sm:$0xff] %v517
    %520 = vmatpush.msra.mxu0 %v284
    %521 = vmatpush.msra.mxu0 %v281
    %522 = vmatpush.msra.mxu0 %v278
    %523 = vmatpush.msra.mxu0 %v275
    %524 = vmatpush.msra.mxu0 %v272
    %525 = vmatpush.msra.mxu0 %v269
    %526 = vmatpush.msra.mxu0 %v266
    %527 = vmatpush.msra.mxu0 %v263
    %528 = vmatpush.msra.mxu0 %v260
    %529 = vmatpush.msra.mxu0 %v257
    %530 = vmatpush.msra.mxu0 %v254
    %531 = vmatpush.msra.mxu0 %v251
    %532 = vmatpush.msra.mxu0 %v248
    %533 = vmatpush.msra.mxu0 %v245
    %534 = vmatpush.msra.mxu0 %v242
    %535 = vmatpush.msra.mxu0 %v239
    %536 = vmatmul.f32.gmra.mxu0 %v517
    %v537 = vpop.f32.mrf.mxu0
    %v538 = vadd.f32 %v290, %v537
    %539 = vdwg.mxu0
    %540 = vmatpush.msra.mxu0 %v285
    %541 = vmatpush.msra.mxu0 %v282
    %542 = vmatpush.msra.mxu0 %v279
    %543 = vmatpush.msra.mxu0 %v276
    %544 = vmatpush.msra.mxu0 %v273
    %545 = vmatpush.msra.mxu0 %v270
    %546 = vmatpush.msra.mxu0 %v267
    %547 = vmatpush.msra.mxu0 %v264
    %548 = vmatpush.msra.mxu0 %v261
    %549 = vmatpush.msra.mxu0 %v258
    %550 = vmatpush.msra.mxu0 %v255
    %551 = vmatpush.msra.mxu0 %v252
    %552 = vmatpush.msra.mxu0 %v249
    %553 = vmatpush.msra.mxu0 %v246
    %554 = vmatpush.msra.mxu0 %v243
    %555 = vmatpush.msra.mxu0 %v240
    %556 = vmatmul.f32.gmra.mxu0 %v517
    %v557 = vpop.f32.mrf.mxu0
    %v558 = vadd.f32 %v291, %v557
    %559 = vdwg.mxu0
    %560 = vmatpush.msra.mxu0 %v286
    %561 = vmatpush.msra.mxu0 %v283
    %562 = vmatpush.msra.mxu0 %v280
    %563 = vmatpush.msra.mxu0 %v277
    %564 = vmatpush.msra.mxu0 %v274
    %565 = vmatpush.msra.mxu0 %v271
    %566 = vmatpush.msra.mxu0 %v268
    %567 = vmatpush.msra.mxu0 %v265
    %568 = vmatpush.msra.mxu0 %v262
    %569 = vmatpush.msra.mxu0 %v259
    %570 = vmatpush.msra.mxu0 %v256
    %571 = vmatpush.msra.mxu0 %v253
    %572 = vmatpush.msra.mxu0 %v250
    %573 = vmatpush.msra.mxu0 %v247
    %574 = vmatpush.msra.mxu0 %v244
    %575 = vmatpush.msra.mxu0 %v241
    %576 = vmatmul.f32.gmra.mxu0 %v517
    %v577 = vpop.f32.mrf.mxu0
    %v578 = vadd.f32 %v292, %v577
    %579 = vdwg.mxu0
    %s580 = scalar_lea.vmem [#allocation3], 48
    %v581 = vld [vmem:[%s580] sm:$0xff]
    %v582 = vld [vmem:[%s580 + $0x8] sm:$0xff]
    %v583 = vld [vmem:[%s580 + $0x10] sm:$0xff]
    %v584 = vadd.f32 %v581, %v538
    %v585 = vxor.u32 %v584, 2147483648
    %v586 = vmul.f32 %v585, 1.442695
    %v587 = vpow.pop %v586
    %v588 = vadd.f32 %v587, 1.0
    %v589 = vrcp.pop %v588
    %v590 = vmul.f32 %v588, %v589
    %v591 = vsub.f32 1.0, %v590
    %v592 = vmul.f32 %v589, %v591
    %v593 = vadd.f32 %v589, %v592
    %vm594 = vweird.f32 %v588
    %vm595 = vweird.f32 %v589
    %vm596 = vmor %vm594, %vm595
    %v597 = vsel %vm596, %v589, %v593
    %v598 = vand.u32 2147483647, %v588
    %vm599 = vcmp.eq.f32.partialorder %v598, 8.507059e+37
    %v600 = vand.u32 %v588, 2147483648
    %v601 = vor.u32 1.1754944e-38, %v600
    %v602 = vsel %vm599, %v601, %v597
    %v603 = vmul.f32 1.0, %v602
    %v604 = vadd.f32 %v582, %v558
    %v605 = vxor.u32 %v604, 2147483648
    %v606 = vmul.f32 %v605, 1.442695
    %v607 = vpow.pop %v606
    %v608 = vadd.f32 %v607, 1.0
    %v609 = vrcp.pop %v608
    %v610 = vmul.f32 %v608, %v609
    %v611 = vsub.f32 1.0, %v610
    %v612 = vmul.f32 %v609, %v611
    %v613 = vadd.f32 %v609, %v612
    %vm614 = vweird.f32 %v608
    %vm615 = vweird.f32 %v609
    %vm616 = vmor %vm614, %vm615
    %v617 = vsel %vm616, %v609, %v613
    %v618 = vand.u32 2147483647, %v608
    %vm619 = vcmp.eq.f32.partialorder %v618, 8.507059e+37
    %v620 = vand.u32 %v608, 2147483648
    %v621 = vor.u32 1.1754944e-38, %v620
    %v622 = vsel %vm619, %v621, %v617
    %v623 = vmul.f32 1.0, %v622
    %v624 = vmul.f32 %v603, %v578
    %v625 = vadd.f32 %v583, %v624
    %v626 = vtanh.pop %v625
    %v627 = vmul.f32 %v623, %v517
    %v628 = vsub.f32 1.0, %v623
    %v629 = vmul.f32 %v628, %v626
    %v630 = vadd.f32 %v627, %v629
    %s631 = scalar_lea.vmem %s6, 16
    %632 = vst [vmem:[%s631] sm:$0xff] %v630
    %633 = vmatpush.msra.mxu0 %v284
    %634 = vmatpush.msra.mxu0 %v281
    %635 = vmatpush.msra.mxu0 %v278
    %636 = vmatpush.msra.mxu0 %v275
    %637 = vmatpush.msra.mxu0 %v272
    %638 = vmatpush.msra.mxu0 %v269
    %639 = vmatpush.msra.mxu0 %v266
    %640 = vmatpush.msra.mxu0 %v263
    %641 = vmatpush.msra.mxu0 %v260
    %642 = vmatpush.msra.mxu0 %v257
    %643 = vmatpush.msra.mxu0 %v254
    %644 = vmatpush.msra.mxu0 %v251
    %645 = vmatpush.msra.mxu0 %v248
    %646 = vmatpush.msra.mxu0 %v245
    %647 = vmatpush.msra.mxu0 %v242
    %648 = vmatpush.msra.mxu0 %v239
    %649 = vmatmul.f32.gmra.mxu0 %v630
    %v650 = vpop.f32.mrf.mxu0
    %v651 = vadd.f32 %v290, %v650
    %652 = vdwg.mxu0
    %653 = vmatpush.msra.mxu0 %v285
    %654 = vmatpush.msra.mxu0 %v282
    %655 = vmatpush.msra.mxu0 %v279
    %656 = vmatpush.msra.mxu0 %v276
    %657 = vmatpush.msra.mxu0 %v273
    %658 = vmatpush.msra.mxu0 %v270
    %659 = vmatpush.msra.mxu0 %v267
    %660 = vmatpush.msra.mxu0 %v264
    %661 = vmatpush.msra.mxu0 %v261
    %662 = vmatpush.msra.mxu0 %v258
    %663 = vmatpush.msra.mxu0 %v255
    %664 = vmatpush.msra.mxu0 %v252
    %665 = vmatpush.msra.mxu0 %v249
    %666 = vmatpush.msra.mxu0 %v246
    %667 = vmatpush.msra.mxu0 %v243
    %668 = vmatpush.msra.mxu0 %v240
    %669 = vmatmul.f32.gmra.mxu0 %v630
    %v670 = vpop.f32.mrf.mxu0
    %v671 = vadd.f32 %v291, %v670
    %672 = vdwg.mxu0
    %673 = vmatpush.msra.mxu0 %v286
    %674 = vmatpush.msra.mxu0 %v283
    %675 = vmatpush.msra.mxu0 %v280
    %676 = vmatpush.msra.mxu0 %v277
    %677 = vmatpush.msra.mxu0 %v274
    %678 = vmatpush.msra.mxu0 %v271
    %679 = vmatpush.msra.mxu0 %v268
    %680 = vmatpush.msra.mxu0 %v265
    %681 = vmatpush.msra.mxu0 %v262
    %682 = vmatpush.msra.mxu0 %v259
    %683 = vmatpush.msra.mxu0 %v256
    %684 = vmatpush.msra.mxu0 %v253
    %685 = vmatpush.msra.mxu0 %v250
    %686 = vmatpush.msra.mxu0 %v247
    %687 = vmatpush.msra.mxu0 %v244
    %688 = vmatpush.msra.mxu0 %v241
    %689 = vmatmul.f32.gmra.mxu0 %v630
    %v690 = vpop.f32.mrf.mxu0
    %v691 = vadd.f32 %v292, %v690
    %692 = vdwg.mxu0
    %s693 = scalar_lea.vmem [#allocation3], 72
    %v694 = vld [vmem:[%s693] sm:$0xff]
    %v695 = vld [vmem:[%s693 + $0x8] sm:$0xff]
    %v696 = vld [vmem:[%s693 + $0x10] sm:$0xff]
    %v697 = vadd.f32 %v694, %v651
    %v698 = vxor.u32 %v697, 2147483648
    %v699 = vmul.f32 %v698, 1.442695
    %v700 = vpow.pop %v699
    %v701 = vadd.f32 %v700, 1.0
    %v702 = vrcp.pop %v701
    %v703 = vmul.f32 %v701, %v702
    %v704 = vsub.f32 1.0, %v703
    %v705 = vmul.f32 %v702, %v704
    %v706 = vadd.f32 %v702, %v705
    %vm707 = vweird.f32 %v701
    %vm708 = vweird.f32 %v702
    %vm709 = vmor %vm707, %vm708
    %v710 = vsel %vm709, %v702, %v706
    %v711 = vand.u32 2147483647, %v701
    %vm712 = vcmp.eq.f32.partialorder %v711, 8.507059e+37
    %v713 = vand.u32 %v701, 2147483648
    %v714 = vor.u32 1.1754944e-38, %v713
    %v715 = vsel %vm712, %v714, %v710
    %v716 = vmul.f32 1.0, %v715
    %v717 = vadd.f32 %v695, %v671
    %v718 = vxor.u32 %v717, 2147483648
    %v719 = vmul.f32 %v718, 1.442695
    %v720 = vpow.pop %v719
    %v721 = vadd.f32 %v720, 1.0
    %v722 = vrcp.pop %v721
    %v723 = vmul.f32 %v721, %v722
    %v724 = vsub.f32 1.0, %v723
    %v725 = vmul.f32 %v722, %v724
    %v726 = vadd.f32 %v722, %v725
    %vm727 = vweird.f32 %v721
    %vm728 = vweird.f32 %v722
    %vm729 = vmor %vm727, %vm728
    %v730 = vsel %vm729, %v722, %v726
    %v731 = vand.u32 2147483647, %v721
    %vm732 = vcmp.eq.f32.partialorder %v731, 8.507059e+37
    %v733 = vand.u32 %v721, 2147483648
    %v734 = vor.u32 1.1754944e-38, %v733
    %v735 = vsel %vm732, %v734, %v730
    %v736 = vmul.f32 1.0, %v735
    %v737 = vmul.f32 %v716, %v691
    %v738 = vadd.f32 %v696, %v737
    %v739 = vtanh.pop %v738
    %v740 = vmul.f32 %v736, %v630
    %v741 = vsub.f32 1.0, %v736
    %v742 = vmul.f32 %v741, %v739
    %v743 = vadd.f32 %v740, %v742
    %s744 = scalar_lea.vmem %s6, 24
    %745 = vst [vmem:[%s744] sm:$0xff] %v743
    %746 = vmatpush.msra.mxu0 %v284
    %747 = vmatpush.msra.mxu0 %v281
    %748 = vmatpush.msra.mxu0 %v278
    %749 = vmatpush.msra.mxu0 %v275
    %750 = vmatpush.msra.mxu0 %v272
    %751 = vmatpush.msra.mxu0 %v269
    %752 = vmatpush.msra.mxu0 %v266
    %753 = vmatpush.msra.mxu0 %v263
    %754 = vmatpush.msra.mxu0 %v260
    %755 = vmatpush.msra.mxu0 %v257
    %756 = vmatpush.msra.mxu0 %v254
    %757 = vmatpush.msra.mxu0 %v251
    %758 = vmatpush.msra.mxu0 %v248
    %759 = vmatpush.msra.mxu0 %v245
    %760 = vmatpush.msra.mxu0 %v242
    %761 = vmatpush.msra.mxu0 %v239
    %762 = vmatmul.f32.gmra.mxu0 %v743
    %v763 = vpop.f32.mrf.mxu0
    %v764 = vadd.f32 %v290, %v763
    %765 = vdwg.mxu0
    %766 = vmatpush.msra.mxu0 %v285
    %767 = vmatpush.msra.mxu0 %v282
    %768 = vmatpush.msra.mxu0 %v279
    %769 = vmatpush.msra.mxu0 %v276
    %770 = vmatpush.msra.mxu0 %v273
    %771 = vmatpush.msra.mxu0 %v270
    %772 = vmatpush.msra.mxu0 %v267
    %773 = vmatpush.msra.mxu0 %v264
    %774 = vmatpush.msra.mxu0 %v261
    %775 = vmatpush.msra.mxu0 %v258
    %776 = vmatpush.msra.mxu0 %v255
    %777 = vmatpush.msra.mxu0 %v252
    %778 = vmatpush.msra.mxu0 %v249
    %779 = vmatpush.msra.mxu0 %v246
    %780 = vmatpush.msra.mxu0 %v243
    %781 = vmatpush.msra.mxu0 %v240
    %782 = vmatmul.f32.gmra.mxu0 %v743
    %v783 = vpop.f32.mrf.mxu0
    %v784 = vadd.f32 %v291, %v783
    %785 = vdwg.mxu0
    %786 = vmatpush.msra.mxu0 %v286
    %787 = vmatpush.msra.mxu0 %v283
    %788 = vmatpush.msra.mxu0 %v280
    %789 = vmatpush.msra.mxu0 %v277
    %790 = vmatpush.msra.mxu0 %v274
    %791 = vmatpush.msra.mxu0 %v271
    %792 = vmatpush.msra.mxu0 %v268
    %793 = vmatpush.msra.mxu0 %v265
    %794 = vmatpush.msra.mxu0 %v262
    %795 = vmatpush.msra.mxu0 %v259
    %796 = vmatpush.msra.mxu0 %v256
    %797 = vmatpush.msra.mxu0 %v253
    %798 = vmatpush.msra.mxu0 %v250
    %799 = vmatpush.msra.mxu0 %v247
    %800 = vmatpush.msra.mxu0 %v244
    %801 = vmatpush.msra.mxu0 %v241
    %802 = vmatmul.f32.gmra.mxu0 %v743
    %v803 = vpop.f32.mrf.mxu0
    %v804 = vadd.f32 %v292, %v803
    %805 = vdwg.mxu0
    %s806 = scalar_lea.vmem [#allocation3], 96
    %v807 = vld [vmem:[%s806] sm:$0xff]
    %v808 = vld [vmem:[%s806 + $0x8] sm:$0xff]
    %v809 = vld [vmem:[%s806 + $0x10] sm:$0xff]
    %v810 = vadd.f32 %v807, %v764
    %v811 = vxor.u32 %v810, 2147483648
    %v812 = vmul.f32 %v811, 1.442695
    %v813 = vpow.pop %v812
    %v814 = vadd.f32 %v813, 1.0
    %v815 = vrcp.pop %v814
    %v816 = vmul.f32 %v814, %v815
    %v817 = vsub.f32 1.0, %v816
    %v818 = vmul.f32 %v815, %v817
    %v819 = vadd.f32 %v815, %v818
    %vm820 = vweird.f32 %v814
    %vm821 = vweird.f32 %v815
    %vm822 = vmor %vm820, %vm821
    %v823 = vsel %vm822, %v815, %v819
    %v824 = vand.u32 2147483647, %v814
    %vm825 = vcmp.eq.f32.partialorder %v824, 8.507059e+37
    %v826 = vand.u32 %v814, 2147483648
    %v827 = vor.u32 1.1754944e-38, %v826
    %v828 = vsel %vm825, %v827, %v823
    %v829 = vmul.f32 1.0, %v828
    %v830 = vadd.f32 %v808, %v784
    %v831 = vxor.u32 %v830, 2147483648
    %v832 = vmul.f32 %v831, 1.442695
    %v833 = vpow.pop %v832
    %v834 = vadd.f32 %v833, 1.0
    %v835 = vrcp.pop %v834
    %v836 = vmul.f32 %v834, %v835
    %v837 = vsub.f32 1.0, %v836
    %v838 = vmul.f32 %v835, %v837
    %v839 = vadd.f32 %v835, %v838
    %vm840 = vweird.f32 %v834
    %vm841 = vweird.f32 %v835
    %vm842 = vmor %vm840, %vm841
    %v843 = vsel %vm842, %v835, %v839
    %v844 = vand.u32 2147483647, %v834
    %vm845 = vcmp.eq.f32.partialorder %v844, 8.507059e+37
    %v846 = vand.u32 %v834, 2147483648
    %v847 = vor.u32 1.1754944e-38, %v846
    %v848 = vsel %vm845, %v847, %v843
    %v849 = vmul.f32 1.0, %v848
    %v850 = vmul.f32 %v829, %v804
    %v851 = vadd.f32 %v809, %v850
    %v852 = vtanh.pop %v851
    %v853 = vmul.f32 %v849, %v743
    %v854 = vsub.f32 1.0, %v849
    %v855 = vmul.f32 %v854, %v852
    %v856 = vadd.f32 %v853, %v855
    %s857 = scalar_lea.vmem %s6, 32
    %858 = vst [vmem:[%s857] sm:$0xff] %v856
    %859 = vmatpush.msra.mxu0 %v284
    %860 = vmatpush.msra.mxu0 %v281
    %861 = vmatpush.msra.mxu0 %v278
    %862 = vmatpush.msra.mxu0 %v275
    %863 = vmatpush.msra.mxu0 %v272
    %864 = vmatpush.msra.mxu0 %v269
    %865 = vmatpush.msra.mxu0 %v266
    %866 = vmatpush.msra.mxu0 %v263
    %867 = vmatpush.msra.mxu0 %v260
    %868 = vmatpush.msra.mxu0 %v257
    %869 = vmatpush.msra.mxu0 %v254
    %870 = vmatpush.msra.mxu0 %v251
    %871 = vmatpush.msra.mxu0 %v248
    %872 = vmatpush.msra.mxu0 %v245
    %873 = vmatpush.msra.mxu0 %v242
    %874 = vmatpush.msra.mxu0 %v239
    %875 = vmatmul.f32.gmra.mxu0 %v856
    %v876 = vpop.f32.mrf.mxu0
    %v877 = vadd.f32 %v290, %v876
    %878 = vdwg.mxu0
    %879 = vmatpush.msra.mxu0 %v285
    %880 = vmatpush.msra.mxu0 %v282
    %881 = vmatpush.msra.mxu0 %v279
    %882 = vmatpush.msra.mxu0 %v276
    %883 = vmatpush.msra.mxu0 %v273
    %884 = vmatpush.msra.mxu0 %v270
    %885 = vmatpush.msra.mxu0 %v267
    %886 = vmatpush.msra.mxu0 %v264
    %887 = vmatpush.msra.mxu0 %v261
    %888 = vmatpush.msra.mxu0 %v258
    %889 = vmatpush.msra.mxu0 %v255
    %890 = vmatpush.msra.mxu0 %v252
    %891 = vmatpush.msra.mxu0 %v249
    %892 = vmatpush.msra.mxu0 %v246
    %893 = vmatpush.msra.mxu0 %v243
    %894 = vmatpush.msra.mxu0 %v240
    %895 = vmatmul.f32.gmra.mxu0 %v856
    %v896 = vpop.f32.mrf.mxu0
    %v897 = vadd.f32 %v291, %v896
    %898 = vdwg.mxu0
    %899 = vmatpush.msra.mxu0 %v286
    %900 = vmatpush.msra.mxu0 %v283
    %901 = vmatpush.msra.mxu0 %v280
    %902 = vmatpush.msra.mxu0 %v277
    %903 = vmatpush.msra.mxu0 %v274
    %904 = vmatpush.msra.mxu0 %v271
    %905 = vmatpush.msra.mxu0 %v268
    %906 = vmatpush.msra.mxu0 %v265
    %907 = vmatpush.msra.mxu0 %v262
    %908 = vmatpush.msra.mxu0 %v259
    %909 = vmatpush.msra.mxu0 %v256
    %910 = vmatpush.msra.mxu0 %v253
    %911 = vmatpush.msra.mxu0 %v250
    %912 = vmatpush.msra.mxu0 %v247
    %913 = vmatpush.msra.mxu0 %v244
    %914 = vmatpush.msra.mxu0 %v241
    %915 = vmatmul.f32.gmra.mxu0 %v856
    %v916 = vpop.f32.mrf.mxu0
    %v917 = vadd.f32 %v292, %v916
    %918 = vdwg.mxu0
    %s919 = scalar_lea.vmem [#allocation3], 120
    %v920 = vld [vmem:[%s919] sm:$0xff]
    %v921 = vld [vmem:[%s919 + $0x8] sm:$0xff]
    %v922 = vld [vmem:[%s919 + $0x10] sm:$0xff]
    %v923 = vadd.f32 %v920, %v877
    %v924 = vxor.u32 %v923, 2147483648
    %v925 = vmul.f32 %v924, 1.442695
    %v926 = vpow.pop %v925
    %v927 = vadd.f32 %v926, 1.0
    %v928 = vrcp.pop %v927
    %v929 = vmul.f32 %v927, %v928
    %v930 = vsub.f32 1.0, %v929
    %v931 = vmul.f32 %v928, %v930
    %v932 = vadd.f32 %v928, %v931
    %vm933 = vweird.f32 %v927
    %vm934 = vweird.f32 %v928
    %vm935 = vmor %vm933, %vm934
    %v936 = vsel %vm935, %v928, %v932
    %v937 = vand.u32 2147483647, %v927
    %vm938 = vcmp.eq.f32.partialorder %v937, 8.507059e+37
    %v939 = vand.u32 %v927, 2147483648
    %v940 = vor.u32 1.1754944e-38, %v939
    %v941 = vsel %vm938, %v940, %v936
    %v942 = vmul.f32 1.0, %v941
    %v943 = vadd.f32 %v921, %v897
    %v944 = vxor.u32 %v943, 2147483648
    %v945 = vmul.f32 %v944, 1.442695
    %v946 = vpow.pop %v945
    %v947 = vadd.f32 %v946, 1.0
    %v948 = vrcp.pop %v947
    %v949 = vmul.f32 %v947, %v948
    %v950 = vsub.f32 1.0, %v949
    %v951 = vmul.f32 %v948, %v950
    %v952 = vadd.f32 %v948, %v951
    %vm953 = vweird.f32 %v947
    %vm954 = vweird.f32 %v948
    %vm955 = vmor %vm953, %vm954
    %v956 = vsel %vm955, %v948, %v952
    %v957 = vand.u32 2147483647, %v947
    %vm958 = vcmp.eq.f32.partialorder %v957, 8.507059e+37
    %v959 = vand.u32 %v947, 2147483648
    %v960 = vor.u32 1.1754944e-38, %v959
    %v961 = vsel %vm958, %v960, %v956
    %v962 = vmul.f32 1.0, %v961
    %v963 = vmul.f32 %v942, %v917
    %v964 = vadd.f32 %v922, %v963
    %v965 = vtanh.pop %v964
    %v966 = vmul.f32 %v962, %v856
    %v967 = vsub.f32 1.0, %v962
    %v968 = vmul.f32 %v967, %v965
    %v969 = vadd.f32 %v966, %v968
    %s970 = scalar_lea.vmem %s6, 40
    %971 = vst [vmem:[%s970] sm:$0xff] %v969
    %972 = vmatpush.msra.mxu0 %v284
    %973 = vmatpush.msra.mxu0 %v281
    %974 = vmatpush.msra.mxu0 %v278
    %975 = vmatpush.msra.mxu0 %v275
    %976 = vmatpush.msra.mxu0 %v272
    %977 = vmatpush.msra.mxu0 %v269
    %978 = vmatpush.msra.mxu0 %v266
    %979 = vmatpush.msra.mxu0 %v263
    %980 = vmatpush.msra.mxu0 %v260
    %981 = vmatpush.msra.mxu0 %v257
    %982 = vmatpush.msra.mxu0 %v254
    %983 = vmatpush.msra.mxu0 %v251
    %984 = vmatpush.msra.mxu0 %v248
    %985 = vmatpush.msra.mxu0 %v245
    %986 = vmatpush.msra.mxu0 %v242
    %987 = vmatpush.msra.mxu0 %v239
    %988 = vmatmul.f32.gmra.mxu0 %v969
    %v989 = vpop.f32.mrf.mxu0
    %v990 = vadd.f32 %v290, %v989
    %991 = vdwg.mxu0
    %992 = vmatpush.msra.mxu0 %v285
    %993 = vmatpush.msra.mxu0 %v282
    %994 = vmatpush.msra.mxu0 %v279
    %995 = vmatpush.msra.mxu0 %v276
    %996 = vmatpush.msra.mxu0 %v273
    %997 = vmatpush.msra.mxu0 %v270
    %998 = vmatpush.msra.mxu0 %v267
    %999 = vmatpush.msra.mxu0 %v264
    %1000 = vmatpush.msra.mxu0 %v261
    %1001 = vmatpush.msra.mxu0 %v258
    %1002 = vmatpush.msra.mxu0 %v255
    %1003 = vmatpush.msra.mxu0 %v252
    %1004 = vmatpush.msra.mxu0 %v249
    %1005 = vmatpush.msra.mxu0 %v246
    %1006 = vmatpush.msra.mxu0 %v243
    %1007 = vmatpush.msra.mxu0 %v240
    %1008 = vmatmul.f32.gmra.mxu0 %v969
    %v1009 = vpop.f32.mrf.mxu0
    %v1010 = vadd.f32 %v291, %v1009
    %1011 = vdwg.mxu0
    %1012 = vmatpush.msra.mxu0 %v286
    %1013 = vmatpush.msra.mxu0 %v283
    %1014 = vmatpush.msra.mxu0 %v280
    %1015 = vmatpush.msra.mxu0 %v277
    %1016 = vmatpush.msra.mxu0 %v274
    %1017 = vmatpush.msra.mxu0 %v271
    %1018 = vmatpush.msra.mxu0 %v268
    %1019 = vmatpush.msra.mxu0 %v265
    %1020 = vmatpush.msra.mxu0 %v262
    %1021 = vmatpush.msra.mxu0 %v259
    %1022 = vmatpush.msra.mxu0 %v256
    %1023 = vmatpush.msra.mxu0 %v253
    %1024 = vmatpush.msra.mxu0 %v250
    %1025 = vmatpush.msra.mxu0 %v247
    %1026 = vmatpush.msra.mxu0 %v244
    %1027 = vmatpush.msra.mxu0 %v241
    %1028 = vmatmul.f32.gmra.mxu0 %v969
    %v1029 = vpop.f32.mrf.mxu0
    %v1030 = vadd.f32 %v292, %v1029
    %1031 = vdwg.mxu0
    %s1032 = scalar_lea.vmem [#allocation3], 144
    %v1033 = vld [vmem:[%s1032] sm:$0xff]
    %v1034 = vld [vmem:[%s1032 + $0x8] sm:$0xff]
    %v1035 = vld [vmem:[%s1032 + $0x10] sm:$0xff]
    %v1036 = vadd.f32 %v1033, %v990
    %v1037 = vxor.u32 %v1036, 2147483648
    %v1038 = vmul.f32 %v1037, 1.442695
    %v1039 = vpow.pop %v1038
    %v1040 = vadd.f32 %v1039, 1.0
    %v1041 = vrcp.pop %v1040
    %v1042 = vmul.f32 %v1040, %v1041
    %v1043 = vsub.f32 1.0, %v1042
    %v1044 = vmul.f32 %v1041, %v1043
    %v1045 = vadd.f32 %v1041, %v1044
    %vm1046 = vweird.f32 %v1040
    %vm1047 = vweird.f32 %v1041
    %vm1048 = vmor %vm1046, %vm1047
    %v1049 = vsel %vm1048, %v1041, %v1045
    %v1050 = vand.u32 2147483647, %v1040
    %vm1051 = vcmp.eq.f32.partialorder %v1050, 8.507059e+37
    %v1052 = vand.u32 %v1040, 2147483648
    %v1053 = vor.u32 1.1754944e-38, %v1052
    %v1054 = vsel %vm1051, %v1053, %v1049
    %v1055 = vmul.f32 1.0, %v1054
    %v1056 = vadd.f32 %v1034, %v1010
    %v1057 = vxor.u32 %v1056, 2147483648
    %v1058 = vmul.f32 %v1057, 1.442695
    %v1059 = vpow.pop %v1058
    %v1060 = vadd.f32 %v1059, 1.0
    %v1061 = vrcp.pop %v1060
    %v1062 = vmul.f32 %v1060, %v1061
    %v1063 = vsub.f32 1.0, %v1062
    %v1064 = vmul.f32 %v1061, %v1063
    %v1065 = vadd.f32 %v1061, %v1064
    %vm1066 = vweird.f32 %v1060
    %vm1067 = vweird.f32 %v1061
    %vm1068 = vmor %vm1066, %vm1067
    %v1069 = vsel %vm1068, %v1061, %v1065
    %v1070 = vand.u32 2147483647, %v1060
    %vm1071 = vcmp.eq.f32.partialorder %v1070, 8.507059e+37
    %v1072 = vand.u32 %v1060, 2147483648
    %v1073 = vor.u32 1.1754944e-38, %v1072
    %v1074 = vsel %vm1071, %v1073, %v1069
    %v1075 = vmul.f32 1.0, %v1074
    %v1076 = vmul.f32 %v1055, %v1030
    %v1077 = vadd.f32 %v1035, %v1076
    %v1078 = vtanh.pop %v1077
    %v1079 = vmul.f32 %v1075, %v969
    %v1080 = vsub.f32 1.0, %v1075
    %v1081 = vmul.f32 %v1080, %v1078
    %v1082 = vadd.f32 %v1079, %v1081
    %s1083 = scalar_lea.vmem %s6, 48
    %1084 = vst [vmem:[%s1083] sm:$0xff] %v1082
    %1085 = vmatpush.msra.mxu0 %v284
    %1086 = vmatpush.msra.mxu0 %v281
    %1087 = vmatpush.msra.mxu0 %v278
    %1088 = vmatpush.msra.mxu0 %v275
    %1089 = vmatpush.msra.mxu0 %v272
    %1090 = vmatpush.msra.mxu0 %v269
    %1091 = vmatpush.msra.mxu0 %v266
    %1092 = vmatpush.msra.mxu0 %v263
    %1093 = vmatpush.msra.mxu0 %v260
    %1094 = vmatpush.msra.mxu0 %v257
    %1095 = vmatpush.msra.mxu0 %v254
    %1096 = vmatpush.msra.mxu0 %v251
    %1097 = vmatpush.msra.mxu0 %v248
    %1098 = vmatpush.msra.mxu0 %v245
    %1099 = vmatpush.msra.mxu0 %v242
    %1100 = vmatpush.msra.mxu0 %v239
    %1101 = vmatmul.f32.gmra.mxu0 %v1082
    %v1102 = vpop.f32.mrf.mxu0
    %v1103 = vadd.f32 %v290, %v1102
    %1104 = vdwg.mxu0
    %1105 = vmatpush.msra.mxu0 %v285
    %1106 = vmatpush.msra.mxu0 %v282
    %1107 = vmatpush.msra.mxu0 %v279
    %1108 = vmatpush.msra.mxu0 %v276
    %1109 = vmatpush.msra.mxu0 %v273
    %1110 = vmatpush.msra.mxu0 %v270
    %1111 = vmatpush.msra.mxu0 %v267
    %1112 = vmatpush.msra.mxu0 %v264
    %1113 = vmatpush.msra.mxu0 %v261
    %1114 = vmatpush.msra.mxu0 %v258
    %1115 = vmatpush.msra.mxu0 %v255
    %1116 = vmatpush.msra.mxu0 %v252
    %1117 = vmatpush.msra.mxu0 %v249
    %1118 = vmatpush.msra.mxu0 %v246
    %1119 = vmatpush.msra.mxu0 %v243
    %1120 = vmatpush.msra.mxu0 %v240
    %1121 = vmatmul.f32.gmra.mxu0 %v1082
    %v1122 = vpop.f32.mrf.mxu0
    %v1123 = vadd.f32 %v291, %v1122
    %1124 = vdwg.mxu0
    %1125 = vmatpush.msra.mxu0 %v286
    %1126 = vmatpush.msra.mxu0 %v283
    %1127 = vmatpush.msra.mxu0 %v280
    %1128 = vmatpush.msra.mxu0 %v277
    %1129 = vmatpush.msra.mxu0 %v274
    %1130 = vmatpush.msra.mxu0 %v271
    %1131 = vmatpush.msra.mxu0 %v268
    %1132 = vmatpush.msra.mxu0 %v265
    %1133 = vmatpush.msra.mxu0 %v262
    %1134 = vmatpush.msra.mxu0 %v259
    %1135 = vmatpush.msra.mxu0 %v256
    %1136 = vmatpush.msra.mxu0 %v253
    %1137 = vmatpush.msra.mxu0 %v250
    %1138 = vmatpush.msra.mxu0 %v247
    %1139 = vmatpush.msra.mxu0 %v244
    %1140 = vmatpush.msra.mxu0 %v241
    %1141 = vmatmul.f32.gmra.mxu0 %v1082
    %v1142 = vpop.f32.mrf.mxu0
    %v1143 = vadd.f32 %v292, %v1142
    %1144 = vdwg.mxu0
    %s1145 = scalar_lea.vmem [#allocation3], 168
    %v1146 = vld [vmem:[%s1145] sm:$0xff]
    %v1147 = vld [vmem:[%s1145 + $0x8] sm:$0xff]
    %v1148 = vld [vmem:[%s1145 + $0x10] sm:$0xff]
    %v1149 = vadd.f32 %v1146, %v1103
    %v1150 = vxor.u32 %v1149, 2147483648
    %v1151 = vmul.f32 %v1150, 1.442695
    %v1152 = vpow.pop %v1151
    %v1153 = vadd.f32 %v1152, 1.0
    %v1154 = vrcp.pop %v1153
    %v1155 = vmul.f32 %v1153, %v1154
    %v1156 = vsub.f32 1.0, %v1155
    %v1157 = vmul.f32 %v1154, %v1156
    %v1158 = vadd.f32 %v1154, %v1157
    %vm1159 = vweird.f32 %v1153
    %vm1160 = vweird.f32 %v1154
    %vm1161 = vmor %vm1159, %vm1160
    %v1162 = vsel %vm1161, %v1154, %v1158
    %v1163 = vand.u32 2147483647, %v1153
    %vm1164 = vcmp.eq.f32.partialorder %v1163, 8.507059e+37
    %v1165 = vand.u32 %v1153, 2147483648
    %v1166 = vor.u32 1.1754944e-38, %v1165
    %v1167 = vsel %vm1164, %v1166, %v1162
    %v1168 = vmul.f32 1.0, %v1167
    %v1169 = vadd.f32 %v1147, %v1123
    %v1170 = vxor.u32 %v1169, 2147483648
    %v1171 = vmul.f32 %v1170, 1.442695
    %v1172 = vpow.pop %v1171
    %v1173 = vadd.f32 %v1172, 1.0
    %v1174 = vrcp.pop %v1173
    %v1175 = vmul.f32 %v1173, %v1174
    %v1176 = vsub.f32 1.0, %v1175
    %v1177 = vmul.f32 %v1174, %v1176
    %v1178 = vadd.f32 %v1174, %v1177
    %vm1179 = vweird.f32 %v1173
    %vm1180 = vweird.f32 %v1174
    %vm1181 = vmor %vm1179, %vm1180
    %v1182 = vsel %vm1181, %v1174, %v1178
    %v1183 = vand.u32 2147483647, %v1173
    %vm1184 = vcmp.eq.f32.partialorder %v1183, 8.507059e+37
    %v1185 = vand.u32 %v1173, 2147483648
    %v1186 = vor.u32 1.1754944e-38, %v1185
    %v1187 = vsel %vm1184, %v1186, %v1182
    %v1188 = vmul.f32 1.0, %v1187
    %v1189 = vmul.f32 %v1168, %v1143
    %v1190 = vadd.f32 %v1148, %v1189
    %v1191 = vtanh.pop %v1190
    %v1192 = vmul.f32 %v1188, %v1082
    %v1193 = vsub.f32 1.0, %v1188
    %v1194 = vmul.f32 %v1193, %v1191
    %v1195 = vadd.f32 %v1192, %v1194
    %s1196 = scalar_lea.vmem %s6, 56
    %1197 = vst [vmem:[%s1196] sm:$0xff] %v1195
    %1198 = vst [vmem:[#allocation2] sm:$0xff] %v1195
    // Predicated region
    $region34: #{gru_forward.2} parent=1 // pred_check
      _
    $region35: #{gru_forward.2} parent=1 // pred_check_branch
      %1200 = sbr.rel (0) target = $region37
    $region36: #{gru_forward.2} parent=1 // pred_region
      _
    $region37: #{gru_forward.2} parent=1 // pred_fallthru
      _
    // Predicated region
    $region38: #{gru_forward.2} parent=1 // pred_check
      _
    $region39: #{gru_forward.2} parent=1 // pred_check_branch
      %1202 = sbr.rel (0) target = $region41
    $region40: #{gru_forward.2} parent=1 // pred_region
      _
    $region41: #{gru_forward.2} parent=1 // pred_fallthru
      _
    %1203 = vsyncpa [#allocation5], 1

</llo_original>
